<compile_context>
chip_gen: v7x
topology: tpu7x:2x2x1
jax: 0.10.0
libtpu: 0.0.40
codegen_flags: <defaults>
</compile_context>

<pallas_src>
import functools

import jax
import jax.numpy as jnp
from jax.experimental import pallas as pl
from jax.experimental.pallas import tpu as pltpu

# ----- module hyper-parameters (mirrors ResidualCouplingLayer.__init__) -----
IN_CHANNELS = 4
HIDDEN = 32
KERNEL_SIZE = 3
N_LAYERS = 2
DILATION_RATE = 1
MEAN_ONLY = False
HALF = IN_CHANNELS // 2
STATS_CH = HALF * (2 - int(MEAN_ONLY))
HALO = 128          # lane-aligned halo, >= receptive radius of the WN stack


def _round_up(n, m):
    return ((n + m - 1) // m) * m


def _receptive_radius():
    return sum(((KERNEL_SIZE - 1) * DILATION_RATE ** i) // 2
               for i in range(N_LAYERS))


def _coupling_kernel(reverse, has_mask, t_len, t_tile, halo, cdt, *refs):
    H = HIDDEN
    tw = t_tile + 2 * halo
    n_in = 13 if has_mask else 12
    if has_mask:
        (x0_ref, mask_ref, x1_ref, w_pre_ref, b_pre_ref, in_w_ref, in_b_ref,
         res_w_ref, res_b_ref, wm_ref, ws_ref, bm_ref, bs_ref) = refs[:n_in]
    else:
        (x0_ref, x1_ref, w_pre_ref, b_pre_ref, in_w_ref, in_b_ref,
         res_w_ref, res_b_ref, wm_ref, ws_ref, bm_ref, bs_ref) = refs[:n_in]
    x_out_ref = refs[n_in]
    logdet_ref = None if reverse else refs[n_in + 1]

    x0 = x0_ref[0, 0]                       # (HALF, tw) f32, halo'd window
    x1 = x1_ref[0]                          # (HALF, t_tile) f32

    if has_mask:
        mask = mask_ref[0, 0]               # (1, tw) f32 (0/1), halo'd window
    else:
        # no-mask fast path: rebuild zero-padding semantics of the dilated
        # convs at the sequence ends with an iota validity mask (no mask DMA).
        lane = jax.lax.broadcasted_iota(jnp.int32, (1, tw), 1)
        gpos = pl.program_id(1) * t_tile - halo + lane
        mask = ((gpos >= 0) & (gpos < t_len)).astype(jnp.float32)

    mask_h = jnp.broadcast_to(mask, (H, tw)).astype(cdt)   # materialized once

    # pre_conv: 1x1 conv == (H, HALF) @ (HALF, tw)
    xc = (jnp.dot(w_pre_ref[...], x0.astype(cdt),
                  preferred_element_type=jnp.float32).astype(cdt)
          + b_pre_ref[...]) * mask_h                        # (H, tw) cdt

    # WN gated dilated-conv stack; post_conv folded into the skip weights, so
    # the mean / log-scale stats are accumulated directly (in f32).
    m_acc = jnp.zeros((HALF, tw), jnp.float32)
    s_acc = jnp.zeros((HALF, tw), jnp.float32)
    for i in range(N_LAYERS):
        d = DILATION_RATE ** i
        pad = (KERNEL_SIZE * d - d) // 2
        x_in = None
        for k in range(KERNEL_SIZE):
            s = k * d - pad                 # want tap[t] = xc[t + s]
            tap = xc if s == 0 else pltpu.roll(xc, (-s) % tw, 1)
            c = jnp.dot(in_w_ref[i, k], tap, preferred_element_type=jnp.float32)
            x_in = c if x_in is None else x_in + c
        x_in = x_in.astype(cdt) + in_b_ref[i]                  # (2H, tw) cdt
        acts = jnp.tanh(x_in[:H]) * jax.nn.sigmoid(x_in[H:])   # (H, tw) cdt
        m_acc = m_acc + jnp.dot(wm_ref[i], acts,
                                preferred_element_type=jnp.float32)
        if not MEAN_ONLY:
            s_acc = s_acc + jnp.dot(ws_ref[i], acts,
                                    preferred_element_type=jnp.float32)
        if i < N_LAYERS - 1:
            res = (jnp.dot(res_w_ref[i], acts,
                           preferred_element_type=jnp.float32).astype(cdt)
                   + res_b_ref[i])
            xc = (xc + res) * mask_h

    # 128-lane-aligned center slice (discard the halo).
    ctr = slice(halo, halo + t_tile)
    x0_c = x0[:, ctr]                                          # (HALF, tt) f32
    mask_c = mask[:, ctr]                                      # (1, tt) f32
    m_c = (m_acc[:, ctr] + bm_ref[...]) * mask_c
    if MEAN_ONLY:
        logs_c = jnp.zeros_like(m_c)
    else:
        logs_c = (s_acc[:, ctr] + bs_ref[...]) * mask_c

    if not reverse:
        x1n = x1 * jnp.exp(logs_c) + m_c
        if has_mask:
            x1n = x1n * mask_c
        # per-tile logdet partial, splatted over one vreg; wrapper reads [0,0]
        logdet_ref[...] = jnp.full(logdet_ref.shape, jnp.sum(logs_c),
                                   dtype=jnp.float32)
    else:
        x1n = (x1 - m_c) * jnp.exp(-logs_c)
        if has_mask:
            x1n = x1n * mask_c

    # x0 passthrough is written in-kernel (no wrapper-side concat).
    x_out_ref[0] = jnp.concatenate([x0_c, x1n], axis=0)


def residual_coupling_layer(x, params, mask=None, reverse=False,
                            t_tile=2048, compute_dtype=jnp.float32):
    """x: (B, C, T) float32 (PyTorch NCT). Returns (x_out, logdet) or x_out.

    compute_dtype=jnp.bfloat16 runs the WN body in bf16 (recommended on
    v6e/v7x); exp / affine update / logdet stay in float32.
    """
    B, C, T = x.shape
    assert C == IN_CHANNELS
    x = x.astype(jnp.float32)
    cdt = jnp.dtype(compute_dtype)
    has_mask = mask is not None

    halo = HALO
    assert halo % 128 == 0 and halo >= _receptive_radius()
    tt = _round_up(T, 128) if T <= t_tile else _round_up(t_tile, 128)
    num_t = (T + tt - 1) // tt
    t_pad = num_t * tt
    tw = tt + 2 * halo

    x0 = x[:, :HALF]
    x1 = x[:, HALF:]
    x0p = jnp.pad(x0, ((0, 0), (0, 0), (halo, t_pad - T + halo)))
    x1p = jnp.pad(x1, ((0, 0), (0, 0), (0, t_pad - T)))
    # overlapping halo'd windows (only HALF rows each -> negligible duplication)
    x0w = jnp.stack([x0p[:, :, t * tt:t * tt + tw] for t in range(num_t)],
                    axis=1)                                   # (B,nt,HALF,tw)

    inputs = [x0w]
    in_specs = [pl.BlockSpec((1, 1, HALF, tw), lambda b, t: (b, t, 0, 0))]
    if has_mask:
        mkp = jnp.pad(mask.astype(jnp.float32),
                      ((0, 0), (0, 0), (halo, t_pad - T + halo)))
        mkw = jnp.stack([mkp[:, :, t * tt:t * tt + tw] for t in range(num_t)],
                        axis=1)                               # (B,nt,1,tw)
        inputs.append(mkw)
        in_specs.append(pl.BlockSpec((1, 1, 1, tw), lambda b, t: (b, t, 0, 0)))
    inputs.append(x1p)
    in_specs.append(pl.BlockSpec((1, HALF, tt), lambda b, t: (b, 0, t)))

    # ---- weight re-layout + post_conv folding (tiny, wrapper-side) ----
    H, L = HIDDEN, N_LAYERS
    w_pre = params['w_pre'].astype(cdt)                               # (H,HALF)
    b_pre = params['b_pre'].reshape(H, 1).astype(cdt)
    in_w = jnp.transpose(params['in_w'], (0, 3, 1, 2)).astype(cdt)    # (L,K,2H,H)
    in_b = params['in_b'].reshape(L, 2 * H, 1).astype(cdt)
    rs_w = params['rs_w'].astype(jnp.float32)                         # (L,2H,H)
    rs_b = params['rs_b'].astype(jnp.float32)                         # (L,2H)
    res_w = rs_w[:L - 1, :H].astype(cdt)                              # (L-1,H,H)
    res_b = rs_b[:L - 1, :H].reshape(L - 1, H, 1).astype(cdt)
    skip_w = jnp.concatenate([rs_w[:L - 1, H:], rs_w[L - 1:, :H]], axis=0)
    skip_b = jnp.concatenate([rs_b[:L - 1, H:], rs_b[L - 1:, :H]], axis=0)
    w_post = params['w_post'].astype(jnp.float32)
    b_post = params['b_post'].astype(jnp.float32)
    w_post_m, b_post_m = w_post[:HALF], b_post[:HALF]
    if MEAN_ONLY:
        w_post_s = jnp.zeros((HALF, H), jnp.float32)
        b_post_s = jnp.zeros((HALF,), jnp.float32)
    else:
        w_post_s, b_post_s = w_post[HALF:], b_post[HALF:]
    # stats = sum_i (w_post @ skip_w[i]) @ acts_i + (w_post @ sum_i skip_b[i] + b_post)
    wm = jnp.einsum('oh,lhk->lok', w_post_m, skip_w).astype(cdt)      # (L,HALF,H)
    ws = jnp.einsum('oh,lhk->lok', w_post_s, skip_w).astype(cdt)
    sb = jnp.sum(skip_b, axis=0)                                      # (H,)
    bm = (w_post_m @ sb + b_post_m).reshape(HALF, 1)                  # f32
    bs = (w_post_s @ sb + b_post_s).reshape(HALF, 1)

    weights = [w_pre, b_pre, in_w, in_b, res_w, res_b, wm, ws, bm, bs]

    def full_spec(a):
        nd = a.ndim
        return pl.BlockSpec(a.shape, lambda b, t, _nd=nd: (0,) * _nd)

    inputs += weights
    in_specs += [full_spec(a) for a in weights]

    out_specs = [pl.BlockSpec((1, IN_CHANNELS, tt), lambda b, t: (b, 0, t))]
    out_shape = [jax.ShapeDtypeStruct((B, IN_CHANNELS, t_pad), jnp.float32)]
    if not reverse:
        # per-tile logdet partials -> both grid axes stay "parallel"
        out_specs.append(pl.BlockSpec((1, 1, 8, 128), lambda b, t: (b, t, 0, 0)))
        out_shape.append(jax.ShapeDtypeStruct((B, num_t, 8, 128), jnp.float32))

    res = pl.pallas_call(
        functools.partial(_coupling_kernel, reverse, has_mask, T, tt, halo, cdt),
        out_shape=out_shape,
        grid_spec=pltpu.PrefetchScalarGridSpec(
            num_scalar_prefetch=0,
            grid=(B, num_t),
            in_specs=in_specs,
            out_specs=out_specs),
        compiler_params=pltpu.CompilerParams(
            dimension_semantics=("parallel", "parallel")),
    )(*inputs)

    x_out = res[0][:, :, :T]
    if reverse:
        return x_out
    logdet = jnp.sum(res[1][:, :, 0, 0], axis=1)
    return x_out, logdet


# --------------------- deterministic parameter init ---------------------
def init_params(key):
    ks = jax.random.split(key, 6)
    s = 0.1
    p = {}
    p['w_pre'] = s * jax.random.normal(ks[0], (HIDDEN, HALF), jnp.float32)
    p['b_pre'] = s * jax.random.normal(ks[1], (HIDDEN,), jnp.float32)
    p['in_w'] = s * jax.random.normal(
        ks[2], (N_LAYERS, 2 * HIDDEN, HIDDEN, KERNEL_SIZE), jnp.float32)
    p['in_b'] = s * jax.random.normal(ks[3], (N_LAYERS, 2 * HIDDEN), jnp.float32)
    rs_w = s * jax.random.normal(ks[4], (N_LAYERS, 2 * HIDDEN, HIDDEN), jnp.float32)
    rs_b = s * jax.random.normal(ks[5], (N_LAYERS, 2 * HIDDEN), jnp.float32)
    # Last res/skip layer only has HIDDEN (skip) outputs; pad unused half with 0.
    rs_w = rs_w.at[N_LAYERS - 1, HIDDEN:].set(0.0)
    rs_b = rs_b.at[N_LAYERS - 1, HIDDEN:].set(0.0)
    p['rs_w'], p['rs_b'] = rs_w, rs_b
    # post_conv is zero-initialized, exactly as in the PyTorch __init__.
    p['w_post'] = jnp.zeros((STATS_CH, HIDDEN), jnp.float32)
    p['b_post'] = jnp.zeros((STATS_CH,), jnp.float32)
    return p


# ------------------ pure-JAX reference (NCT, torch-style) ------------------
def reference_forward(params, x, mask=None, reverse=False):
    B, C, T = x.shape
    if mask is None:
        mask = jnp.ones((B, 1, T), jnp.float32)
    x0, x1 = x[:, :HALF], x[:, HALF:]
    conv1x1 = lambda z, w, b: jnp.einsum('oi,bit->bot', w, z) + b[None, :, None]
    h = conv1x1(x0, params['w_pre'], params['b_pre']) * mask
    out = jnp.zeros_like(h)
    xc = h
    H = HIDDEN
    for i in range(N_LAYERS):
        d = DILATION_RATE ** i
        pad = (KERNEL_SIZE * d - d) // 2
        xp = jnp.pad(xc, ((0, 0), (0, 0), (pad, pad)))
        x_in = params['in_b'][i][None, :, None]
        for k in range(KERNEL_SIZE):
            x_in = x_in + jnp.einsum('oi,bit->bot', params['in_w'][i, :, :, k],
                                     xp[:, :, k * d:k * d + T])
        acts = jnp.tanh(x_in[:, :H]) * jax.nn.sigmoid(x_in[:, H:])
        rs = jnp.einsum('oi,bit->bot', params['rs_w'][i], acts) \
            + params['rs_b'][i][None, :, None]
        if i < N_LAYERS - 1:
            xc = (xc + rs[:, :H]) * mask
            out = out + rs[:, H:]
        else:
            out = out + rs[:, :H]
    h_wn = out * mask
    stats = conv1x1(h_wn, params['w_post'], params['b_post']) * mask
    if MEAN_ONLY:
        m, logs = stats, jnp.zeros_like(stats)
    else:
        m, logs = stats[:, :HALF], stats[:, HALF:]
    if not reverse:
        x1n = (x1 * jnp.exp(logs) + m) * mask
        return jnp.concatenate([x0, x1n], axis=1), jnp.sum(logs, axis=(1, 2))
    x1n = ((x1 - m) * jnp.exp(-logs)) * mask
    return jnp.concatenate([x0, x1n], axis=1)


if __name__ == "__main__":
    key = jax.random.PRNGKey(0)
    kx, kp, kpost, kx2 = jax.random.split(key, 4)
    B, T = 2, 16
    x = jax.random.normal(kx, (B, IN_CHANNELS, T), jnp.float32)
    params = init_params(kp)

    # 1) Faithful module semantics (post_conv zero-init), no mask (fast path).
    y0, ld0 = residual_coupling_layer(x, params)
    jax.block_until_ready((y0, ld0))
    r0, rld0 = reference_forward(params, x)
    assert jnp.allclose(y0, r0, atol=5e-5), float(jnp.max(jnp.abs(y0 - r0)))
    assert jnp.allclose(ld0, rld0, atol=1e-4)

    # 2) Non-trivial post_conv weights + padding mask, forward + reverse.
    k1, k2 = jax.random.split(kpost)
    params_nz = dict(params)
    params_nz['w_post'] = 0.1 * jax.random.normal(k1, (STATS_CH, HIDDEN), jnp.float32)
    params_nz['b_post'] = 0.1 * jax.random.normal(k2, (STATS_CH,), jnp.float32)
    lengths = jnp.array([T, T - 5])
    mask = (jnp.arange(T)[None, None, :] < lengths[:, None, None]).astype(jnp.float32)

    y, ld = residual_coupling_layer(x, params_nz, mask=mask)
    yr, ldr = reference_forward(params_nz, x, mask=mask)
    assert jnp.allclose(y, yr, atol=5e-5), float(jnp.max(jnp.abs(y - yr)))
    assert jnp.allclose(ld, ldr, atol=1e-4)

    x_rec = residual_coupling_layer(y, params_nz, mask=mask, reverse=True)
    jax.block_until_ready(x_rec)
    assert jnp.allclose(x_rec * mask, x * mask, atol=1e-4)

    # 3) Multi-tile time axis (halo + per-tile logdet partials), mask & no-mask.
    T2 = 300
    x2 = jax.random.normal(kx2, (B, IN_CHANNELS, T2), jnp.float32)
    lengths2 = jnp.array([T2, T2 - 37])
    mask2 = (jnp.arange(T2)[None, None, :] < lengths2[:, None, None]).astype(jnp.float32)

    y2, ld2 = residual_coupling_layer(x2, params_nz, mask=mask2, t_tile=128)
    y2r, ld2r = reference_forward(params_nz, x2, mask=mask2)
    assert jnp.allclose(y2, y2r, atol=5e-5), float(jnp.max(jnp.abs(y2 - y2r)))
    assert jnp.allclose(ld2, ld2r, atol=1e-4)

    y3, ld3 = residual_coupling_layer(x2, params_nz, t_tile=128)
    y3r, ld3r = reference_forward(params_nz, x2)
    assert jnp.allclose(y3, y3r, atol=5e-5), float(jnp.max(jnp.abs(y3 - y3r)))
    assert jnp.allclose(ld3, ld3r, atol=1e-4)

    # 4) bf16 WN body (v6e/v7x perf path), loose tolerance smoke check.
    yb, ldb = residual_coupling_layer(x2, params_nz, compute_dtype=jnp.bfloat16)
    jax.block_until_ready((yb, ldb))
    assert jnp.allclose(yb, y3r, atol=1e-1), float(jnp.max(jnp.abs(yb - y3r)))
    assert jnp.allclose(ldb, ld3r, atol=1.0)

    print("KERNEL_OK")
</pallas_src>

<mosaic_0001>
module attributes {stable_mosaic.version = 11 : i64} {
  func.func @_coupling_kernel(%arg0: i32, %arg1: i32, %arg2: memref<1x1x2x384xf32, #tpu.memory_space<vmem>>, %arg3: memref<1x2x128xf32, #tpu.memory_space<vmem>>, %arg4: memref<32x2xf32, #tpu.memory_space<vmem>>, %arg5: memref<32x1xf32, #tpu.memory_space<vmem>>, %arg6: memref<2x3x64x32xf32, #tpu.memory_space<vmem>>, %arg7: memref<2x64x1xf32, #tpu.memory_space<vmem>>, %arg8: memref<1x32x32xf32, #tpu.memory_space<vmem>>, %arg9: memref<1x32x1xf32, #tpu.memory_space<vmem>>, %arg10: memref<2x2x32xf32, #tpu.memory_space<vmem>>, %arg11: memref<2x2x32xf32, #tpu.memory_space<vmem>>, %arg12: memref<2x1xf32, #tpu.memory_space<vmem>>, %arg13: memref<2x1xf32, #tpu.memory_space<vmem>>, %arg14: memref<1x4x128xf32, #tpu.memory_space<vmem>>, %arg15: memref<1x1x8x128xf32, #tpu.memory_space<vmem>>) attributes {dimension_semantics = [#tpu.dimension_semantics<parallel>, #tpu.dimension_semantics<parallel>], iteration_bounds = array<i64: 2, 1>, scalar_prefetch = 0 : i64, scratch_operands = 0 : i64, tpu.core_type = #tpu.core_type<tc>, window_params = [{transform_indices = @transform_0, window_bounds = array<i64: 1, 1, 2, 384>}, {transform_indices = @transform_1, window_bounds = array<i64: 1, 2, 128>}, {pipeline_mode = #tpu.pipeline_mode<synchronous>, transform_indices = @transform_2, window_bounds = array<i64: 32, 2>}, {pipeline_mode = #tpu.pipeline_mode<synchronous>, transform_indices = @transform_3, window_bounds = array<i64: 32, 1>}, {pipeline_mode = #tpu.pipeline_mode<synchronous>, transform_indices = @transform_4, window_bounds = array<i64: 2, 3, 64, 32>}, {pipeline_mode = #tpu.pipeline_mode<synchronous>, transform_indices = @transform_5, window_bounds = array<i64: 2, 64, 1>}, {pipeline_mode = #tpu.pipeline_mode<synchronous>, transform_indices = @transform_6, window_bounds = array<i64: 1, 32, 32>}, {pipeline_mode = #tpu.pipeline_mode<synchronous>, transform_indices = @transform_7, window_bounds = array<i64: 1, 32, 1>}, {pipeline_mode = #tpu.pipeline_mode<synchronous>, transform_indices = @transform_8, window_bounds = array<i64: 2, 2, 32>}, {pipeline_mode = #tpu.pipeline_mode<synchronous>, transform_indices = @transform_9, window_bounds = array<i64: 2, 2, 32>}, {pipeline_mode = #tpu.pipeline_mode<synchronous>, transform_indices = @transform_10, window_bounds = array<i64: 2, 1>}, {pipeline_mode = #tpu.pipeline_mode<synchronous>, transform_indices = @transform_11, window_bounds = array<i64: 2, 1>}, {transform_indices = @transform_12, window_bounds = array<i64: 1, 4, 128>}, {transform_indices = @transform_13, window_bounds = array<i64: 1, 1, 8, 128>}]} {
    %c0 = arith.constant 0 : index
    %c0_0 = arith.constant 0 : index
    %c0_1 = arith.constant 0 : index
    %c0_2 = arith.constant 0 : index
    %0 = vector.load %arg2[%c0, %c0_0, %c0_1, %c0_2] : memref<1x1x2x384xf32, #tpu.memory_space<vmem>>, vector<1x1x2x384xf32>
    %1 = vector.shape_cast %0 : vector<1x1x2x384xf32> to vector<2x384xf32>
    %c0_3 = arith.constant 0 : index
    %c0_4 = arith.constant 0 : index
    %c0_5 = arith.constant 0 : index
    %2 = vector.load %arg3[%c0_3, %c0_4, %c0_5] : memref<1x2x128xf32, #tpu.memory_space<vmem>>, vector<1x2x128xf32>
    %3 = vector.shape_cast %2 : vector<1x2x128xf32> to vector<2x128xf32>
    %4 = tpu.iota {dimensions = array<i32: 1>} : vector<1x384xi32>
    %c128_i32 = arith.constant 128 : i32
    %5 = arith.muli %arg1, %c128_i32 : i32
    %c128_i32_6 = arith.constant 128 : i32
    %6 = arith.subi %5, %c128_i32_6 : i32
    %7 = vector.broadcast %6 : i32 to vector<1x384xi32>
    %8 = arith.addi %7, %4 : vector<1x384xi32>
    %c0_i32 = arith.constant 0 : i32
    %9 = vector.broadcast %c0_i32 : i32 to vector<1x384xi32>
    %10 = arith.cmpi sge, %8, %9 : vector<1x384xi32>
    %c16_i32 = arith.constant 16 : i32
    %11 = vector.broadcast %c16_i32 : i32 to vector<1x384xi32>
    %12 = arith.cmpi slt, %8, %11 : vector<1x384xi32>
    %13 = arith.andi %10, %12 : vector<1x384xi1>
    %14 = arith.extui %13 : vector<1x384xi1> to vector<1x384xi32>
    %15 = arith.sitofp %14 : vector<1x384xi32> to vector<1x384xf32>
    %16 = vector.shape_cast %15 : vector<1x384xf32> to vector<1x384xf32>
    %17 = vector.broadcast %16 : vector<1x384xf32> to vector<32x384xf32>
    %c0_7 = arith.constant 0 : index
    %c0_8 = arith.constant 0 : index
    %18 = vector.load %arg4[%c0_7, %c0_8] : memref<32x2xf32, #tpu.memory_space<vmem>>, vector<32x2xf32>
    %cst = arith.constant dense<0.000000e+00> : vector<32x384xf32>
    %19 = tpu.matmul %18, %1, %cst {dimension_numbers = #tpu.dot_dimension_numbers<[1], [0], [0], [1], [0, 0, 1, 1], [], []>} : vector<32x2xf32>, vector<2x384xf32>, vector<32x384xf32> -> vector<32x384xf32>
    %c0_9 = arith.constant 0 : index
    %c0_10 = arith.constant 0 : index
    %20 = vector.load %arg5[%c0_9, %c0_10] : memref<32x1xf32, #tpu.memory_space<vmem>>, vector<32x1xf32>
    %21 = vector.broadcast %20 : vector<32x1xf32> to vector<32x384xf32>
    %22 = arith.addf %19, %21 : vector<32x384xf32>
    %23 = arith.mulf %22, %17 : vector<32x384xf32>
    %cst_11 = arith.constant 0.000000e+00 : f32
    %24 = vector.broadcast %cst_11 : f32 to vector<2x384xf32>
    %cst_12 = arith.constant 0.000000e+00 : f32
    %25 = vector.broadcast %cst_12 : f32 to vector<2x384xf32>
    %c1_i32 = arith.constant 1 : i32
    %26 = tpu.dynamic_rotate %23 by %c1_i32 dim 1 : vector<32x384xf32>, i32 -> vector<32x384xf32>
    %c0_13 = arith.constant 0 : index
    %c0_14 = arith.constant 0 : index
    %c0_15 = arith.constant 0 : index
    %c0_16 = arith.constant 0 : index
    %27 = vector.load %arg6[%c0_13, %c0_14, %c0_15, %c0_16] : memref<2x3x64x32xf32, #tpu.memory_space<vmem>>, vector<1x1x64x32xf32>
    %28 = vector.shape_cast %27 : vector<1x1x64x32xf32> to vector<64x32xf32>
    %cst_17 = arith.constant dense<0.000000e+00> : vector<64x384xf32>
    %29 = tpu.matmul %28, %26, %cst_17 {dimension_numbers = #tpu.dot_dimension_numbers<[1], [0], [0], [1], [0, 0, 1, 1], [], []>} : vector<64x32xf32>, vector<32x384xf32>, vector<64x384xf32> -> vector<64x384xf32>
    %c0_18 = arith.constant 0 : index
    %c1 = arith.constant 1 : index
    %c0_19 = arith.constant 0 : index
    %c0_20 = arith.constant 0 : index
    %30 = vector.load %arg6[%c0_18, %c1, %c0_19, %c0_20] : memref<2x3x64x32xf32, #tpu.memory_space<vmem>>, vector<1x1x64x32xf32>
    %31 = vector.shape_cast %30 : vector<1x1x64x32xf32> to vector<64x32xf32>
    %cst_21 = arith.constant dense<0.000000e+00> : vector<64x384xf32>
    %32 = tpu.matmul %31, %23, %cst_21 {dimension_numbers = #tpu.dot_dimension_numbers<[1], [0], [0], [1], [0, 0, 1, 1], [], []>} : vector<64x32xf32>, vector<32x384xf32>, vector<64x384xf32> -> vector<64x384xf32>
    %33 = arith.addf %29, %32 : vector<64x384xf32>
    %c383_i32 = arith.constant 383 : i32
    %34 = tpu.dynamic_rotate %23 by %c383_i32 dim 1 : vector<32x384xf32>, i32 -> vector<32x384xf32>
    %c0_22 = arith.constant 0 : index
    %c2 = arith.constant 2 : index
    %c0_23 = arith.constant 0 : index
    %c0_24 = arith.constant 0 : index
    %35 = vector.load %arg6[%c0_22, %c2, %c0_23, %c0_24] : memref<2x3x64x32xf32, #tpu.memory_space<vmem>>, vector<1x1x64x32xf32>
    %36 = vector.shape_cast %35 : vector<1x1x64x32xf32> to vector<64x32xf32>
    %cst_25 = arith.constant dense<0.000000e+00> : vector<64x384xf32>
    %37 = tpu.matmul %36, %34, %cst_25 {dimension_numbers = #tpu.dot_dimension_numbers<[1], [0], [0], [1], [0, 0, 1, 1], [], []>} : vector<64x32xf32>, vector<32x384xf32>, vector<64x384xf32> -> vector<64x384xf32>
    %38 = arith.addf %33, %37 : vector<64x384xf32>
    %c0_26 = arith.constant 0 : index
    %c0_27 = arith.constant 0 : index
    %c0_28 = arith.constant 0 : index
    %39 = vector.load %arg7[%c0_26, %c0_27, %c0_28] : memref<2x64x1xf32, #tpu.memory_space<vmem>>, vector<1x64x1xf32>
    %40 = vector.shape_cast %39 : vector<1x64x1xf32> to vector<64x1xf32>
    %41 = vector.broadcast %40 : vector<64x1xf32> to vector<64x384xf32>
    %42 = arith.addf %38, %41 : vector<64x384xf32>
    %43 = vector.extract_strided_slice %42 {offsets = [0, 0], sizes = [32, 384], strides = [1, 1]} : vector<64x384xf32> to vector<32x384xf32>
    %44 = math.tanh %43 : vector<32x384xf32>
    %45 = vector.extract_strided_slice %42 {offsets = [32, 0], sizes = [32, 384], strides = [1, 1]} : vector<64x384xf32> to vector<32x384xf32>
    %46 = arith.negf %45 : vector<32x384xf32>
    %47 = math.exp %46 : vector<32x384xf32>
    %cst_29 = arith.constant 1.000000e+00 : f32
    %48 = vector.broadcast %cst_29 : f32 to vector<32x384xf32>
    %49 = arith.addf %48, %47 : vector<32x384xf32>
    %50 = arith.divf %48, %49 : vector<32x384xf32>
    %51 = arith.mulf %44, %50 : vector<32x384xf32>
    %c0_30 = arith.constant 0 : index
    %c0_31 = arith.constant 0 : index
    %c0_32 = arith.constant 0 : index
    %52 = vector.load %arg10[%c0_30, %c0_31, %c0_32] : memref<2x2x32xf32, #tpu.memory_space<vmem>>, vector<1x2x32xf32>
    %53 = vector.shape_cast %52 : vector<1x2x32xf32> to vector<2x32xf32>
    %cst_33 = arith.constant dense<0.000000e+00> : vector<2x384xf32>
    %54 = tpu.matmul %53, %51, %cst_33 {dimension_numbers = #tpu.dot_dimension_numbers<[1], [0], [0], [1], [0, 0, 1, 1], [], []>} : vector<2x32xf32>, vector<32x384xf32>, vector<2x384xf32> -> vector<2x384xf32>
    %55 = arith.addf %24, %54 : vector<2x384xf32>
    %c0_34 = arith.constant 0 : index
    %c0_35 = arith.constant 0 : index
    %c0_36 = arith.constant 0 : index
    %56 = vector.load %arg11[%c0_34, %c0_35, %c0_36] : memref<2x2x32xf32, #tpu.memory_space<vmem>>, vector<1x2x32xf32>
    %57 = vector.shape_cast %56 : vector<1x2x32xf32> to vector<2x32xf32>
    %cst_37 = arith.constant dense<0.000000e+00> : vector<2x384xf32>
    %58 = tpu.matmul %57, %51, %cst_37 {dimension_numbers = #tpu.dot_dimension_numbers<[1], [0], [0], [1], [0, 0, 1, 1], [], []>} : vector<2x32xf32>, vector<32x384xf32>, vector<2x384xf32> -> vector<2x384xf32>
    %59 = arith.addf %25, %58 : vector<2x384xf32>
    %c0_38 = arith.constant 0 : index
    %c0_39 = arith.constant 0 : index
    %c0_40 = arith.constant 0 : index
    %60 = vector.load %arg8[%c0_38, %c0_39, %c0_40] : memref<1x32x32xf32, #tpu.memory_space<vmem>>, vector<1x32x32xf32>
    %61 = vector.shape_cast %60 : vector<1x32x32xf32> to vector<32x32xf32>
    %cst_41 = arith.constant dense<0.000000e+00> : vector<32x384xf32>
    %62 = tpu.matmul %61, %51, %cst_41 {dimension_numbers = #tpu.dot_dimension_numbers<[1], [0], [0], [1], [0, 0, 1, 1], [], []>} : vector<32x32xf32>, vector<32x384xf32>, vector<32x384xf32> -> vector<32x384xf32>
    %c0_42 = arith.constant 0 : index
    %c0_43 = arith.constant 0 : index
    %c0_44 = arith.constant 0 : index
    %63 = vector.load %arg9[%c0_42, %c0_43, %c0_44] : memref<1x32x1xf32, #tpu.memory_space<vmem>>, vector<1x32x1xf32>
    %64 = vector.shape_cast %63 : vector<1x32x1xf32> to vector<32x1xf32>
    %65 = vector.broadcast %64 : vector<32x1xf32> to vector<32x384xf32>
    %66 = arith.addf %62, %65 : vector<32x384xf32>
    %67 = arith.addf %23, %66 : vector<32x384xf32>
    %68 = arith.mulf %67, %17 : vector<32x384xf32>
    %c1_i32_45 = arith.constant 1 : i32
    %69 = tpu.dynamic_rotate %68 by %c1_i32_45 dim 1 : vector<32x384xf32>, i32 -> vector<32x384xf32>
    %c1_46 = arith.constant 1 : index
    %c0_47 = arith.constant 0 : index
    %c0_48 = arith.constant 0 : index
    %c0_49 = arith.constant 0 : index
    %70 = vector.load %arg6[%c1_46, %c0_47, %c0_48, %c0_49] : memref<2x3x64x32xf32, #tpu.memory_space<vmem>>, vector<1x1x64x32xf32>
    %71 = vector.shape_cast %70 : vector<1x1x64x32xf32> to vector<64x32xf32>
    %cst_50 = arith.constant dense<0.000000e+00> : vector<64x384xf32>
    %72 = tpu.matmul %71, %69, %cst_50 {dimension_numbers = #tpu.dot_dimension_numbers<[1], [0], [0], [1], [0, 0, 1, 1], [], []>} : vector<64x32xf32>, vector<32x384xf32>, vector<64x384xf32> -> vector<64x384xf32>
    %c1_51 = arith.constant 1 : index
    %c1_52 = arith.constant 1 : index
    %c0_53 = arith.constant 0 : index
    %c0_54 = arith.constant 0 : index
    %73 = vector.load %arg6[%c1_51, %c1_52, %c0_53, %c0_54] : memref<2x3x64x32xf32, #tpu.memory_space<vmem>>, vector<1x1x64x32xf32>
    %74 = vector.shape_cast %73 : vector<1x1x64x32xf32> to vector<64x32xf32>
    %cst_55 = arith.constant dense<0.000000e+00> : vector<64x384xf32>
    %75 = tpu.matmul %74, %68, %cst_55 {dimension_numbers = #tpu.dot_dimension_numbers<[1], [0], [0], [1], [0, 0, 1, 1], [], []>} : vector<64x32xf32>, vector<32x384xf32>, vector<64x384xf32> -> vector<64x384xf32>
    %76 = arith.addf %72, %75 : vector<64x384xf32>
    %c383_i32_56 = arith.constant 383 : i32
    %77 = tpu.dynamic_rotate %68 by %c383_i32_56 dim 1 : vector<32x384xf32>, i32 -> vector<32x384xf32>
    %c1_57 = arith.constant 1 : index
    %c2_58 = arith.constant 2 : index
    %c0_59 = arith.constant 0 : index
    %c0_60 = arith.constant 0 : index
    %78 = vector.load %arg6[%c1_57, %c2_58, %c0_59, %c0_60] : memref<2x3x64x32xf32, #tpu.memory_space<vmem>>, vector<1x1x64x32xf32>
    %79 = vector.shape_cast %78 : vector<1x1x64x32xf32> to vector<64x32xf32>
    %cst_61 = arith.constant dense<0.000000e+00> : vector<64x384xf32>
    %80 = tpu.matmul %79, %77, %cst_61 {dimension_numbers = #tpu.dot_dimension_numbers<[1], [0], [0], [1], [0, 0, 1, 1], [], []>} : vector<64x32xf32>, vector<32x384xf32>, vector<64x384xf32> -> vector<64x384xf32>
    %81 = arith.addf %76, %80 : vector<64x384xf32>
    %c1_62 = arith.constant 1 : index
    %c0_63 = arith.constant 0 : index
    %c0_64 = arith.constant 0 : index
    %82 = vector.load %arg7[%c1_62, %c0_63, %c0_64] : memref<2x64x1xf32, #tpu.memory_space<vmem>>, vector<1x64x1xf32>
    %83 = vector.shape_cast %82 : vector<1x64x1xf32> to vector<64x1xf32>
    %84 = vector.broadcast %83 : vector<64x1xf32> to vector<64x384xf32>
    %85 = arith.addf %81, %84 : vector<64x384xf32>
    %86 = vector.extract_strided_slice %85 {offsets = [0, 0], sizes = [32, 384], strides = [1, 1]} : vector<64x384xf32> to vector<32x384xf32>
    %87 = math.tanh %86 : vector<32x384xf32>
    %88 = vector.extract_strided_slice %85 {offsets = [32, 0], sizes = [32, 384], strides = [1, 1]} : vector<64x384xf32> to vector<32x384xf32>
    %89 = arith.negf %88 : vector<32x384xf32>
    %90 = math.exp %89 : vector<32x384xf32>
    %cst_65 = arith.constant 1.000000e+00 : f32
    %91 = vector.broadcast %cst_65 : f32 to vector<32x384xf32>
    %92 = arith.addf %91, %90 : vector<32x384xf32>
    %93 = arith.divf %91, %92 : vector<32x384xf32>
    %94 = arith.mulf %87, %93 : vector<32x384xf32>
    %c1_66 = arith.constant 1 : index
    %c0_67 = arith.constant 0 : index
    %c0_68 = arith.constant 0 : index
    %95 = vector.load %arg10[%c1_66, %c0_67, %c0_68] : memref<2x2x32xf32, #tpu.memory_space<vmem>>, vector<1x2x32xf32>
    %96 = vector.shape_cast %95 : vector<1x2x32xf32> to vector<2x32xf32>
    %cst_69 = arith.constant dense<0.000000e+00> : vector<2x384xf32>
    %97 = tpu.matmul %96, %94, %cst_69 {dimension_numbers = #tpu.dot_dimension_numbers<[1], [0], [0], [1], [0, 0, 1, 1], [], []>} : vector<2x32xf32>, vector<32x384xf32>, vector<2x384xf32> -> vector<2x384xf32>
    %98 = arith.addf %55, %97 : vector<2x384xf32>
    %c1_70 = arith.constant 1 : index
    %c0_71 = arith.constant 0 : index
    %c0_72 = arith.constant 0 : index
    %99 = vector.load %arg11[%c1_70, %c0_71, %c0_72] : memref<2x2x32xf32, #tpu.memory_space<vmem>>, vector<1x2x32xf32>
    %100 = vector.shape_cast %99 : vector<1x2x32xf32> to vector<2x32xf32>
    %cst_73 = arith.constant dense<0.000000e+00> : vector<2x384xf32>
    %101 = tpu.matmul %100, %94, %cst_73 {dimension_numbers = #tpu.dot_dimension_numbers<[1], [0], [0], [1], [0, 0, 1, 1], [], []>} : vector<2x32xf32>, vector<32x384xf32>, vector<2x384xf32> -> vector<2x384xf32>
    %102 = arith.addf %59, %101 : vector<2x384xf32>
    %103 = vector.extract_strided_slice %1 {offsets = [0, 128], sizes = [2, 128], strides = [1, 1]} : vector<2x384xf32> to vector<2x128xf32>
    %104 = vector.extract_strided_slice %15 {offsets = [0, 128], sizes = [1, 128], strides = [1, 1]} : vector<1x384xf32> to vector<1x128xf32>
    %105 = vector.extract_strided_slice %98 {offsets = [0, 128], sizes = [2, 128], strides = [1, 1]} : vector<2x384xf32> to vector<2x128xf32>
    %c0_74 = arith.constant 0 : index
    %c0_75 = arith.constant 0 : index
    %106 = vector.load %arg12[%c0_74, %c0_75] : memref<2x1xf32, #tpu.memory_space<vmem>>, vector<2x1xf32>
    %107 = vector.broadcast %106 : vector<2x1xf32> to vector<2x128xf32>
    %108 = arith.addf %105, %107 : vector<2x128xf32>
    %109 = vector.broadcast %104 : vector<1x128xf32> to vector<2x128xf32>
    %110 = arith.mulf %108, %109 : vector<2x128xf32>
    %111 = vector.extract_strided_slice %102 {offsets = [0, 128], sizes = [2, 128], strides = [1, 1]} : vector<2x384xf32> to vector<2x128xf32>
    %c0_76 = arith.constant 0 : index
    %c0_77 = arith.constant 0 : index
    %112 = vector.load %arg13[%c0_76, %c0_77] : memref<2x1xf32, #tpu.memory_space<vmem>>, vector<2x1xf32>
    %113 = vector.broadcast %112 : vector<2x1xf32> to vector<2x128xf32>
    %114 = arith.addf %111, %113 : vector<2x128xf32>
    %115 = vector.broadcast %104 : vector<1x128xf32> to vector<2x128xf32>
    %116 = arith.mulf %114, %115 : vector<2x128xf32>
    %117 = math.exp %116 : vector<2x128xf32>
    %118 = arith.mulf %3, %117 : vector<2x128xf32>
    %119 = arith.addf %118, %110 : vector<2x128xf32>
    %120 = vector.shape_cast %116 : vector<2x128xf32> to vector<1x2x128xf32>
    %cst_78 = arith.constant dense<0.000000e+00> : vector<1xf32>
    %121 = vector.multi_reduction <add>, %120, %cst_78 [1, 2] : vector<1x2x128xf32> to vector<1xf32>
    %122 = vector.shape_cast %121 : vector<1xf32> to vector<1x1x1xf32>
    %123 = vector.extract %122[0, 0, 0] : f32 from vector<1x1x1xf32>
    %124 = vector.broadcast %123 : f32 to vector<1x1x8x128xf32>
    %c0_79 = arith.constant 0 : index
    %c0_80 = arith.constant 0 : index
    %c0_81 = arith.constant 0 : index
    %c0_82 = arith.constant 0 : index
    %125 = vector.load %arg15[%c0_79, %c0_80, %c0_81, %c0_82] : memref<1x1x8x128xf32, #tpu.memory_space<vmem>>, vector<1x1x8x128xf32>
    tpu.vector_store %arg15[%c0_79, %c0_80, %c0_81, %c0_82], %124 {strides = array<i32>} : memref<1x1x8x128xf32, #tpu.memory_space<vmem>>, vector<1x1x8x128xf32>,
    %126 = tpu.concatenate %103, %119 in 0 : vector<2x128xf32>, vector<2x128xf32> -> vector<4x128xf32>
    %c0_83 = arith.constant 0 : index
    %c0_84 = arith.constant 0 : index
    %c0_85 = arith.constant 0 : index
    %127 = vector.load %arg14[%c0_83, %c0_84, %c0_85] : memref<1x4x128xf32, #tpu.memory_space<vmem>>, vector<1x4x128xf32>
    %128 = vector.shape_cast %127 : vector<1x4x128xf32> to vector<4x128xf32>
    %129 = vector.shape_cast %126 : vector<4x128xf32> to vector<1x4x128xf32>
    tpu.vector_store %arg14[%c0_83, %c0_84, %c0_85], %129 {strides = array<i32>} : memref<1x4x128xf32, #tpu.memory_space<vmem>>, vector<1x4x128xf32>,
    return
  }
  func.func @transform_0(%arg0: i32, %arg1: i32) -> (i32, i32, i32, i32) {
    %c0_i32 = arith.constant 0 : i32
    %c0_i32_0 = arith.constant 0 : i32
    %c0_i32_1 = arith.constant 0 : i32
    return %arg0, %arg1, %c0_i32, %c0_i32_0 : i32, i32, i32, i32
  }
  func.func @transform_1(%arg0: i32, %arg1: i32) -> (i32, i32, i32) {
    %c0_i32 = arith.constant 0 : i32
    %c0_i32_0 = arith.constant 0 : i32
    return %arg0, %c0_i32, %arg1 : i32, i32, i32
  }
  func.func @transform_2(%arg0: i32, %arg1: i32) -> (i32, i32) {
    %c0_i32 = arith.constant 0 : i32
    %c0_i32_0 = arith.constant 0 : i32
    %c0_i32_1 = arith.constant 0 : i32
    return %c0_i32, %c0_i32_0 : i32, i32
  }
  func.func @transform_3(%arg0: i32, %arg1: i32) -> (i32, i32) {
    %c0_i32 = arith.constant 0 : i32
    %c0_i32_0 = arith.constant 0 : i32
    %c0_i32_1 = arith.constant 0 : i32
    return %c0_i32, %c0_i32_0 : i32, i32
  }
  func.func @transform_4(%arg0: i32, %arg1: i32) -> (i32, i32, i32, i32) {
    %c0_i32 = arith.constant 0 : i32
    %c0_i32_0 = arith.constant 0 : i32
    %c0_i32_1 = arith.constant 0 : i32
    %c0_i32_2 = arith.constant 0 : i32
    %c0_i32_3 = arith.constant 0 : i32
    return %c0_i32, %c0_i32_0, %c0_i32_1, %c0_i32_2 : i32, i32, i32, i32
  }
  func.func @transform_5(%arg0: i32, %arg1: i32) -> (i32, i32, i32) {
    %c0_i32 = arith.constant 0 : i32
    %c0_i32_0 = arith.constant 0 : i32
    %c0_i32_1 = arith.constant 0 : i32
    %c0_i32_2 = arith.constant 0 : i32
    return %c0_i32, %c0_i32_0, %c0_i32_1 : i32, i32, i32
  }
  func.func @transform_6(%arg0: i32, %arg1: i32) -> (i32, i32, i32) {
    %c0_i32 = arith.constant 0 : i32
    %c0_i32_0 = arith.constant 0 : i32
    %c0_i32_1 = arith.constant 0 : i32
    %c0_i32_2 = arith.constant 0 : i32
    return %c0_i32, %c0_i32_0, %c0_i32_1 : i32, i32, i32
  }
  func.func @transform_7(%arg0: i32, %arg1: i32) -> (i32, i32, i32) {
    %c0_i32 = arith.constant 0 : i32
    %c0_i32_0 = arith.constant 0 : i32
    %c0_i32_1 = arith.constant 0 : i32
    %c0_i32_2 = arith.constant 0 : i32
    return %c0_i32, %c0_i32_0, %c0_i32_1 : i32, i32, i32
  }
  func.func @transform_8(%arg0: i32, %arg1: i32) -> (i32, i32, i32) {
    %c0_i32 = arith.constant 0 : i32
    %c0_i32_0 = arith.constant 0 : i32
    %c0_i32_1 = arith.constant 0 : i32
    %c0_i32_2 = arith.constant 0 : i32
    return %c0_i32, %c0_i32_0, %c0_i32_1 : i32, i32, i32
  }
  func.func @transform_9(%arg0: i32, %arg1: i32) -> (i32, i32, i32) {
    %c0_i32 = arith.constant 0 : i32
    %c0_i32_0 = arith.constant 0 : i32
    %c0_i32_1 = arith.constant 0 : i32
    %c0_i32_2 = arith.constant 0 : i32
    return %c0_i32, %c0_i32_0, %c0_i32_1 : i32, i32, i32
  }
  func.func @transform_10(%arg0: i32, %arg1: i32) -> (i32, i32) {
    %c0_i32 = arith.constant 0 : i32
    %c0_i32_0 = arith.constant 0 : i32
    %c0_i32_1 = arith.constant 0 : i32
    return %c0_i32, %c0_i32_0 : i32, i32
  }
  func.func @transform_11(%arg0: i32, %arg1: i32) -> (i32, i32) {
    %c0_i32 = arith.constant 0 : i32
    %c0_i32_0 = arith.constant 0 : i32
    %c0_i32_1 = arith.constant 0 : i32
    return %c0_i32, %c0_i32_0 : i32, i32
  }
  func.func @transform_12(%arg0: i32, %arg1: i32) -> (i32, i32, i32) {
    %c0_i32 = arith.constant 0 : i32
    %c0_i32_0 = arith.constant 0 : i32
    return %arg0, %c0_i32, %arg1 : i32, i32, i32
  }
  func.func @transform_13(%arg0: i32, %arg1: i32) -> (i32, i32, i32, i32) {
    %c0_i32 = arith.constant 0 : i32
    %c0_i32_0 = arith.constant 0 : i32
    %c0_i32_1 = arith.constant 0 : i32
    return %arg0, %arg1, %c0_i32, %c0_i32_0 : i32, i32, i32, i32
  }
}

</mosaic_0001>

<llo_original>
// kernel: tpu_custom_call.1
$region0: #{tpu_custom_call.1}
  #allocation0 [shape = 'u32[]', space=smem, size = 0x4, offset = 0x4, fixed_abs, tag = 'smem constant byte address 0x4 - core index']
  #allocation1 [shape = 'u32[144,128]{1,0:T(1,128)}', space=vmem, size = 0x12000, scoped, tag = 'internal scratch']
  %s0 = inlined_call_operand.vmem [shape: f32[2,1,2,384], index: 0, kind: input, shape index: {}]
  %s1 = inlined_call_operand.vmem [shape: f32[2,2,128], index: 1, kind: input, shape index: {}]
  %s2 = inlined_call_operand.vmem [shape: f32[32,2], index: 2, kind: input, shape index: {}]
  %s3 = inlined_call_operand.vmem [shape: f32[32,1], index: 3, kind: input, shape index: {}]
  %s4 = inlined_call_operand.vmem [shape: f32[2,3,64,32], index: 4, kind: input, shape index: {}]
  %s5 = inlined_call_operand.vmem [shape: f32[2,64,1], index: 5, kind: input, shape index: {}]
  %s6 = inlined_call_operand.vmem [shape: f32[1,32,32], index: 6, kind: input, shape index: {}]
  %s7 = inlined_call_operand.vmem [shape: f32[1,32,1], index: 7, kind: input, shape index: {}]
  %s8 = inlined_call_operand.vmem [shape: f32[2,2,32], index: 8, kind: input, shape index: {}]
  %s9 = inlined_call_operand.vmem [shape: f32[2,2,32], index: 9, kind: input, shape index: {}]
  %s10 = inlined_call_operand.vmem [shape: f32[2,1], index: 10, kind: input, shape index: {}]
  %s11 = inlined_call_operand.vmem [shape: f32[2,1], index: 11, kind: input, shape index: {}]
  %s12 = inlined_call_operand.hbm [shape: f32[2,4,128], index: 12, kind: output, shape index: {0}]
  %s13 = inlined_call_operand.hbm [shape: f32[2,1,8,128], index: 13, kind: output, shape index: {1}]
  %14 = xla_tuple %s12, %s13
  %s15 = sld [smem:[#allocation0]]
  $region89: #{tpu_custom_call.1} parent=0
    _
  %s17 = ssub.s32 1, %s15
  %s18 = scalar_select 0, %s17, %s15
  $region1: #{tpu_custom_call.1} parent=0
    #allocation2 [shape = 'u8[4096]{0}', space=vmem, size = 0x1000, scoped, tag = 'output window, operand 0']
    #allocation3 [shape = 's32[2]{0}', space=sflag, size = 0x8, scoped, tag = 'scoped memory for tpu_custom_call.1']
    #allocation4 [shape = 'u8[8192]{0}', space=vmem, size = 0x2000, scoped, tag = 'output window, operand 1']
    #allocation5 [shape = 's32[2]{0}', space=sflag, size = 0x8, scoped, tag = 'scoped memory for tpu_custom_call.1']
    %19 = vsyncpa [#allocation3], 0
    %s20 = scalar_lea.sflag [#allocation3], 1
    %21 = vsyncpa %s20, 0
    %22 = vsyncpa [#allocation5], 0
    %s23 = scalar_lea.sflag [#allocation5], 1
    %24 = vsyncpa %s23, 0
    loop: start=0, step=1, limit=4
    $region2: #{tpu_custom_call.1} parent=1 // loop_pre_header
      _
    $region3: #{tpu_custom_call.1} parent=1 // loop_header
      %s26 = sphi 0, %s30
      %p27 = scmp.ge.s32.totalorder %s26, 4
      %s33 = sphi 0, %s45
      %s34 = sphi 0, %s41
      %s35 = sphi 0, %s33
      %s36 = sphi 0, %s34
      %s37 = sphi 0, %s35
      %s38 = sphi 0, %s36
      %s50 = sphi 0, %s52
      %s53 = sphi 0, %s50
      %s54 = sphi 0, %s53
      %s70 = sphi 0, %s54
      %s78 = sphi 0, %s80
      %s81 = sphi 0, %s78
      %s82 = sphi 0, %s81
      %s98 = sphi 0, %s82
      %s102 = sphi 0, %s102
      %s104 = sphi 0, %s102
      %s105 = sphi 0, %s104
      %s119 = sphi 0, %s105
      %s123 = sphi 0, %s123
      %s125 = sphi 0, %s123
      %s126 = sphi 0, %s125
      %s140 = sphi 0, %s126
      %s144 = sphi 0, %s144
      %s146 = sphi 0, %s144
      %s147 = sphi 0, %s146
      %s161 = sphi 0, %s147
      %s165 = sphi 0, %s165
      %s167 = sphi 0, %s165
      %s168 = sphi 0, %s167
      %s182 = sphi 0, %s168
      %s186 = sphi 0, %s186
      %s188 = sphi 0, %s186
      %s189 = sphi 0, %s188
      %s203 = sphi 0, %s189
      %s207 = sphi 0, %s207
      %s209 = sphi 0, %s207
      %s210 = sphi 0, %s209
      %s224 = sphi 0, %s210
      %s228 = sphi 0, %s228
      %s230 = sphi 0, %s228
      %s231 = sphi 0, %s230
      %s245 = sphi 0, %s231
      %s249 = sphi 0, %s249
      %s251 = sphi 0, %s249
      %s252 = sphi 0, %s251
      %s266 = sphi 0, %s252
      %s270 = sphi 0, %s270
      %s272 = sphi 0, %s270
      %s273 = sphi 0, %s272
      %s287 = sphi 0, %s273
      %s291 = sphi 0, %s291
      %s293 = sphi 0, %s291
      %s294 = sphi 0, %s293
      %s308 = sphi 0, %s294
      %s316 = sphi 0, %s318
      %s319 = sphi 0, %s316
      %s320 = sphi 0, %s319
      %s336 = sphi 0, %s320
      %s344 = sphi 0, %s346
      %s347 = sphi 0, %s344
      %s348 = sphi 0, %s347
      %s364 = sphi 0, %s348
    $region4: #{tpu_custom_call.1} parent=1 // loop_header_branch
      %29 = sbr.rel (%p27) target = $region8
    $region5: #{tpu_custom_call.1} parent=1 // loop_body
      %s31 = ssub.s32 %s26, 1
      %s32 = ssub.s32 %s26, 2
      %s39 = sadd.s32 1, %s34
      %p40 = scmp.ge.s32.totalorder %s39, 1
      %s41 = scalar_select %p40, 0, %s39
      %s42 = sadd.s32 1, %s33
      %s43 = scalar_select %p40, %s42, %s33
      %p44 = scmp.ge.s32.totalorder %s43, 2
      %s45 = scalar_select %p44, 0, %s43
      %s46 = ssub.s32 %s33, %s45
      %s47 = ssub.s32 %s34, %s41
      %s48 = sor.u32 %s46, %s47
      %p49 = scmp.eq.s32.totalorder %s48, 0
      %s51 = sadd.s32 %s50, 1
      %s52 = scalar_select %p49, %s50, %s51
      %p55 = pneg %p49
      %p56 = scmp.eq.s32.totalorder %s26, 1
      %p57 = por %p55, %p56
      %p58 = scmp.ne.s32.totalorder %s50, %s53
      %p59 = scmp.eq.s32.totalorder %s26, 0
      %p60 = por %p58, %p59
      %p61 = scmp.ne.s32.totalorder %s50, %s53
      %p62 = scmp.eq.s32.totalorder %s31, 1
      %p63 = por %p61, %p62
      %p64 = scmp.ne.s32.totalorder %s53, %s54
      %p65 = scmp.eq.s32.totalorder %s31, 0
      %p66 = por %p64, %p65
      %p67 = scmp.ne.s32.totalorder %s53, %s54
      %p68 = scmp.eq.s32.totalorder %s32, 1
      %p69 = por %p67, %p68
      %p71 = scmp.ne.s32.totalorder %s54, %s70
      %p72 = scmp.eq.s32.totalorder %s32, 0
      %p73 = por %p71, %p72
      %s74 = ssub.s32 %s33, %s45
      %s75 = ssub.s32 %s34, %s41
      %s76 = sor.u32 %s74, %s75
      %p77 = scmp.eq.s32.totalorder %s76, 0
      %s79 = sadd.s32 %s78, 1
      %s80 = scalar_select %p77, %s78, %s79
      %p83 = pneg %p77
      %p84 = scmp.eq.s32.totalorder %s26, 1
      %p85 = por %p83, %p84
      %p86 = scmp.ne.s32.totalorder %s78, %s81
      %p87 = scmp.eq.s32.totalorder %s26, 0
      %p88 = por %p86, %p87
      %p89 = scmp.ne.s32.totalorder %s78, %s81
      %p90 = scmp.eq.s32.totalorder %s31, 1
      %p91 = por %p89, %p90
      %p92 = scmp.ne.s32.totalorder %s81, %s82
      %p93 = scmp.eq.s32.totalorder %s31, 0
      %p94 = por %p92, %p93
      %p95 = scmp.ne.s32.totalorder %s81, %s82
      %p96 = scmp.eq.s32.totalorder %s32, 1
      %p97 = por %p95, %p96
      %p99 = scmp.ne.s32.totalorder %s82, %s98
      %p100 = scmp.eq.s32.totalorder %s32, 0
      %p101 = por %p99, %p100
      %s103 = sadd.s32 %s102, 1
      %p106 = scmp.eq.s32.totalorder %s26, 1
      %p107 = scmp.ne.s32.totalorder %s102, %s104
      %p108 = scmp.eq.s32.totalorder %s26, 0
      %p109 = por %p107, %p108
      %p110 = scmp.ne.s32.totalorder %s102, %s104
      %p111 = scmp.eq.s32.totalorder %s31, 1
      %p112 = por %p110, %p111
      %p113 = scmp.ne.s32.totalorder %s104, %s105
      %p114 = scmp.eq.s32.totalorder %s31, 0
      %p115 = por %p113, %p114
      %p116 = scmp.ne.s32.totalorder %s104, %s105
      %p117 = scmp.eq.s32.totalorder %s32, 1
      %p118 = por %p116, %p117
      %p120 = scmp.ne.s32.totalorder %s105, %s119
      %p121 = scmp.eq.s32.totalorder %s32, 0
      %p122 = por %p120, %p121
      %s124 = sadd.s32 %s123, 1
      %p127 = scmp.eq.s32.totalorder %s26, 1
      %p128 = scmp.ne.s32.totalorder %s123, %s125
      %p129 = scmp.eq.s32.totalorder %s26, 0
      %p130 = por %p128, %p129
      %p131 = scmp.ne.s32.totalorder %s123, %s125
      %p132 = scmp.eq.s32.totalorder %s31, 1
      %p133 = por %p131, %p132
      %p134 = scmp.ne.s32.totalorder %s125, %s126
      %p135 = scmp.eq.s32.totalorder %s31, 0
      %p136 = por %p134, %p135
      %p137 = scmp.ne.s32.totalorder %s125, %s126
      %p138 = scmp.eq.s32.totalorder %s32, 1
      %p139 = por %p137, %p138
      %p141 = scmp.ne.s32.totalorder %s126, %s140
      %p142 = scmp.eq.s32.totalorder %s32, 0
      %p143 = por %p141, %p142
      %s145 = sadd.s32 %s144, 1
      %p148 = scmp.eq.s32.totalorder %s26, 1
      %p149 = scmp.ne.s32.totalorder %s144, %s146
      %p150 = scmp.eq.s32.totalorder %s26, 0
      %p151 = por %p149, %p150
      %p152 = scmp.ne.s32.totalorder %s144, %s146
      %p153 = scmp.eq.s32.totalorder %s31, 1
      %p154 = por %p152, %p153
      %p155 = scmp.ne.s32.totalorder %s146, %s147
      %p156 = scmp.eq.s32.totalorder %s31, 0
      %p157 = por %p155, %p156
      %p158 = scmp.ne.s32.totalorder %s146, %s147
      %p159 = scmp.eq.s32.totalorder %s32, 1
      %p160 = por %p158, %p159
      %p162 = scmp.ne.s32.totalorder %s147, %s161
      %p163 = scmp.eq.s32.totalorder %s32, 0
      %p164 = por %p162, %p163
      %s166 = sadd.s32 %s165, 1
      %p169 = scmp.eq.s32.totalorder %s26, 1
      %p170 = scmp.ne.s32.totalorder %s165, %s167
      %p171 = scmp.eq.s32.totalorder %s26, 0
      %p172 = por %p170, %p171
      %p173 = scmp.ne.s32.totalorder %s165, %s167
      %p174 = scmp.eq.s32.totalorder %s31, 1
      %p175 = por %p173, %p174
      %p176 = scmp.ne.s32.totalorder %s167, %s168
      %p177 = scmp.eq.s32.totalorder %s31, 0
      %p178 = por %p176, %p177
      %p179 = scmp.ne.s32.totalorder %s167, %s168
      %p180 = scmp.eq.s32.totalorder %s32, 1
      %p181 = por %p179, %p180
      %p183 = scmp.ne.s32.totalorder %s168, %s182
      %p184 = scmp.eq.s32.totalorder %s32, 0
      %p185 = por %p183, %p184
      %s187 = sadd.s32 %s186, 1
      %p190 = scmp.eq.s32.totalorder %s26, 1
      %p191 = scmp.ne.s32.totalorder %s186, %s188
      %p192 = scmp.eq.s32.totalorder %s26, 0
      %p193 = por %p191, %p192
      %p194 = scmp.ne.s32.totalorder %s186, %s188
      %p195 = scmp.eq.s32.totalorder %s31, 1
      %p196 = por %p194, %p195
      %p197 = scmp.ne.s32.totalorder %s188, %s189
      %p198 = scmp.eq.s32.totalorder %s31, 0
      %p199 = por %p197, %p198
      %p200 = scmp.ne.s32.totalorder %s188, %s189
      %p201 = scmp.eq.s32.totalorder %s32, 1
      %p202 = por %p200, %p201
      %p204 = scmp.ne.s32.totalorder %s189, %s203
      %p205 = scmp.eq.s32.totalorder %s32, 0
      %p206 = por %p204, %p205
      %s208 = sadd.s32 %s207, 1
      %p211 = scmp.eq.s32.totalorder %s26, 1
      %p212 = scmp.ne.s32.totalorder %s207, %s209
      %p213 = scmp.eq.s32.totalorder %s26, 0
      %p214 = por %p212, %p213
      %p215 = scmp.ne.s32.totalorder %s207, %s209
      %p216 = scmp.eq.s32.totalorder %s31, 1
      %p217 = por %p215, %p216
      %p218 = scmp.ne.s32.totalorder %s209, %s210
      %p219 = scmp.eq.s32.totalorder %s31, 0
      %p220 = por %p218, %p219
      %p221 = scmp.ne.s32.totalorder %s209, %s210
      %p222 = scmp.eq.s32.totalorder %s32, 1
      %p223 = por %p221, %p222
      %p225 = scmp.ne.s32.totalorder %s210, %s224
      %p226 = scmp.eq.s32.totalorder %s32, 0
      %p227 = por %p225, %p226
      %s229 = sadd.s32 %s228, 1
      %p232 = scmp.eq.s32.totalorder %s26, 1
      %p233 = scmp.ne.s32.totalorder %s228, %s230
      %p234 = scmp.eq.s32.totalorder %s26, 0
      %p235 = por %p233, %p234
      %p236 = scmp.ne.s32.totalorder %s228, %s230
      %p237 = scmp.eq.s32.totalorder %s31, 1
      %p238 = por %p236, %p237
      %p239 = scmp.ne.s32.totalorder %s230, %s231
      %p240 = scmp.eq.s32.totalorder %s31, 0
      %p241 = por %p239, %p240
      %p242 = scmp.ne.s32.totalorder %s230, %s231
      %p243 = scmp.eq.s32.totalorder %s32, 1
      %p244 = por %p242, %p243
      %p246 = scmp.ne.s32.totalorder %s231, %s245
      %p247 = scmp.eq.s32.totalorder %s32, 0
      %p248 = por %p246, %p247
      %s250 = sadd.s32 %s249, 1
      %p253 = scmp.eq.s32.totalorder %s26, 1
      %p254 = scmp.ne.s32.totalorder %s249, %s251
      %p255 = scmp.eq.s32.totalorder %s26, 0
      %p256 = por %p254, %p255
      %p257 = scmp.ne.s32.totalorder %s249, %s251
      %p258 = scmp.eq.s32.totalorder %s31, 1
      %p259 = por %p257, %p258
      %p260 = scmp.ne.s32.totalorder %s251, %s252
      %p261 = scmp.eq.s32.totalorder %s31, 0
      %p262 = por %p260, %p261
      %p263 = scmp.ne.s32.totalorder %s251, %s252
      %p264 = scmp.eq.s32.totalorder %s32, 1
      %p265 = por %p263, %p264
      %p267 = scmp.ne.s32.totalorder %s252, %s266
      %p268 = scmp.eq.s32.totalorder %s32, 0
      %p269 = por %p267, %p268
      %s271 = sadd.s32 %s270, 1
      %p274 = scmp.eq.s32.totalorder %s26, 1
      %p275 = scmp.ne.s32.totalorder %s270, %s272
      %p276 = scmp.eq.s32.totalorder %s26, 0
      %p277 = por %p275, %p276
      %p278 = scmp.ne.s32.totalorder %s270, %s272
      %p279 = scmp.eq.s32.totalorder %s31, 1
      %p280 = por %p278, %p279
      %p281 = scmp.ne.s32.totalorder %s272, %s273
      %p282 = scmp.eq.s32.totalorder %s31, 0
      %p283 = por %p281, %p282
      %p284 = scmp.ne.s32.totalorder %s272, %s273
      %p285 = scmp.eq.s32.totalorder %s32, 1
      %p286 = por %p284, %p285
      %p288 = scmp.ne.s32.totalorder %s273, %s287
      %p289 = scmp.eq.s32.totalorder %s32, 0
      %p290 = por %p288, %p289
      %s292 = sadd.s32 %s291, 1
      %p295 = scmp.eq.s32.totalorder %s26, 1
      %p296 = scmp.ne.s32.totalorder %s291, %s293
      %p297 = scmp.eq.s32.totalorder %s26, 0
      %p298 = por %p296, %p297
      %p299 = scmp.ne.s32.totalorder %s291, %s293
      %p300 = scmp.eq.s32.totalorder %s31, 1
      %p301 = por %p299, %p300
      %p302 = scmp.ne.s32.totalorder %s293, %s294
      %p303 = scmp.eq.s32.totalorder %s31, 0
      %p304 = por %p302, %p303
      %p305 = scmp.ne.s32.totalorder %s293, %s294
      %p306 = scmp.eq.s32.totalorder %s32, 1
      %p307 = por %p305, %p306
      %p309 = scmp.ne.s32.totalorder %s294, %s308
      %p310 = scmp.eq.s32.totalorder %s32, 0
      %p311 = por %p309, %p310
      %s312 = ssub.s32 %s33, %s45
      %s313 = ssub.s32 %s34, %s41
      %s314 = sor.u32 %s312, %s313
      %p315 = scmp.eq.s32.totalorder %s314, 0
      %s317 = sadd.s32 %s316, 1
      %s318 = scalar_select %p315, %s316, %s317
      %p321 = pneg %p315
      %p322 = scmp.eq.s32.totalorder %s26, 1
      %p323 = por %p321, %p322
      %p324 = scmp.ne.s32.totalorder %s316, %s319
      %p325 = scmp.eq.s32.totalorder %s26, 0
      %p326 = por %p324, %p325
      %p327 = scmp.ne.s32.totalorder %s316, %s319
      %p328 = scmp.eq.s32.totalorder %s31, 1
      %p329 = por %p327, %p328
      %p330 = scmp.ne.s32.totalorder %s319, %s320
      %p331 = scmp.eq.s32.totalorder %s31, 0
      %p332 = por %p330, %p331
      %p333 = scmp.ne.s32.totalorder %s319, %s320
      %p334 = scmp.eq.s32.totalorder %s32, 1
      %p335 = por %p333, %p334
      %p337 = scmp.ne.s32.totalorder %s320, %s336
      %p338 = scmp.eq.s32.totalorder %s32, 0
      %p339 = por %p337, %p338
      %s340 = ssub.s32 %s33, %s45
      %s341 = ssub.s32 %s34, %s41
      %s342 = sor.u32 %s340, %s341
      %p343 = scmp.eq.s32.totalorder %s342, 0
      %s345 = sadd.s32 %s344, 1
      %s346 = scalar_select %p343, %s344, %s345
      %p349 = pneg %p343
      %p350 = scmp.eq.s32.totalorder %s26, 1
      %p351 = por %p349, %p350
      %p352 = scmp.ne.s32.totalorder %s344, %s347
      %p353 = scmp.eq.s32.totalorder %s26, 0
      %p354 = por %p352, %p353
      %p355 = scmp.ne.s32.totalorder %s344, %s347
      %p356 = scmp.eq.s32.totalorder %s31, 1
      %p357 = por %p355, %p356
      %p358 = scmp.ne.s32.totalorder %s347, %s348
      %p359 = scmp.eq.s32.totalorder %s31, 0
      %p360 = por %p358, %p359
      %p361 = scmp.ne.s32.totalorder %s347, %s348
      %p362 = scmp.eq.s32.totalorder %s32, 1
      %p363 = por %p361, %p362
      %p365 = scmp.ne.s32.totalorder %s348, %s364
      %p366 = scmp.eq.s32.totalorder %s32, 0
      %p367 = por %p365, %p366
      %p368 = scmp.le.s32.totalorder 1, %s26
      %p369 = scmp.lt.s32.totalorder %s26, 3
      %p370 = pnand %p368, %p369
      %p371 = pneg %p370
      // Predicated region
      $region9: #{tpu_custom_call.1} parent=5 // pred_check
        _
      $region10: #{tpu_custom_call.1} parent=5 // pred_check_branch
        %373 = sbr.rel (%p370) target = $region12
      $region11: #{tpu_custom_call.1} parent=5 // pred_region
        %s374 = ssub.s32 %s26, 1
        // Predicated region
        $region13: #{tpu_custom_call.1} parent=11 // pred_check
          %p375 = pneg %p115
        $region14: #{tpu_custom_call.1} parent=11 // pred_check_branch
          %377 = sbr.rel (%p375) target = $region16
        $region15: #{tpu_custom_call.1} parent=11 // pred_region
          _
        $region16: #{tpu_custom_call.1} parent=11 // pred_fallthru
          _
        // Predicated region
        $region17: #{tpu_custom_call.1} parent=11 // pred_check
          %p378 = pneg %p136
        $region18: #{tpu_custom_call.1} parent=11 // pred_check_branch
          %380 = sbr.rel (%p378) target = $region20
        $region19: #{tpu_custom_call.1} parent=11 // pred_region
          _
        $region20: #{tpu_custom_call.1} parent=11 // pred_fallthru
          _
        // Predicated region
        $region21: #{tpu_custom_call.1} parent=11 // pred_check
          %p381 = pneg %p157
        $region22: #{tpu_custom_call.1} parent=11 // pred_check_branch
          %383 = sbr.rel (%p381) target = $region24
        $region23: #{tpu_custom_call.1} parent=11 // pred_region
          _
        $region24: #{tpu_custom_call.1} parent=11 // pred_fallthru
          _
        // Predicated region
        $region25: #{tpu_custom_call.1} parent=11 // pred_check
          %p384 = pneg %p178
        $region26: #{tpu_custom_call.1} parent=11 // pred_check_branch
          %386 = sbr.rel (%p384) target = $region28
        $region27: #{tpu_custom_call.1} parent=11 // pred_region
          _
        $region28: #{tpu_custom_call.1} parent=11 // pred_fallthru
          _
        // Predicated region
        $region29: #{tpu_custom_call.1} parent=11 // pred_check
          %p387 = pneg %p199
        $region30: #{tpu_custom_call.1} parent=11 // pred_check_branch
          %389 = sbr.rel (%p387) target = $region32
        $region31: #{tpu_custom_call.1} parent=11 // pred_region
          _
        $region32: #{tpu_custom_call.1} parent=11 // pred_fallthru
          _
        // Predicated region
        $region33: #{tpu_custom_call.1} parent=11 // pred_check
          %p390 = pneg %p220
        $region34: #{tpu_custom_call.1} parent=11 // pred_check_branch
          %392 = sbr.rel (%p390) target = $region36
        $region35: #{tpu_custom_call.1} parent=11 // pred_region
          _
        $region36: #{tpu_custom_call.1} parent=11 // pred_fallthru
          _
        // Predicated region
        $region37: #{tpu_custom_call.1} parent=11 // pred_check
          %p393 = pneg %p241
        $region38: #{tpu_custom_call.1} parent=11 // pred_check_branch
          %395 = sbr.rel (%p393) target = $region40
        $region39: #{tpu_custom_call.1} parent=11 // pred_region
          _
        $region40: #{tpu_custom_call.1} parent=11 // pred_fallthru
          _
        // Predicated region
        $region41: #{tpu_custom_call.1} parent=11 // pred_check
          %p396 = pneg %p262
        $region42: #{tpu_custom_call.1} parent=11 // pred_check_branch
          %398 = sbr.rel (%p396) target = $region44
        $region43: #{tpu_custom_call.1} parent=11 // pred_region
          _
        $region44: #{tpu_custom_call.1} parent=11 // pred_fallthru
          _
        // Predicated region
        $region45: #{tpu_custom_call.1} parent=11 // pred_check
          %p399 = pneg %p283
        $region46: #{tpu_custom_call.1} parent=11 // pred_check_branch
          %401 = sbr.rel (%p399) target = $region48
        $region47: #{tpu_custom_call.1} parent=11 // pred_region
          _
        $region48: #{tpu_custom_call.1} parent=11 // pred_fallthru
          _
        // Predicated region
        $region49: #{tpu_custom_call.1} parent=11 // pred_check
          %p402 = pneg %p304
        $region50: #{tpu_custom_call.1} parent=11 // pred_check_branch
          %404 = sbr.rel (%p402) target = $region52
        $region51: #{tpu_custom_call.1} parent=11 // pred_region
          _
        $region52: #{tpu_custom_call.1} parent=11 // pred_fallthru
          _
      $region12: #{tpu_custom_call.1} parent=5 // pred_fallthru
        _
      %p405 = scmp.lt.s32.totalorder %s26, 2
      // Predicated region
      $region53: #{tpu_custom_call.1} parent=5 // pred_check
        %p406 = pneg %p405
      $region54: #{tpu_custom_call.1} parent=5 // pred_check_branch
        %408 = sbr.rel (%p406) target = $region56
      $region55: #{tpu_custom_call.1} parent=5 // pred_region
        // Predicated region
        $region57: #{tpu_custom_call.1} parent=55 // pred_check
          %p409 = pneg %p60
        $region58: #{tpu_custom_call.1} parent=55 // pred_check_branch
          %411 = sbr.rel (%p409) target = $region60
        $region59: #{tpu_custom_call.1} parent=55 // pred_region
          %p412 = scmp.lt.s32.totalorder %s33, 1
          %s413 = scalar_select %p412, %s33, 1
          %p414 = scmp.lt.s32.totalorder %s34, 0
          %s415 = scalar_select %p414, %s34, 0
          %s416 = smul.addr %s415, 3
          %s417 = smul.addr %s413, 3
          %s418 = sadd.s32 %s416, %s417
          %s419 = smul.addr %s418, 2
          %s420 = scalar_lea.vmem %s0, %s419
        $region60: #{tpu_custom_call.1} parent=55 // pred_fallthru
          _
        // Predicated region
        $region61: #{tpu_custom_call.1} parent=55 // pred_check
          %p421 = pneg %p88
        $region62: #{tpu_custom_call.1} parent=55 // pred_check_branch
          %423 = sbr.rel (%p421) target = $region64
        $region63: #{tpu_custom_call.1} parent=55 // pred_region
          %p424 = scmp.lt.s32.totalorder %s33, 1
          %s425 = scalar_select %p424, %s33, 1
          %p426 = scmp.lt.s32.totalorder %s34, 0
          %s427 = scalar_select %p426, %s34, 0
          %s428 = sadd.s32 %s427, %s425
          %s429 = smul.addr %s428, 2
          %s430 = scalar_lea.vmem %s1, %s429
        $region64: #{tpu_custom_call.1} parent=55 // pred_fallthru
          _
      $region56: #{tpu_custom_call.1} parent=5 // pred_fallthru
        _
      %p431 = scmp.le.s32.totalorder 1, %s26
      %p432 = scmp.lt.s32.totalorder %s26, 3
      %p433 = pnand %p431, %p432
      %p434 = pneg %p433
      // Predicated region
      $region65: #{tpu_custom_call.1} parent=5 // pred_check
        _
      $region66: #{tpu_custom_call.1} parent=5 // pred_check_branch
        %436 = sbr.rel (%p433) target = $region68
      $region67: #{tpu_custom_call.1} parent=5 // pred_region
        %s437 = ssub.s32 %s26, 1
        %p438 = scmp.lt.s32.totalorder %s35, 1
        %s439 = scalar_select %p438, %s35, 1
        %p440 = scmp.lt.s32.totalorder %s36, 0
        %s441 = scalar_select %p440, %s36, 0
        %s442 = smul.addr %s441, 3
        %s443 = smul.addr %s439, 3
        %s444 = sadd.s32 %s442, %s443
        %s445 = smul.addr %s444, 2
        %s446 = scalar_lea.vmem %s0, %s445
        %p447 = pneg %p66
        %p448 = pneg %p63
        %p449 = scmp.lt.s32.totalorder %s35, 1
        %s450 = scalar_select %p449, %s35, 1
        %p451 = scmp.lt.s32.totalorder %s36, 0
        %s452 = scalar_select %p451, %s36, 0
        %s453 = sadd.s32 %s452, %s450
        %s454 = smul.addr %s453, 2
        %s455 = scalar_lea.vmem %s1, %s454
        %p456 = pneg %p94
        %p457 = pneg %p91
        %p458 = pneg %p115
        %p459 = pneg %p112
        %p460 = pneg %p136
        %p461 = pneg %p133
        %p462 = pneg %p157
        %p463 = pneg %p154
        %p464 = pneg %p178
        %p465 = pneg %p175
        %p466 = pneg %p199
        %p467 = pneg %p196
        %p468 = pneg %p220
        %p469 = pneg %p217
        %p470 = pneg %p241
        %p471 = pneg %p238
        %p472 = pneg %p262
        %p473 = pneg %p259
        %p474 = pneg %p283
        %p475 = pneg %p280
        %p476 = pneg %p304
        %p477 = pneg %p301
        %p478 = pneg %p332
        %p479 = pneg %p329
        %s480 = sand.u32 %s319, 1
        %s481 = scalar_lea.sflag [#allocation3], %s480
        %s482 = sand.u32 %s319, 1
        %s483 = smul.addr %s482, 4
        %s484 = scalar_lea.vmem [#allocation2], %s483
        %p485 = pneg %p360
        %p486 = pneg %p357
        %s487 = sand.u32 %s347, 1
        %s488 = scalar_lea.sflag [#allocation5], %s487
        %s489 = sand.u32 %s347, 1
        %s490 = smul.addr %s489, 8
        %s491 = scalar_lea.vmem [#allocation4], %s490
        %p492 = scmp.lt.s32.totalorder %s35, 1
        %s493 = scalar_select %p492, %s35, 1
        %p494 = scmp.lt.s32.totalorder %s36, 0
        %s495 = scalar_select %p494, %s36, 0
        %s496 = smul.addr %s495, 3
        %s497 = smul.addr %s493, 3
        %s498 = sadd.s32 %s496, %s497
        %s499 = smul.addr %s498, 2
        %s500 = scalar_lea.vmem %s0, %s499
        %p501 = scmp.lt.s32.totalorder %s35, 1
        %s502 = scalar_select %p501, %s35, 1
        %p503 = scmp.lt.s32.totalorder %s36, 0
        %s504 = scalar_select %p503, %s36, 0
        %s505 = sadd.s32 %s504, %s502
        %s506 = smul.addr %s505, 2
        %s507 = scalar_lea.vmem %s1, %s506
        %v508 = vld [vmem:[%s500] sm:$0x3f]
        %v509 = vld [vmem:[%s507] sm:$0x3]
        %v510 = vlaneseq
        %v511 = vand.u32 %v510, 127
        %v512 = vadd.s32 %v511, 128
        %v513 = vadd.s32 %v511, 256
        %s514 = smul.u32 %s36, 128
        %s515 = ssub.s32 %s514, 128
        %v516 = vstv %s515
        %v517 = vadd.s32 %v516, %v511
        %v518 = vadd.s32 %v516, %v512
        %v519 = vadd.s32 %v516, %v513
        %vm520 = vcmp.ge.s32.totalorder %v517, 0
        %vm521 = vcmp.ge.s32.totalorder %v518, 0
        %vm522 = vcmp.ge.s32.totalorder %v519, 0
        %vm523 = vcmp.lt.s32.totalorder %v517, 16
        %vm524 = vcmp.lt.s32.totalorder %v518, 16
        %vm525 = vcmp.lt.s32.totalorder %v519, 16
        %vm526 = vmand %vm520, %vm523
        %vm527 = vmand %vm521, %vm524
        %vm528 = vmand %vm522, %vm525
        %v529 = vsel %vm526, 1, 0
        %v530 = vsel %vm527, 1, 0
        %v531 = vsel %vm528, 1, 0
        %v532 = vcvt.s32.f32 %v529
        %v533 = vcvt.s32.f32 %v530
        %v534 = vcvt.s32.f32 %v531
        %v535 = vld [vmem:[%s2] sm:$0xff]
        %v536 = vld [vmem:[%s2 + $0x8] sm:$0xff]
        %v537 = vld [vmem:[%s2 + $0x10] sm:$0xff]
        %v538 = vld [vmem:[%s2 + $0x18] sm:$0xff]
        %v539 = vld [vmem:[%s3] sm:$0xff]
        %v540 = vld [vmem:[%s3 + $0x8] sm:$0xff]
        %v541 = vld [vmem:[%s3 + $0x10] sm:$0xff]
        %v542 = vld [vmem:[%s3 + $0x18] sm:$0xff]
        %544 = vset.pattern.permute.xlu0 0
        %545 = vperm.xlu0 %544, %v539
        %v546 = vpop.permute.xlu0 %545
        %549 = vset.pattern.permute.xlu0 0
        %550 = vperm.xlu0 %549, %v540
        %v551 = vpop.permute.xlu0 %550
        %554 = vset.pattern.permute.xlu0 0
        %555 = vperm.xlu0 %554, %v541
        %v556 = vpop.permute.xlu0 %555
        %559 = vset.pattern.permute.xlu0 0
        %560 = vperm.xlu0 %559, %v542
        %v561 = vpop.permute.xlu0 %560
        %v564 = vcombine.high %v508, %v508
        %v566 = vunpack.c.l.s4 1983009808
        %v567 = vunpack.c.0.s8 %v566
        %v568 = vlaneseq
        %v569 = vshrl.u32 %v568, 7
        %v570 = vsub.s32 %v567, %v569
        %v571 = vrot.slane %v508, %v570
        %v573 = vunpack.c.l.s4 1983009808
        %v574 = vunpack.c.0.s8 %v573
        %v575 = vlaneseq
        %v576 = vshrl.u32 %v575, 7
        %v577 = vsub.s32 %v574, %v576
        %v578 = vrot.slane %v564, %v577
        %v579 = vcombine.high %v571, %v571
        %vm580 = vcmask 15360
        %v582 = vsel %vm580, %v535, 0
        %v585 = vsel %vm580, %v536, 0
        %v588 = vsel %vm580, %v537, 0
        %v591 = vsel %vm580, %v538, 0
        %vm593 = vcmask 1041408
        %v594 = vsel %vm593, %v571, 0
        %v596 = vsel %vm593, %v579, 0
        %v598 = vsel %vm593, %v578, 0
        %600 = vmatprep.subr.mxu0 %v596
        %601 = vmatpush1.msra.mxu0 %v594
        %602 = vmatprep.subr.mxu0 0.0
        %603 = vmatpush1.msra.mxu0 0.0
        %604 = vmatprep.subr.mxu0 0.0
        %605 = vmatpush1.msra.mxu0 0.0
        %606 = vmatprep.subr.mxu0 0.0
        %607 = vmatpush1.msra.mxu0 0.0
        %608 = vmatprep.subr.mxu0 0.0
        %609 = vmatpush1.msra.mxu0 0.0
        %610 = vmatprep.subr.mxu0 0.0
        %611 = vmatpush1.msra.mxu0 0.0
        %612 = vmatprep.subr.mxu0 0.0
        %613 = vmatpush1.msra.mxu0 0.0
        %614 = vmatprep.subr.mxu0 0.0
        %615 = vmatpush1.msra.mxu0 0.0
        %616 = vmatprep.subr.mxu0 0.0
        %617 = vmatpush1.msra.mxu0 0.0
        %618 = vmatprep.subr.mxu0 0.0
        %619 = vmatpush1.msra.mxu0 0.0
        %620 = vmatprep.subr.mxu0 0.0
        %621 = vmatpush1.msra.mxu0 0.0
        %622 = vmatprep.subr.mxu0 0.0
        %623 = vmatpush1.msra.mxu0 0.0
        %624 = vmatprep.subr.mxu0 0.0
        %625 = vmatpush1.msra.mxu0 0.0
        %626 = vmatprep.subr.mxu0 0.0
        %627 = vmatpush1.msra.mxu0 0.0
        %628 = vmatprep.subr.mxu0 0.0
        %629 = vmatpush1.msra.mxu0 0.0
        %630 = vmatprep.subr.mxu0 0.0
        %631 = vmatpush1.msra.mxu0 0.0
        %632 = vmatprep.subr.mxu0 0.0
        %633 = vmatpush1.msra.mxu0 0.0
        %634 = vmatprep.subr.mxu0 0.0
        %635 = vmatpush1.msra.mxu0 0.0
        %636 = vmatprep.subr.mxu0 0.0
        %637 = vmatpush1.msra.mxu0 0.0
        %638 = vmatprep.subr.mxu0 0.0
        %639 = vmatpush1.msra.mxu0 0.0
        %640 = vmatprep.subr.mxu0 0.0
        %641 = vmatpush1.msra.mxu0 0.0
        %642 = vmatprep.subr.mxu0 0.0
        %643 = vmatpush1.msra.mxu0 0.0
        %644 = vmatprep.subr.mxu0 0.0
        %645 = vmatpush1.msra.mxu0 0.0
        %646 = vmatprep.subr.mxu0 0.0
        %647 = vmatpush1.msra.mxu0 0.0
        %648 = vmatprep.subr.mxu0 0.0
        %649 = vmatpush1.msra.mxu0 0.0
        %650 = vmatprep.subr.mxu0 0.0
        %651 = vmatpush1.msra.mxu0 0.0
        %652 = vmatprep.subr.mxu0 0.0
        %653 = vmatpush1.msra.mxu0 0.0
        %654 = vmatprep.subr.mxu0 0.0
        %655 = vmatpush1.msra.mxu0 0.0
        %656 = vmatprep.subr.mxu0 0.0
        %657 = vmatpush1.msra.mxu0 0.0
        %658 = vmatprep.subr.mxu0 0.0
        %659 = vmatpush1.msra.mxu0 0.0
        %660 = vmatprep.subr.mxu0 0.0
        %661 = vmatpush1.msra.mxu0 0.0
        %662 = vmatprep.subr.mxu0 0.0
        %663 = vmatpush1.msra.mxu0 0.0
        %664 = vmatprep.mubr.f32.mxu0 0.0
        %665 = vmatmul.mubr.f32.gmra.mrb[0].mxu0 %v582
        %v666 = vpop.f32.mrb[0].mxu0
        %v667 = vadd.f32 %v546, %v666
        %v668 = vpop.f32.mrb[0].mxu0
        %v669 = vadd.f32 %v546, %v668
        %670 = vmatprep.mubr.f32.mxu0 0.0
        %671 = vmatmul.mubr.f32.gmra.mrb[0].mxu0 %v585
        %v672 = vpop.f32.mrb[0].mxu0
        %v673 = vadd.f32 %v551, %v672
        %v674 = vpop.f32.mrb[0].mxu0
        %v675 = vadd.f32 %v551, %v674
        %676 = vmatprep.mubr.f32.mxu0 0.0
        %677 = vmatmul.mubr.f32.gmra.mrb[0].mxu0 %v588
        %v678 = vpop.f32.mrb[0].mxu0
        %v679 = vadd.f32 %v556, %v678
        %v680 = vpop.f32.mrb[0].mxu0
        %v681 = vadd.f32 %v556, %v680
        %682 = vmatprep.mubr.f32.mxu0 0.0
        %683 = vmatmul.mubr.f32.gmra.mrb[0].mxu0 %v591
        %v684 = vpop.f32.mrb[0].mxu0
        %v685 = vadd.f32 %v561, %v684
        %v686 = vpop.f32.mrb[0].mxu0
        %v687 = vadd.f32 %v561, %v686
        %688 = vdwg.mxu0
        %689 = vmatprep.subr.mxu0 0.0
        %690 = vmatpush1.msra.mxu0 %v598
        %691 = vmatprep.subr.mxu0 0.0
        %692 = vmatpush1.msra.mxu0 0.0
        %693 = vmatprep.subr.mxu0 0.0
        %694 = vmatpush1.msra.mxu0 0.0
        %695 = vmatprep.subr.mxu0 0.0
        %696 = vmatpush1.msra.mxu0 0.0
        %697 = vmatprep.subr.mxu0 0.0
        %698 = vmatpush1.msra.mxu0 0.0
        %699 = vmatprep.subr.mxu0 0.0
        %700 = vmatpush1.msra.mxu0 0.0
        %701 = vmatprep.subr.mxu0 0.0
        %702 = vmatpush1.msra.mxu0 0.0
        %703 = vmatprep.subr.mxu0 0.0
        %704 = vmatpush1.msra.mxu0 0.0
        %705 = vmatprep.subr.mxu0 0.0
        %706 = vmatpush1.msra.mxu0 0.0
        %707 = vmatprep.subr.mxu0 0.0
        %708 = vmatpush1.msra.mxu0 0.0
        %709 = vmatprep.subr.mxu0 0.0
        %710 = vmatpush1.msra.mxu0 0.0
        %711 = vmatprep.subr.mxu0 0.0
        %712 = vmatpush1.msra.mxu0 0.0
        %713 = vmatprep.subr.mxu0 0.0
        %714 = vmatpush1.msra.mxu0 0.0
        %715 = vmatprep.subr.mxu0 0.0
        %716 = vmatpush1.msra.mxu0 0.0
        %717 = vmatprep.subr.mxu0 0.0
        %718 = vmatpush1.msra.mxu0 0.0
        %719 = vmatprep.subr.mxu0 0.0
        %720 = vmatpush1.msra.mxu0 0.0
        %721 = vmatprep.subr.mxu0 0.0
        %722 = vmatpush1.msra.mxu0 0.0
        %723 = vmatprep.subr.mxu0 0.0
        %724 = vmatpush1.msra.mxu0 0.0
        %725 = vmatprep.subr.mxu0 0.0
        %726 = vmatpush1.msra.mxu0 0.0
        %727 = vmatprep.subr.mxu0 0.0
        %728 = vmatpush1.msra.mxu0 0.0
        %729 = vmatprep.subr.mxu0 0.0
        %730 = vmatpush1.msra.mxu0 0.0
        %731 = vmatprep.subr.mxu0 0.0
        %732 = vmatpush1.msra.mxu0 0.0
        %733 = vmatprep.subr.mxu0 0.0
        %734 = vmatpush1.msra.mxu0 0.0
        %735 = vmatprep.subr.mxu0 0.0
        %736 = vmatpush1.msra.mxu0 0.0
        %737 = vmatprep.subr.mxu0 0.0
        %738 = vmatpush1.msra.mxu0 0.0
        %739 = vmatprep.subr.mxu0 0.0
        %740 = vmatpush1.msra.mxu0 0.0
        %741 = vmatprep.subr.mxu0 0.0
        %742 = vmatpush1.msra.mxu0 0.0
        %743 = vmatprep.subr.mxu0 0.0
        %744 = vmatpush1.msra.mxu0 0.0
        %745 = vmatprep.subr.mxu0 0.0
        %746 = vmatpush1.msra.mxu0 0.0
        %747 = vmatprep.subr.mxu0 0.0
        %748 = vmatpush1.msra.mxu0 0.0
        %749 = vmatprep.subr.mxu0 0.0
        %750 = vmatpush1.msra.mxu0 0.0
        %751 = vmatprep.subr.mxu0 0.0
        %752 = vmatpush1.msra.mxu0 0.0
        %753 = vmatprep.mubr.f32.mxu0 0.0
        %754 = vmatmul.mubr.f32.gmra.mrb[0].mxu0 %v582
        %v755 = vpop.f32.mrb[0].mxu0
        %v756 = vadd.f32 %v546, %v755
        %v757 = vpop.f32.mrb[0].mxu0
        %758 = vmatprep.mubr.f32.mxu0 0.0
        %759 = vmatmul.mubr.f32.gmra.mrb[0].mxu0 %v585
        %v760 = vpop.f32.mrb[0].mxu0
        %v761 = vadd.f32 %v551, %v760
        %v762 = vpop.f32.mrb[0].mxu0
        %763 = vmatprep.mubr.f32.mxu0 0.0
        %764 = vmatmul.mubr.f32.gmra.mrb[0].mxu0 %v588
        %v765 = vpop.f32.mrb[0].mxu0
        %v766 = vadd.f32 %v556, %v765
        %v767 = vpop.f32.mrb[0].mxu0
        %768 = vmatprep.mubr.f32.mxu0 0.0
        %769 = vmatmul.mubr.f32.gmra.mrb[0].mxu0 %v591
        %v770 = vpop.f32.mrb[0].mxu0
        %v771 = vadd.f32 %v561, %v770
        %v772 = vpop.f32.mrb[0].mxu0
        %773 = vdwg.mxu0
        %v774 = vmul.f32 %v667, %v532
        %v775 = vmul.f32 %v669, %v533
        %v776 = vmul.f32 %v756, %v534
        %v777 = vmul.f32 %v673, %v532
        %v778 = vmul.f32 %v675, %v533
        %v779 = vmul.f32 %v761, %v534
        %v780 = vmul.f32 %v679, %v532
        %v781 = vmul.f32 %v681, %v533
        %v782 = vmul.f32 %v766, %v534
        %v783 = vmul.f32 %v685, %v532
        %v784 = vmul.f32 %v687, %v533
        %v785 = vmul.f32 %v771, %v534
        %786 = vrot.lane.b32.xlu0 %v774, 1
        %v787 = vpop.permute.xlu0 %786
        %788 = vrot.lane.b32.xlu0 %v777, 1
        %v789 = vpop.permute.xlu0 %788
        %790 = vrot.lane.b32.xlu0 %v780, 1
        %v791 = vpop.permute.xlu0 %790
        %792 = vrot.lane.b32.xlu0 %v783, 1
        %v793 = vpop.permute.xlu0 %792
        %794 = vrot.lane.b32.xlu0 %v775, 1
        %v795 = vpop.permute.xlu0 %794
        %796 = vrot.lane.b32.xlu0 %v778, 1
        %v797 = vpop.permute.xlu0 %796
        %798 = vrot.lane.b32.xlu0 %v781, 1
        %v799 = vpop.permute.xlu0 %798
        %800 = vrot.lane.b32.xlu0 %v784, 1
        %v801 = vpop.permute.xlu0 %800
        %802 = vrot.lane.b32.xlu0 %v776, 1
        %v803 = vpop.permute.xlu0 %802
        %804 = vrot.lane.b32.xlu0 %v779, 1
        %v805 = vpop.permute.xlu0 %804
        %806 = vrot.lane.b32.xlu0 %v782, 1
        %v807 = vpop.permute.xlu0 %806
        %808 = vrot.lane.b32.xlu0 %v785, 1
        %v809 = vpop.permute.xlu0 %808
        %vm810 = vcmp.lt.s32.totalorder %v511, 1
        %v811 = vsel %vm810, %v795, %v803
        %v812 = vsel %vm810, %v797, %v805
        %v813 = vsel %vm810, %v799, %v807
        %v814 = vsel %vm810, %v801, %v809
        %v815 = vsel %vm810, %v787, %v795
        %v816 = vsel %vm810, %v789, %v797
        %v817 = vsel %vm810, %v791, %v799
        %v818 = vsel %vm810, %v793, %v801
        %v819 = vsel %vm810, %v803, %v787
        %v820 = vsel %vm810, %v805, %v789
        %v821 = vsel %vm810, %v807, %v791
        %v822 = vsel %vm810, %v809, %v793
        %v823 = vld [vmem:[%s4] sm:$0xff]
        %v824 = vld [vmem:[%s4 + $0x8] sm:$0xff]
        %v825 = vld [vmem:[%s4 + $0x10] sm:$0xff]
        %v826 = vld [vmem:[%s4 + $0x18] sm:$0xff]
        %v827 = vld [vmem:[%s4 + $0x20] sm:$0xff]
        %v828 = vld [vmem:[%s4 + $0x28] sm:$0xff]
        %v829 = vld [vmem:[%s4 + $0x30] sm:$0xff]
        %v830 = vld [vmem:[%s4 + $0x38] sm:$0xff]
        %s831 = scalar_lea.vmem %s4, 64
        %v832 = vld [vmem:[%s831] sm:$0xff]
        %v833 = vld [vmem:[%s831 + $0x8] sm:$0xff]
        %v834 = vld [vmem:[%s831 + $0x10] sm:$0xff]
        %v835 = vld [vmem:[%s831 + $0x18] sm:$0xff]
        %v836 = vld [vmem:[%s831 + $0x20] sm:$0xff]
        %v837 = vld [vmem:[%s831 + $0x28] sm:$0xff]
        %v838 = vld [vmem:[%s831 + $0x30] sm:$0xff]
        %v839 = vld [vmem:[%s831 + $0x38] sm:$0xff]
        %vm840 = vcmask 261120
        %v842 = vsel %vm840, %v832, 0
        %v845 = vsel %vm840, %v833, 0
        %v848 = vsel %vm840, %v834, 0
        %v851 = vsel %vm840, %v835, 0
        %v854 = vsel %vm840, %v836, 0
        %v857 = vsel %vm840, %v837, 0
        %v860 = vsel %vm840, %v838, 0
        %v863 = vsel %vm840, %v839, 0
        %865 = vmatprep.subr.mxu0 %v775
        %866 = vmatpush1.msra.mxu0 %v774
        %867 = vmatprep.subr.mxu0 %v778
        %868 = vmatpush1.msra.mxu0 %v777
        %869 = vmatprep.subr.mxu0 %v781
        %870 = vmatpush1.msra.mxu0 %v780
        %871 = vmatprep.subr.mxu0 %v784
        %872 = vmatpush1.msra.mxu0 %v783
        %873 = vmatprep.subr.mxu0 0.0
        %874 = vmatpush1.msra.mxu0 0.0
        %875 = vmatprep.subr.mxu0 0.0
        %876 = vmatpush1.msra.mxu0 0.0
        %877 = vmatprep.subr.mxu0 0.0
        %878 = vmatpush1.msra.mxu0 0.0
        %879 = vmatprep.subr.mxu0 0.0
        %880 = vmatpush1.msra.mxu0 0.0
        %881 = vmatprep.subr.mxu0 0.0
        %882 = vmatpush1.msra.mxu0 0.0
        %883 = vmatprep.subr.mxu0 0.0
        %884 = vmatpush1.msra.mxu0 0.0
        %885 = vmatprep.subr.mxu0 0.0
        %886 = vmatpush1.msra.mxu0 0.0
        %887 = vmatprep.subr.mxu0 0.0
        %888 = vmatpush1.msra.mxu0 0.0
        %889 = vmatprep.subr.mxu0 0.0
        %890 = vmatpush1.msra.mxu0 0.0
        %891 = vmatprep.subr.mxu0 0.0
        %892 = vmatpush1.msra.mxu0 0.0
        %893 = vmatprep.subr.mxu0 0.0
        %894 = vmatpush1.msra.mxu0 0.0
        %895 = vmatprep.subr.mxu0 0.0
        %896 = vmatpush1.msra.mxu0 0.0
        %897 = vmatprep.subr.mxu0 0.0
        %898 = vmatpush1.msra.mxu0 0.0
        %899 = vmatprep.subr.mxu0 0.0
        %900 = vmatpush1.msra.mxu0 0.0
        %901 = vmatprep.subr.mxu0 0.0
        %902 = vmatpush1.msra.mxu0 0.0
        %903 = vmatprep.subr.mxu0 0.0
        %904 = vmatpush1.msra.mxu0 0.0
        %905 = vmatprep.subr.mxu0 0.0
        %906 = vmatpush1.msra.mxu0 0.0
        %907 = vmatprep.subr.mxu0 0.0
        %908 = vmatpush1.msra.mxu0 0.0
        %909 = vmatprep.subr.mxu0 0.0
        %910 = vmatpush1.msra.mxu0 0.0
        %911 = vmatprep.subr.mxu0 0.0
        %912 = vmatpush1.msra.mxu0 0.0
        %913 = vmatprep.subr.mxu0 0.0
        %914 = vmatpush1.msra.mxu0 0.0
        %915 = vmatprep.subr.mxu0 0.0
        %916 = vmatpush1.msra.mxu0 0.0
        %917 = vmatprep.subr.mxu0 0.0
        %918 = vmatpush1.msra.mxu0 0.0
        %919 = vmatprep.subr.mxu0 0.0
        %920 = vmatpush1.msra.mxu0 0.0
        %921 = vmatprep.subr.mxu0 0.0
        %922 = vmatpush1.msra.mxu0 0.0
        %923 = vmatprep.subr.mxu0 0.0
        %924 = vmatpush1.msra.mxu0 0.0
        %925 = vmatprep.subr.mxu0 0.0
        %926 = vmatpush1.msra.mxu0 0.0
        %927 = vmatprep.subr.mxu0 0.0
        %928 = vmatpush1.msra.mxu0 0.0
        %929 = vmatprep.mubr.f32.mxu0 0.0
        %930 = vmatmul.mubr.f32.gmra.mrb[0].mxu0 %v842
        %v931 = vpop.f32.mrb[0].mxu0
        %v932 = vadd.f32 0.0, %v931
        %v933 = vpop.f32.mrb[0].mxu0
        %v934 = vadd.f32 0.0, %v933
        %935 = vmatprep.mubr.f32.mxu0 0.0
        %936 = vmatmul.mubr.f32.gmra.mrb[0].mxu0 %v845
        %v937 = vpop.f32.mrb[0].mxu0
        %v938 = vadd.f32 0.0, %v937
        %v939 = vpop.f32.mrb[0].mxu0
        %v940 = vadd.f32 0.0, %v939
        %941 = vmatprep.mubr.f32.mxu0 0.0
        %942 = vmatmul.mubr.f32.gmra.mrb[0].mxu0 %v848
        %v943 = vpop.f32.mrb[0].mxu0
        %v944 = vadd.f32 0.0, %v943
        %v945 = vpop.f32.mrb[0].mxu0
        %v946 = vadd.f32 0.0, %v945
        %947 = vmatprep.mubr.f32.mxu0 0.0
        %948 = vmatmul.mubr.f32.gmra.mrb[0].mxu0 %v851
        %v949 = vpop.f32.mrb[0].mxu0
        %v950 = vadd.f32 0.0, %v949
        %v951 = vpop.f32.mrb[0].mxu0
        %v952 = vadd.f32 0.0, %v951
        %953 = vmatprep.mubr.f32.mxu0 0.0
        %954 = vmatmul.mubr.f32.gmra.mrb[0].mxu0 %v854
        %v955 = vpop.f32.mrb[0].mxu0
        %v956 = vadd.f32 0.0, %v955
        %v957 = vpop.f32.mrb[0].mxu0
        %v958 = vadd.f32 0.0, %v957
        %959 = vmatprep.mubr.f32.mxu0 0.0
        %960 = vmatmul.mubr.f32.gmra.mrb[0].mxu0 %v857
        %v961 = vpop.f32.mrb[0].mxu0
        %v962 = vadd.f32 0.0, %v961
        %v963 = vpop.f32.mrb[0].mxu0
        %v964 = vadd.f32 0.0, %v963
        %965 = vmatprep.mubr.f32.mxu0 0.0
        %966 = vmatmul.mubr.f32.gmra.mrb[0].mxu0 %v860
        %v967 = vpop.f32.mrb[0].mxu0
        %v968 = vadd.f32 0.0, %v967
        %v969 = vpop.f32.mrb[0].mxu0
        %v970 = vadd.f32 0.0, %v969
        %971 = vmatprep.mubr.f32.mxu0 0.0
        %972 = vmatmul.mubr.f32.gmra.mrb[0].mxu0 %v863
        %v973 = vpop.f32.mrb[0].mxu0
        %v974 = vadd.f32 0.0, %v973
        %v975 = vpop.f32.mrb[0].mxu0
        %v976 = vadd.f32 0.0, %v975
        %977 = vdwg.mxu0
        %978 = vmatprep.subr.mxu0 0.0
        %979 = vmatpush1.msra.mxu0 %v776
        %980 = vmatprep.subr.mxu0 0.0
        %981 = vmatpush1.msra.mxu0 %v779
        %982 = vmatprep.subr.mxu0 0.0
        %983 = vmatpush1.msra.mxu0 %v782
        %984 = vmatprep.subr.mxu0 0.0
        %985 = vmatpush1.msra.mxu0 %v785
        %986 = vmatprep.subr.mxu0 0.0
        %987 = vmatpush1.msra.mxu0 0.0
        %988 = vmatprep.subr.mxu0 0.0
        %989 = vmatpush1.msra.mxu0 0.0
        %990 = vmatprep.subr.mxu0 0.0
        %991 = vmatpush1.msra.mxu0 0.0
        %992 = vmatprep.subr.mxu0 0.0
        %993 = vmatpush1.msra.mxu0 0.0
        %994 = vmatprep.subr.mxu0 0.0
        %995 = vmatpush1.msra.mxu0 0.0
        %996 = vmatprep.subr.mxu0 0.0
        %997 = vmatpush1.msra.mxu0 0.0
        %998 = vmatprep.subr.mxu0 0.0
        %999 = vmatpush1.msra.mxu0 0.0
        %1000 = vmatprep.subr.mxu0 0.0
        %1001 = vmatpush1.msra.mxu0 0.0
        %1002 = vmatprep.subr.mxu0 0.0
        %1003 = vmatpush1.msra.mxu0 0.0
        %1004 = vmatprep.subr.mxu0 0.0
        %1005 = vmatpush1.msra.mxu0 0.0
        %1006 = vmatprep.subr.mxu0 0.0
        %1007 = vmatpush1.msra.mxu0 0.0
        %1008 = vmatprep.subr.mxu0 0.0
        %1009 = vmatpush1.msra.mxu0 0.0
        %1010 = vmatprep.subr.mxu0 0.0
        %1011 = vmatpush1.msra.mxu0 0.0
        %1012 = vmatprep.subr.mxu0 0.0
        %1013 = vmatpush1.msra.mxu0 0.0
        %1014 = vmatprep.subr.mxu0 0.0
        %1015 = vmatpush1.msra.mxu0 0.0
        %1016 = vmatprep.subr.mxu0 0.0
        %1017 = vmatpush1.msra.mxu0 0.0
        %1018 = vmatprep.subr.mxu0 0.0
        %1019 = vmatpush1.msra.mxu0 0.0
        %1020 = vmatprep.subr.mxu0 0.0
        %1021 = vmatpush1.msra.mxu0 0.0
        %1022 = vmatprep.subr.mxu0 0.0
        %1023 = vmatpush1.msra.mxu0 0.0
        %1024 = vmatprep.subr.mxu0 0.0
        %1025 = vmatpush1.msra.mxu0 0.0
        %1026 = vmatprep.subr.mxu0 0.0
        %1027 = vmatpush1.msra.mxu0 0.0
        %1028 = vmatprep.subr.mxu0 0.0
        %1029 = vmatpush1.msra.mxu0 0.0
        %1030 = vmatprep.subr.mxu0 0.0
        %1031 = vmatpush1.msra.mxu0 0.0
        %1032 = vmatprep.subr.mxu0 0.0
        %1033 = vmatpush1.msra.mxu0 0.0
        %1034 = vmatprep.subr.mxu0 0.0
        %1035 = vmatpush1.msra.mxu0 0.0
        %1036 = vmatprep.subr.mxu0 0.0
        %1037 = vmatpush1.msra.mxu0 0.0
        %1038 = vmatprep.subr.mxu0 0.0
        %1039 = vmatpush1.msra.mxu0 0.0
        %1040 = vmatprep.subr.mxu0 0.0
        %1041 = vmatpush1.msra.mxu0 0.0
        %1042 = vmatprep.mubr.f32.mxu0 0.0
        %1043 = vmatmul.mubr.f32.gmra.mrb[0].mxu0 %v842
        %v1044 = vpop.f32.mrb[0].mxu0
        %v1045 = vadd.f32 0.0, %v1044
        %v1046 = vpop.f32.mrb[0].mxu0
        %1047 = vmatprep.mubr.f32.mxu0 0.0
        %1048 = vmatmul.mubr.f32.gmra.mrb[0].mxu0 %v845
        %v1049 = vpop.f32.mrb[0].mxu0
        %v1050 = vadd.f32 0.0, %v1049
        %v1051 = vpop.f32.mrb[0].mxu0
        %1052 = vmatprep.mubr.f32.mxu0 0.0
        %1053 = vmatmul.mubr.f32.gmra.mrb[0].mxu0 %v848
        %v1054 = vpop.f32.mrb[0].mxu0
        %v1055 = vadd.f32 0.0, %v1054
        %v1056 = vpop.f32.mrb[0].mxu0
        %1057 = vmatprep.mubr.f32.mxu0 0.0
        %1058 = vmatmul.mubr.f32.gmra.mrb[0].mxu0 %v851
        %v1059 = vpop.f32.mrb[0].mxu0
        %v1060 = vadd.f32 0.0, %v1059
        %v1061 = vpop.f32.mrb[0].mxu0
        %1062 = vmatprep.mubr.f32.mxu0 0.0
        %1063 = vmatmul.mubr.f32.gmra.mrb[0].mxu0 %v854
        %v1064 = vpop.f32.mrb[0].mxu0
        %v1065 = vadd.f32 0.0, %v1064
        %v1066 = vpop.f32.mrb[0].mxu0
        %1067 = vmatprep.mubr.f32.mxu0 0.0
        %1068 = vmatmul.mubr.f32.gmra.mrb[0].mxu0 %v857
        %v1069 = vpop.f32.mrb[0].mxu0
        %v1070 = vadd.f32 0.0, %v1069
        %v1071 = vpop.f32.mrb[0].mxu0
        %1072 = vmatprep.mubr.f32.mxu0 0.0
        %1073 = vmatmul.mubr.f32.gmra.mrb[0].mxu0 %v860
        %v1074 = vpop.f32.mrb[0].mxu0
        %v1075 = vadd.f32 0.0, %v1074
        %v1076 = vpop.f32.mrb[0].mxu0
        %1077 = vmatprep.mubr.f32.mxu0 0.0
        %1078 = vmatmul.mubr.f32.gmra.mrb[0].mxu0 %v863
        %v1079 = vpop.f32.mrb[0].mxu0
        %v1080 = vadd.f32 0.0, %v1079
        %v1081 = vpop.f32.mrb[0].mxu0
        %1082 = vdwg.mxu0
        %v1084 = vsel %vm840, %v823, 0
        %v1087 = vsel %vm840, %v824, 0
        %v1090 = vsel %vm840, %v825, 0
        %v1093 = vsel %vm840, %v826, 0
        %v1096 = vsel %vm840, %v827, 0
        %v1099 = vsel %vm840, %v828, 0
        %v1102 = vsel %vm840, %v829, 0
        %v1105 = vsel %vm840, %v830, 0
        %1107 = vmatprep.subr.mxu0 %v815
        %1108 = vmatpush1.msra.mxu0 %v819
        %1109 = vmatprep.subr.mxu0 %v816
        %1110 = vmatpush1.msra.mxu0 %v820
        %1111 = vmatprep.subr.mxu0 %v817
        %1112 = vmatpush1.msra.mxu0 %v821
        %1113 = vmatprep.subr.mxu0 %v818
        %1114 = vmatpush1.msra.mxu0 %v822
        %1115 = vmatprep.subr.mxu0 0.0
        %1116 = vmatpush1.msra.mxu0 0.0
        %1117 = vmatprep.subr.mxu0 0.0
        %1118 = vmatpush1.msra.mxu0 0.0
        %1119 = vmatprep.subr.mxu0 0.0
        %1120 = vmatpush1.msra.mxu0 0.0
        %1121 = vmatprep.subr.mxu0 0.0
        %1122 = vmatpush1.msra.mxu0 0.0
        %1123 = vmatprep.subr.mxu0 0.0
        %1124 = vmatpush1.msra.mxu0 0.0
        %1125 = vmatprep.subr.mxu0 0.0
        %1126 = vmatpush1.msra.mxu0 0.0
        %1127 = vmatprep.subr.mxu0 0.0
        %1128 = vmatpush1.msra.mxu0 0.0
        %1129 = vmatprep.subr.mxu0 0.0
        %1130 = vmatpush1.msra.mxu0 0.0
        %1131 = vmatprep.subr.mxu0 0.0
        %1132 = vmatpush1.msra.mxu0 0.0
        %1133 = vmatprep.subr.mxu0 0.0
        %1134 = vmatpush1.msra.mxu0 0.0
        %1135 = vmatprep.subr.mxu0 0.0
        %1136 = vmatpush1.msra.mxu0 0.0
        %1137 = vmatprep.subr.mxu0 0.0
        %1138 = vmatpush1.msra.mxu0 0.0
        %1139 = vmatprep.subr.mxu0 0.0
        %1140 = vmatpush1.msra.mxu0 0.0
        %1141 = vmatprep.subr.mxu0 0.0
        %1142 = vmatpush1.msra.mxu0 0.0
        %1143 = vmatprep.subr.mxu0 0.0
        %1144 = vmatpush1.msra.mxu0 0.0
        %1145 = vmatprep.subr.mxu0 0.0
        %1146 = vmatpush1.msra.mxu0 0.0
        %1147 = vmatprep.subr.mxu0 0.0
        %1148 = vmatpush1.msra.mxu0 0.0
        %1149 = vmatprep.subr.mxu0 0.0
        %1150 = vmatpush1.msra.mxu0 0.0
        %1151 = vmatprep.subr.mxu0 0.0
        %1152 = vmatpush1.msra.mxu0 0.0
        %1153 = vmatprep.subr.mxu0 0.0
        %1154 = vmatpush1.msra.mxu0 0.0
        %1155 = vmatprep.subr.mxu0 0.0
        %1156 = vmatpush1.msra.mxu0 0.0
        %1157 = vmatprep.subr.mxu0 0.0
        %1158 = vmatpush1.msra.mxu0 0.0
        %1159 = vmatprep.subr.mxu0 0.0
        %1160 = vmatpush1.msra.mxu0 0.0
        %1161 = vmatprep.subr.mxu0 0.0
        %1162 = vmatpush1.msra.mxu0 0.0
        %1163 = vmatprep.subr.mxu0 0.0
        %1164 = vmatpush1.msra.mxu0 0.0
        %1165 = vmatprep.subr.mxu0 0.0
        %1166 = vmatpush1.msra.mxu0 0.0
        %1167 = vmatprep.subr.mxu0 0.0
        %1168 = vmatpush1.msra.mxu0 0.0
        %1169 = vmatprep.subr.mxu0 0.0
        %1170 = vmatpush1.msra.mxu0 0.0
        %1171 = vmatprep.mubr.f32.mxu0 0.0
        %1172 = vmatmul.mubr.f32.gmra.mrb[0].mxu0 %v1084
        %v1173 = vpop.f32.mrb[0].mxu0
        %v1174 = vadd.f32 %v932, %v1173
        %v1175 = vpop.f32.mrb[0].mxu0
        %v1176 = vadd.f32 %v934, %v1175
        %1177 = vmatprep.mubr.f32.mxu0 0.0
        %1178 = vmatmul.mubr.f32.gmra.mrb[0].mxu0 %v1087
        %v1179 = vpop.f32.mrb[0].mxu0
        %v1180 = vadd.f32 %v938, %v1179
        %v1181 = vpop.f32.mrb[0].mxu0
        %v1182 = vadd.f32 %v940, %v1181
        %1183 = vmatprep.mubr.f32.mxu0 0.0
        %1184 = vmatmul.mubr.f32.gmra.mrb[0].mxu0 %v1090
        %v1185 = vpop.f32.mrb[0].mxu0
        %v1186 = vadd.f32 %v944, %v1185
        %v1187 = vpop.f32.mrb[0].mxu0
        %v1188 = vadd.f32 %v946, %v1187
        %1189 = vmatprep.mubr.f32.mxu0 0.0
        %1190 = vmatmul.mubr.f32.gmra.mrb[0].mxu0 %v1093
        %v1191 = vpop.f32.mrb[0].mxu0
        %v1192 = vadd.f32 %v950, %v1191
        %v1193 = vpop.f32.mrb[0].mxu0
        %v1194 = vadd.f32 %v952, %v1193
        %1195 = vmatprep.mubr.f32.mxu0 0.0
        %1196 = vmatmul.mubr.f32.gmra.mrb[0].mxu0 %v1096
        %v1197 = vpop.f32.mrb[0].mxu0
        %v1198 = vadd.f32 %v956, %v1197
        %v1199 = vpop.f32.mrb[0].mxu0
        %v1200 = vadd.f32 %v958, %v1199
        %1201 = vmatprep.mubr.f32.mxu0 0.0
        %1202 = vmatmul.mubr.f32.gmra.mrb[0].mxu0 %v1099
        %v1203 = vpop.f32.mrb[0].mxu0
        %v1204 = vadd.f32 %v962, %v1203
        %v1205 = vpop.f32.mrb[0].mxu0
        %v1206 = vadd.f32 %v964, %v1205
        %1207 = vmatprep.mubr.f32.mxu0 0.0
        %1208 = vmatmul.mubr.f32.gmra.mrb[0].mxu0 %v1102
        %v1209 = vpop.f32.mrb[0].mxu0
        %v1210 = vadd.f32 %v968, %v1209
        %v1211 = vpop.f32.mrb[0].mxu0
        %v1212 = vadd.f32 %v970, %v1211
        %1213 = vmatprep.mubr.f32.mxu0 0.0
        %1214 = vmatmul.mubr.f32.gmra.mrb[0].mxu0 %v1105
        %v1215 = vpop.f32.mrb[0].mxu0
        %v1216 = vadd.f32 %v974, %v1215
        %v1217 = vpop.f32.mrb[0].mxu0
        %v1218 = vadd.f32 %v976, %v1217
        %1219 = vdwg.mxu0
        %1220 = vmatprep.subr.mxu0 0.0
        %1221 = vmatpush1.msra.mxu0 %v811
        %1222 = vmatprep.subr.mxu0 0.0
        %1223 = vmatpush1.msra.mxu0 %v812
        %1224 = vmatprep.subr.mxu0 0.0
        %1225 = vmatpush1.msra.mxu0 %v813
        %1226 = vmatprep.subr.mxu0 0.0
        %1227 = vmatpush1.msra.mxu0 %v814
        %1228 = vmatprep.subr.mxu0 0.0
        %1229 = vmatpush1.msra.mxu0 0.0
        %1230 = vmatprep.subr.mxu0 0.0
        %1231 = vmatpush1.msra.mxu0 0.0
        %1232 = vmatprep.subr.mxu0 0.0
        %1233 = vmatpush1.msra.mxu0 0.0
        %1234 = vmatprep.subr.mxu0 0.0
        %1235 = vmatpush1.msra.mxu0 0.0
        %1236 = vmatprep.subr.mxu0 0.0
        %1237 = vmatpush1.msra.mxu0 0.0
        %1238 = vmatprep.subr.mxu0 0.0
        %1239 = vmatpush1.msra.mxu0 0.0
        %1240 = vmatprep.subr.mxu0 0.0
        %1241 = vmatpush1.msra.mxu0 0.0
        %1242 = vmatprep.subr.mxu0 0.0
        %1243 = vmatpush1.msra.mxu0 0.0
        %1244 = vmatprep.subr.mxu0 0.0
        %1245 = vmatpush1.msra.mxu0 0.0
        %1246 = vmatprep.subr.mxu0 0.0
        %1247 = vmatpush1.msra.mxu0 0.0
        %1248 = vmatprep.subr.mxu0 0.0
        %1249 = vmatpush1.msra.mxu0 0.0
        %1250 = vmatprep.subr.mxu0 0.0
        %1251 = vmatpush1.msra.mxu0 0.0
        %1252 = vmatprep.subr.mxu0 0.0
        %1253 = vmatpush1.msra.mxu0 0.0
        %1254 = vmatprep.subr.mxu0 0.0
        %1255 = vmatpush1.msra.mxu0 0.0
        %1256 = vmatprep.subr.mxu0 0.0
        %1257 = vmatpush1.msra.mxu0 0.0
        %1258 = vmatprep.subr.mxu0 0.0
        %1259 = vmatpush1.msra.mxu0 0.0
        %1260 = vmatprep.subr.mxu0 0.0
        %1261 = vmatpush1.msra.mxu0 0.0
        %1262 = vmatprep.subr.mxu0 0.0
        %1263 = vmatpush1.msra.mxu0 0.0
        %1264 = vmatprep.subr.mxu0 0.0
        %1265 = vmatpush1.msra.mxu0 0.0
        %1266 = vmatprep.subr.mxu0 0.0
        %1267 = vmatpush1.msra.mxu0 0.0
        %1268 = vmatprep.subr.mxu0 0.0
        %1269 = vmatpush1.msra.mxu0 0.0
        %1270 = vmatprep.subr.mxu0 0.0
        %1271 = vmatpush1.msra.mxu0 0.0
        %1272 = vmatprep.subr.mxu0 0.0
        %1273 = vmatpush1.msra.mxu0 0.0
        %1274 = vmatprep.subr.mxu0 0.0
        %1275 = vmatpush1.msra.mxu0 0.0
        %1276 = vmatprep.subr.mxu0 0.0
        %1277 = vmatpush1.msra.mxu0 0.0
        %1278 = vmatprep.subr.mxu0 0.0
        %1279 = vmatpush1.msra.mxu0 0.0
        %1280 = vmatprep.subr.mxu0 0.0
        %1281 = vmatpush1.msra.mxu0 0.0
        %1282 = vmatprep.subr.mxu0 0.0
        %1283 = vmatpush1.msra.mxu0 0.0
        %1284 = vmatprep.mubr.f32.mxu0 0.0
        %1285 = vmatmul.mubr.f32.gmra.mrb[0].mxu0 %v1084
        %v1286 = vpop.f32.mrb[0].mxu0
        %v1287 = vadd.f32 %v1045, %v1286
        %v1288 = vpop.f32.mrb[0].mxu0
        %1289 = vmatprep.mubr.f32.mxu0 0.0
        %1290 = vmatmul.mubr.f32.gmra.mrb[0].mxu0 %v1087
        %v1291 = vpop.f32.mrb[0].mxu0
        %v1292 = vadd.f32 %v1050, %v1291
        %v1293 = vpop.f32.mrb[0].mxu0
        %1294 = vmatprep.mubr.f32.mxu0 0.0
        %1295 = vmatmul.mubr.f32.gmra.mrb[0].mxu0 %v1090
        %v1296 = vpop.f32.mrb[0].mxu0
        %v1297 = vadd.f32 %v1055, %v1296
        %v1298 = vpop.f32.mrb[0].mxu0
        %1299 = vmatprep.mubr.f32.mxu0 0.0
        %1300 = vmatmul.mubr.f32.gmra.mrb[0].mxu0 %v1093
        %v1301 = vpop.f32.mrb[0].mxu0
        %v1302 = vadd.f32 %v1060, %v1301
        %v1303 = vpop.f32.mrb[0].mxu0
        %1304 = vmatprep.mubr.f32.mxu0 0.0
        %1305 = vmatmul.mubr.f32.gmra.mrb[0].mxu0 %v1096
        %v1306 = vpop.f32.mrb[0].mxu0
        %v1307 = vadd.f32 %v1065, %v1306
        %v1308 = vpop.f32.mrb[0].mxu0
        %1309 = vmatprep.mubr.f32.mxu0 0.0
        %1310 = vmatmul.mubr.f32.gmra.mrb[0].mxu0 %v1099
        %v1311 = vpop.f32.mrb[0].mxu0
        %v1312 = vadd.f32 %v1070, %v1311
        %v1313 = vpop.f32.mrb[0].mxu0
        %1314 = vmatprep.mubr.f32.mxu0 0.0
        %1315 = vmatmul.mubr.f32.gmra.mrb[0].mxu0 %v1102
        %v1316 = vpop.f32.mrb[0].mxu0
        %v1317 = vadd.f32 %v1075, %v1316
        %v1318 = vpop.f32.mrb[0].mxu0
        %1319 = vmatprep.mubr.f32.mxu0 0.0
        %1320 = vmatmul.mubr.f32.gmra.mrb[0].mxu0 %v1105
        %v1321 = vpop.f32.mrb[0].mxu0
        %v1322 = vadd.f32 %v1080, %v1321
        %v1323 = vpop.f32.mrb[0].mxu0
        %1324 = vdwg.mxu0
        %1325 = vrot.lane.b32.xlu0 %v774, 127
        %v1326 = vpop.permute.xlu0 %1325
        %1327 = vrot.lane.b32.xlu0 %v777, 127
        %v1328 = vpop.permute.xlu0 %1327
        %1329 = vrot.lane.b32.xlu0 %v780, 127
        %v1330 = vpop.permute.xlu0 %1329
        %1331 = vrot.lane.b32.xlu0 %v783, 127
        %v1332 = vpop.permute.xlu0 %1331
        %1333 = vrot.lane.b32.xlu0 %v775, 127
        %v1334 = vpop.permute.xlu0 %1333
        %1335 = vrot.lane.b32.xlu0 %v778, 127
        %v1336 = vpop.permute.xlu0 %1335
        %1337 = vrot.lane.b32.xlu0 %v781, 127
        %v1338 = vpop.permute.xlu0 %1337
        %1339 = vrot.lane.b32.xlu0 %v784, 127
        %v1340 = vpop.permute.xlu0 %1339
        %1341 = vrot.lane.b32.xlu0 %v776, 127
        %v1342 = vpop.permute.xlu0 %1341
        %1343 = vrot.lane.b32.xlu0 %v779, 127
        %v1344 = vpop.permute.xlu0 %1343
        %1345 = vrot.lane.b32.xlu0 %v782, 127
        %v1346 = vpop.permute.xlu0 %1345
        %1347 = vrot.lane.b32.xlu0 %v785, 127
        %v1348 = vpop.permute.xlu0 %1347
        %vm1349 = vcmp.lt.s32.totalorder %v511, 127
        %v1350 = vsel %vm1349, %v1334, %v1342
        %v1351 = vsel %vm1349, %v1336, %v1344
        %v1352 = vsel %vm1349, %v1338, %v1346
        %v1353 = vsel %vm1349, %v1340, %v1348
        %v1354 = vsel %vm1349, %v1326, %v1334
        %v1355 = vsel %vm1349, %v1328, %v1336
        %v1356 = vsel %vm1349, %v1330, %v1338
        %v1357 = vsel %vm1349, %v1332, %v1340
        %v1358 = vsel %vm1349, %v1342, %v1326
        %v1359 = vsel %vm1349, %v1344, %v1328
        %v1360 = vsel %vm1349, %v1346, %v1330
        %v1361 = vsel %vm1349, %v1348, %v1332
        %s1362 = scalar_lea.vmem %s4, 128
        %v1363 = vld [vmem:[%s1362] sm:$0xff]
        %v1364 = vld [vmem:[%s1362 + $0x8] sm:$0xff]
        %v1365 = vld [vmem:[%s1362 + $0x10] sm:$0xff]
        %v1366 = vld [vmem:[%s1362 + $0x18] sm:$0xff]
        %v1367 = vld [vmem:[%s1362 + $0x20] sm:$0xff]
        %v1368 = vld [vmem:[%s1362 + $0x28] sm:$0xff]
        %v1369 = vld [vmem:[%s1362 + $0x30] sm:$0xff]
        %v1370 = vld [vmem:[%s1362 + $0x38] sm:$0xff]
        %v1372 = vsel %vm840, %v1363, 0
        %v1375 = vsel %vm840, %v1364, 0
        %v1378 = vsel %vm840, %v1365, 0
        %v1381 = vsel %vm840, %v1366, 0
        %v1384 = vsel %vm840, %v1367, 0
        %v1387 = vsel %vm840, %v1368, 0
        %v1390 = vsel %vm840, %v1369, 0
        %v1393 = vsel %vm840, %v1370, 0
        %1395 = vmatprep.subr.mxu0 %v1350
        %1396 = vmatpush1.msra.mxu0 %v1354
        %1397 = vmatprep.subr.mxu0 %v1351
        %1398 = vmatpush1.msra.mxu0 %v1355
        %1399 = vmatprep.subr.mxu0 %v1352
        %1400 = vmatpush1.msra.mxu0 %v1356
        %1401 = vmatprep.subr.mxu0 %v1353
        %1402 = vmatpush1.msra.mxu0 %v1357
        %1403 = vmatprep.subr.mxu0 0.0
        %1404 = vmatpush1.msra.mxu0 0.0
        %1405 = vmatprep.subr.mxu0 0.0
        %1406 = vmatpush1.msra.mxu0 0.0
        %1407 = vmatprep.subr.mxu0 0.0
        %1408 = vmatpush1.msra.mxu0 0.0
        %1409 = vmatprep.subr.mxu0 0.0
        %1410 = vmatpush1.msra.mxu0 0.0
        %1411 = vmatprep.subr.mxu0 0.0
        %1412 = vmatpush1.msra.mxu0 0.0
        %1413 = vmatprep.subr.mxu0 0.0
        %1414 = vmatpush1.msra.mxu0 0.0
        %1415 = vmatprep.subr.mxu0 0.0
        %1416 = vmatpush1.msra.mxu0 0.0
        %1417 = vmatprep.subr.mxu0 0.0
        %1418 = vmatpush1.msra.mxu0 0.0
        %1419 = vmatprep.subr.mxu0 0.0
        %1420 = vmatpush1.msra.mxu0 0.0
        %1421 = vmatprep.subr.mxu0 0.0
        %1422 = vmatpush1.msra.mxu0 0.0
        %1423 = vmatprep.subr.mxu0 0.0
        %1424 = vmatpush1.msra.mxu0 0.0
        %1425 = vmatprep.subr.mxu0 0.0
        %1426 = vmatpush1.msra.mxu0 0.0
        %1427 = vmatprep.subr.mxu0 0.0
        %1428 = vmatpush1.msra.mxu0 0.0
        %1429 = vmatprep.subr.mxu0 0.0
        %1430 = vmatpush1.msra.mxu0 0.0
        %1431 = vmatprep.subr.mxu0 0.0
        %1432 = vmatpush1.msra.mxu0 0.0
        %1433 = vmatprep.subr.mxu0 0.0
        %1434 = vmatpush1.msra.mxu0 0.0
        %1435 = vmatprep.subr.mxu0 0.0
        %1436 = vmatpush1.msra.mxu0 0.0
        %1437 = vmatprep.subr.mxu0 0.0
        %1438 = vmatpush1.msra.mxu0 0.0
        %1439 = vmatprep.subr.mxu0 0.0
        %1440 = vmatpush1.msra.mxu0 0.0
        %1441 = vmatprep.subr.mxu0 0.0
        %1442 = vmatpush1.msra.mxu0 0.0
        %1443 = vmatprep.subr.mxu0 0.0
        %1444 = vmatpush1.msra.mxu0 0.0
        %1445 = vmatprep.subr.mxu0 0.0
        %1446 = vmatpush1.msra.mxu0 0.0
        %1447 = vmatprep.subr.mxu0 0.0
        %1448 = vmatpush1.msra.mxu0 0.0
        %1449 = vmatprep.subr.mxu0 0.0
        %1450 = vmatpush1.msra.mxu0 0.0
        %1451 = vmatprep.subr.mxu0 0.0
        %1452 = vmatpush1.msra.mxu0 0.0
        %1453 = vmatprep.subr.mxu0 0.0
        %1454 = vmatpush1.msra.mxu0 0.0
        %1455 = vmatprep.subr.mxu0 0.0
        %1456 = vmatpush1.msra.mxu0 0.0
        %1457 = vmatprep.subr.mxu0 0.0
        %1458 = vmatpush1.msra.mxu0 0.0
        %1459 = vmatprep.mubr.f32.mxu0 0.0
        %1460 = vmatmul.mubr.f32.gmra.mrb[0].mxu0 %v1372
        %v1461 = vpop.f32.mrb[0].mxu0
        %v1462 = vadd.f32 0.0, %v1461
        %v1463 = vpop.f32.mrb[0].mxu0
        %v1464 = vadd.f32 0.0, %v1463
        %1465 = vmatprep.mubr.f32.mxu0 0.0
        %1466 = vmatmul.mubr.f32.gmra.mrb[0].mxu0 %v1375
        %v1467 = vpop.f32.mrb[0].mxu0
        %v1468 = vadd.f32 0.0, %v1467
        %v1469 = vpop.f32.mrb[0].mxu0
        %v1470 = vadd.f32 0.0, %v1469
        %1471 = vmatprep.mubr.f32.mxu0 0.0
        %1472 = vmatmul.mubr.f32.gmra.mrb[0].mxu0 %v1378
        %v1473 = vpop.f32.mrb[0].mxu0
        %v1474 = vadd.f32 0.0, %v1473
        %v1475 = vpop.f32.mrb[0].mxu0
        %v1476 = vadd.f32 0.0, %v1475
        %1477 = vmatprep.mubr.f32.mxu0 0.0
        %1478 = vmatmul.mubr.f32.gmra.mrb[0].mxu0 %v1381
        %v1479 = vpop.f32.mrb[0].mxu0
        %v1480 = vadd.f32 0.0, %v1479
        %v1481 = vpop.f32.mrb[0].mxu0
        %v1482 = vadd.f32 0.0, %v1481
        %1483 = vmatprep.mubr.f32.mxu0 0.0
        %1484 = vmatmul.mubr.f32.gmra.mrb[0].mxu0 %v1384
        %v1485 = vpop.f32.mrb[0].mxu0
        %v1486 = vadd.f32 0.0, %v1485
        %v1487 = vpop.f32.mrb[0].mxu0
        %v1488 = vadd.f32 0.0, %v1487
        %1489 = vmatprep.mubr.f32.mxu0 0.0
        %1490 = vmatmul.mubr.f32.gmra.mrb[0].mxu0 %v1387
        %v1491 = vpop.f32.mrb[0].mxu0
        %v1492 = vadd.f32 0.0, %v1491
        %v1493 = vpop.f32.mrb[0].mxu0
        %v1494 = vadd.f32 0.0, %v1493
        %1495 = vmatprep.mubr.f32.mxu0 0.0
        %1496 = vmatmul.mubr.f32.gmra.mrb[0].mxu0 %v1390
        %v1497 = vpop.f32.mrb[0].mxu0
        %v1498 = vadd.f32 0.0, %v1497
        %v1499 = vpop.f32.mrb[0].mxu0
        %v1500 = vadd.f32 0.0, %v1499
        %1501 = vmatprep.mubr.f32.mxu0 0.0
        %1502 = vmatmul.mubr.f32.gmra.mrb[0].mxu0 %v1393
        %v1503 = vpop.f32.mrb[0].mxu0
        %v1504 = vadd.f32 0.0, %v1503
        %v1505 = vpop.f32.mrb[0].mxu0
        %v1506 = vadd.f32 0.0, %v1505
        %1507 = vdwg.mxu0
        %1508 = vmatprep.subr.mxu0 0.0
        %1509 = vmatpush1.msra.mxu0 %v1358
        %1510 = vmatprep.subr.mxu0 0.0
        %1511 = vmatpush1.msra.mxu0 %v1359
        %1512 = vmatprep.subr.mxu0 0.0
        %1513 = vmatpush1.msra.mxu0 %v1360
        %1514 = vmatprep.subr.mxu0 0.0
        %1515 = vmatpush1.msra.mxu0 %v1361
        %1516 = vmatprep.subr.mxu0 0.0
        %1517 = vmatpush1.msra.mxu0 0.0
        %1518 = vmatprep.subr.mxu0 0.0
        %1519 = vmatpush1.msra.mxu0 0.0
        %1520 = vmatprep.subr.mxu0 0.0
        %1521 = vmatpush1.msra.mxu0 0.0
        %1522 = vmatprep.subr.mxu0 0.0
        %1523 = vmatpush1.msra.mxu0 0.0
        %1524 = vmatprep.subr.mxu0 0.0
        %1525 = vmatpush1.msra.mxu0 0.0
        %1526 = vmatprep.subr.mxu0 0.0
        %1527 = vmatpush1.msra.mxu0 0.0
        %1528 = vmatprep.subr.mxu0 0.0
        %1529 = vmatpush1.msra.mxu0 0.0
        %1530 = vmatprep.subr.mxu0 0.0
        %1531 = vmatpush1.msra.mxu0 0.0
        %1532 = vmatprep.subr.mxu0 0.0
        %1533 = vmatpush1.msra.mxu0 0.0
        %1534 = vmatprep.subr.mxu0 0.0
        %1535 = vmatpush1.msra.mxu0 0.0
        %1536 = vmatprep.subr.mxu0 0.0
        %1537 = vmatpush1.msra.mxu0 0.0
        %1538 = vmatprep.subr.mxu0 0.0
        %1539 = vmatpush1.msra.mxu0 0.0
        %1540 = vmatprep.subr.mxu0 0.0
        %1541 = vmatpush1.msra.mxu0 0.0
        %1542 = vmatprep.subr.mxu0 0.0
        %1543 = vmatpush1.msra.mxu0 0.0
        %1544 = vmatprep.subr.mxu0 0.0
        %1545 = vmatpush1.msra.mxu0 0.0
        %1546 = vmatprep.subr.mxu0 0.0
        %1547 = vmatpush1.msra.mxu0 0.0
        %1548 = vmatprep.subr.mxu0 0.0
        %1549 = vmatpush1.msra.mxu0 0.0
        %1550 = vmatprep.subr.mxu0 0.0
        %1551 = vmatpush1.msra.mxu0 0.0
        %1552 = vmatprep.subr.mxu0 0.0
        %1553 = vmatpush1.msra.mxu0 0.0
        %1554 = vmatprep.subr.mxu0 0.0
        %1555 = vmatpush1.msra.mxu0 0.0
        %1556 = vmatprep.subr.mxu0 0.0
        %1557 = vmatpush1.msra.mxu0 0.0
        %1558 = vmatprep.subr.mxu0 0.0
        %1559 = vmatpush1.msra.mxu0 0.0
        %1560 = vmatprep.subr.mxu0 0.0
        %1561 = vmatpush1.msra.mxu0 0.0
        %1562 = vmatprep.subr.mxu0 0.0
        %1563 = vmatpush1.msra.mxu0 0.0
        %1564 = vmatprep.subr.mxu0 0.0
        %1565 = vmatpush1.msra.mxu0 0.0
        %1566 = vmatprep.subr.mxu0 0.0
        %1567 = vmatpush1.msra.mxu0 0.0
        %1568 = vmatprep.subr.mxu0 0.0
        %1569 = vmatpush1.msra.mxu0 0.0
        %1570 = vmatprep.subr.mxu0 0.0
        %1571 = vmatpush1.msra.mxu0 0.0
        %1572 = vmatprep.mubr.f32.mxu0 0.0
        %1573 = vmatmul.mubr.f32.gmra.mrb[0].mxu0 %v1372
        %v1574 = vpop.f32.mrb[0].mxu0
        %v1575 = vadd.f32 0.0, %v1574
        %v1576 = vpop.f32.mrb[0].mxu0
        %1577 = vmatprep.mubr.f32.mxu0 0.0
        %1578 = vmatmul.mubr.f32.gmra.mrb[0].mxu0 %v1375
        %v1579 = vpop.f32.mrb[0].mxu0
        %v1580 = vadd.f32 0.0, %v1579
        %v1581 = vpop.f32.mrb[0].mxu0
        %1582 = vmatprep.mubr.f32.mxu0 0.0
        %1583 = vmatmul.mubr.f32.gmra.mrb[0].mxu0 %v1378
        %v1584 = vpop.f32.mrb[0].mxu0
        %v1585 = vadd.f32 0.0, %v1584
        %v1586 = vpop.f32.mrb[0].mxu0
        %1587 = vmatprep.mubr.f32.mxu0 0.0
        %1588 = vmatmul.mubr.f32.gmra.mrb[0].mxu0 %v1381
        %v1589 = vpop.f32.mrb[0].mxu0
        %v1590 = vadd.f32 0.0, %v1589
        %v1591 = vpop.f32.mrb[0].mxu0
        %1592 = vmatprep.mubr.f32.mxu0 0.0
        %1593 = vmatmul.mubr.f32.gmra.mrb[0].mxu0 %v1384
        %v1594 = vpop.f32.mrb[0].mxu0
        %v1595 = vadd.f32 0.0, %v1594
        %v1596 = vpop.f32.mrb[0].mxu0
        %1597 = vmatprep.mubr.f32.mxu0 0.0
        %1598 = vmatmul.mubr.f32.gmra.mrb[0].mxu0 %v1387
        %v1599 = vpop.f32.mrb[0].mxu0
        %v1600 = vadd.f32 0.0, %v1599
        %v1601 = vpop.f32.mrb[0].mxu0
        %1602 = vmatprep.mubr.f32.mxu0 0.0
        %1603 = vmatmul.mubr.f32.gmra.mrb[0].mxu0 %v1390
        %v1604 = vpop.f32.mrb[0].mxu0
        %v1605 = vadd.f32 0.0, %v1604
        %v1606 = vpop.f32.mrb[0].mxu0
        %1607 = vmatprep.mubr.f32.mxu0 0.0
        %1608 = vmatmul.mubr.f32.gmra.mrb[0].mxu0 %v1393
        %v1609 = vpop.f32.mrb[0].mxu0
        %v1610 = vadd.f32 0.0, %v1609
        %v1611 = vpop.f32.mrb[0].mxu0
        %1612 = vdwg.mxu0
        %v1613 = vadd.f32 %v1174, %v1462
        %v1614 = vadd.f32 %v1176, %v1464
        %v1615 = vadd.f32 %v1287, %v1575
        %v1616 = vadd.f32 %v1180, %v1468
        %v1617 = vadd.f32 %v1182, %v1470
        %v1618 = vadd.f32 %v1292, %v1580
        %v1619 = vadd.f32 %v1186, %v1474
        %v1620 = vadd.f32 %v1188, %v1476
        %v1621 = vadd.f32 %v1297, %v1585
        %v1622 = vadd.f32 %v1192, %v1480
        %v1623 = vadd.f32 %v1194, %v1482
        %v1624 = vadd.f32 %v1302, %v1590
        %v1625 = vadd.f32 %v1198, %v1486
        %v1626 = vadd.f32 %v1200, %v1488
        %v1627 = vadd.f32 %v1307, %v1595
        %v1628 = vadd.f32 %v1204, %v1492
        %v1629 = vadd.f32 %v1206, %v1494
        %v1630 = vadd.f32 %v1312, %v1600
        %v1631 = vadd.f32 %v1210, %v1498
        %v1632 = vadd.f32 %v1212, %v1500
        %v1633 = vadd.f32 %v1317, %v1605
        %v1634 = vadd.f32 %v1216, %v1504
        %v1635 = vadd.f32 %v1218, %v1506
        %v1636 = vadd.f32 %v1322, %v1610
        %v1637 = vld [vmem:[%s5] sm:$0xff]
        %v1638 = vld [vmem:[%s5 + $0x8] sm:$0xff]
        %v1639 = vld [vmem:[%s5 + $0x10] sm:$0xff]
        %v1640 = vld [vmem:[%s5 + $0x18] sm:$0xff]
        %v1641 = vld [vmem:[%s5 + $0x20] sm:$0xff]
        %v1642 = vld [vmem:[%s5 + $0x28] sm:$0xff]
        %v1643 = vld [vmem:[%s5 + $0x30] sm:$0xff]
        %v1644 = vld [vmem:[%s5 + $0x38] sm:$0xff]
        %1646 = vset.pattern.permute.xlu0 0
        %1647 = vperm.xlu0 %1646, %v1637
        %v1648 = vpop.permute.xlu0 %1647
        %1651 = vset.pattern.permute.xlu0 0
        %1652 = vperm.xlu0 %1651, %v1638
        %v1653 = vpop.permute.xlu0 %1652
        %1656 = vset.pattern.permute.xlu0 0
        %1657 = vperm.xlu0 %1656, %v1639
        %v1658 = vpop.permute.xlu0 %1657
        %1661 = vset.pattern.permute.xlu0 0
        %1662 = vperm.xlu0 %1661, %v1640
        %v1663 = vpop.permute.xlu0 %1662
        %1666 = vset.pattern.permute.xlu0 0
        %1667 = vperm.xlu0 %1666, %v1641
        %v1668 = vpop.permute.xlu0 %1667
        %1671 = vset.pattern.permute.xlu0 0
        %1672 = vperm.xlu0 %1671, %v1642
        %v1673 = vpop.permute.xlu0 %1672
        %1676 = vset.pattern.permute.xlu0 0
        %1677 = vperm.xlu0 %1676, %v1643
        %v1678 = vpop.permute.xlu0 %1677
        %1681 = vset.pattern.permute.xlu0 0
        %1682 = vperm.xlu0 %1681, %v1644
        %v1683 = vpop.permute.xlu0 %1682
        %v1685 = vadd.f32 %v1613, %v1648
        %v1686 = vadd.f32 %v1614, %v1648
        %v1687 = vadd.f32 %v1615, %v1648
        %v1688 = vadd.f32 %v1616, %v1653
        %v1689 = vadd.f32 %v1617, %v1653
        %v1690 = vadd.f32 %v1618, %v1653
        %v1691 = vadd.f32 %v1619, %v1658
        %v1692 = vadd.f32 %v1620, %v1658
        %v1693 = vadd.f32 %v1621, %v1658
        %v1694 = vadd.f32 %v1622, %v1663
        %v1695 = vadd.f32 %v1623, %v1663
        %v1696 = vadd.f32 %v1624, %v1663
        %v1697 = vadd.f32 %v1625, %v1668
        %v1698 = vadd.f32 %v1626, %v1668
        %v1699 = vadd.f32 %v1627, %v1668
        %v1700 = vadd.f32 %v1628, %v1673
        %v1701 = vadd.f32 %v1629, %v1673
        %v1702 = vadd.f32 %v1630, %v1673
        %v1703 = vadd.f32 %v1631, %v1678
        %v1704 = vadd.f32 %v1632, %v1678
        %v1705 = vadd.f32 %v1633, %v1678
        %v1706 = vadd.f32 %v1634, %v1683
        %v1707 = vadd.f32 %v1635, %v1683
        %v1708 = vadd.f32 %v1636, %v1683
        %v1709 = vtanh.pop %v1685
        %v1710 = vtanh.pop %v1686
        %v1711 = vtanh.pop %v1687
        %v1712 = vtanh.pop %v1688
        %v1713 = vtanh.pop %v1689
        %v1714 = vtanh.pop %v1690
        %v1715 = vtanh.pop %v1691
        %v1716 = vtanh.pop %v1692
        %v1717 = vtanh.pop %v1693
        %v1718 = vtanh.pop %v1694
        %v1719 = vtanh.pop %v1695
        %v1720 = vtanh.pop %v1696
        %v1721 = vxor.u32 %v1697, 2147483648
        %v1722 = vxor.u32 %v1698, 2147483648
        %v1723 = vxor.u32 %v1699, 2147483648
        %v1724 = vxor.u32 %v1700, 2147483648
        %v1725 = vxor.u32 %v1701, 2147483648
        %v1726 = vxor.u32 %v1702, 2147483648
        %v1727 = vxor.u32 %v1703, 2147483648
        %v1728 = vxor.u32 %v1704, 2147483648
        %v1729 = vxor.u32 %v1705, 2147483648
        %v1730 = vxor.u32 %v1706, 2147483648
        %v1731 = vxor.u32 %v1707, 2147483648
        %v1732 = vxor.u32 %v1708, 2147483648
        %v1733 = vmul.f32 %v1721, 1.442695
        %v1734 = vpow.pop %v1733
        %v1735 = vmul.f32 %v1722, 1.442695
        %v1736 = vpow.pop %v1735
        %v1737 = vmul.f32 %v1723, 1.442695
        %v1738 = vpow.pop %v1737
        %v1739 = vmul.f32 %v1724, 1.442695
        %v1740 = vpow.pop %v1739
        %v1741 = vmul.f32 %v1725, 1.442695
        %v1742 = vpow.pop %v1741
        %v1743 = vmul.f32 %v1726, 1.442695
        %v1744 = vpow.pop %v1743
        %v1745 = vmul.f32 %v1727, 1.442695
        %v1746 = vpow.pop %v1745
        %v1747 = vmul.f32 %v1728, 1.442695
        %v1748 = vpow.pop %v1747
        %v1749 = vmul.f32 %v1729, 1.442695
        %v1750 = vpow.pop %v1749
        %v1751 = vmul.f32 %v1730, 1.442695
        %v1752 = vpow.pop %v1751
        %v1753 = vmul.f32 %v1731, 1.442695
        %v1754 = vpow.pop %v1753
        %v1755 = vmul.f32 %v1732, 1.442695
        %v1756 = vpow.pop %v1755
        %v1757 = vadd.f32 %v1734, 1.0
        %v1758 = vadd.f32 %v1736, 1.0
        %v1759 = vadd.f32 %v1738, 1.0
        %v1760 = vadd.f32 %v1740, 1.0
        %v1761 = vadd.f32 %v1742, 1.0
        %v1762 = vadd.f32 %v1744, 1.0
        %v1763 = vadd.f32 %v1746, 1.0
        %v1764 = vadd.f32 %v1748, 1.0
        %v1765 = vadd.f32 %v1750, 1.0
        %v1766 = vadd.f32 %v1752, 1.0
        %v1767 = vadd.f32 %v1754, 1.0
        %v1768 = vadd.f32 %v1756, 1.0
        %v1769 = vrcp.pop %v1757
        %v1770 = vmul.f32 1.0, %v1769
        %v1771 = vrcp.pop %v1758
        %v1772 = vmul.f32 1.0, %v1771
        %v1773 = vrcp.pop %v1759
        %v1774 = vmul.f32 1.0, %v1773
        %v1775 = vrcp.pop %v1760
        %v1776 = vmul.f32 1.0, %v1775
        %v1777 = vrcp.pop %v1761
        %v1778 = vmul.f32 1.0, %v1777
        %v1779 = vrcp.pop %v1762
        %v1780 = vmul.f32 1.0, %v1779
        %v1781 = vrcp.pop %v1763
        %v1782 = vmul.f32 1.0, %v1781
        %v1783 = vrcp.pop %v1764
        %v1784 = vmul.f32 1.0, %v1783
        %v1785 = vrcp.pop %v1765
        %v1786 = vmul.f32 1.0, %v1785
        %v1787 = vrcp.pop %v1766
        %v1788 = vmul.f32 1.0, %v1787
        %v1789 = vrcp.pop %v1767
        %v1790 = vmul.f32 1.0, %v1789
        %v1791 = vrcp.pop %v1768
        %v1792 = vmul.f32 1.0, %v1791
        %v1793 = vmul.f32 %v1709, %v1770
        %v1794 = vmul.f32 %v1710, %v1772
        %v1795 = vmul.f32 %v1711, %v1774
        %v1796 = vmul.f32 %v1712, %v1776
        %v1797 = vmul.f32 %v1713, %v1778
        %v1798 = vmul.f32 %v1714, %v1780
        %v1799 = vmul.f32 %v1715, %v1782
        %v1800 = vmul.f32 %v1716, %v1784
        %v1801 = vmul.f32 %v1717, %v1786
        %v1802 = vmul.f32 %v1718, %v1788
        %v1803 = vmul.f32 %v1719, %v1790
        %v1804 = vmul.f32 %v1720, %v1792
        %v1805 = vld [vmem:[%s8] sm:$0x3]
        %v1806 = vld [vmem:[%s9] sm:$0x3]
        %v1807 = vld [vmem:[%s6] sm:$0xff]
        %v1808 = vld [vmem:[%s6 + $0x8] sm:$0xff]
        %v1809 = vld [vmem:[%s6 + $0x10] sm:$0xff]
        %v1810 = vld [vmem:[%s6 + $0x18] sm:$0xff]
        %v1811 = vld [vmem:[%s7] sm:$0xff]
        %v1812 = vld [vmem:[%s7 + $0x8] sm:$0xff]
        %v1813 = vld [vmem:[%s7 + $0x10] sm:$0xff]
        %v1814 = vld [vmem:[%s7 + $0x18] sm:$0xff]
        %1816 = vset.pattern.permute.xlu0 0
        %1817 = vperm.xlu0 %1816, %v1811
        %v1818 = vpop.permute.xlu0 %1817
        %1821 = vset.pattern.permute.xlu0 0
        %1822 = vperm.xlu0 %1821, %v1812
        %v1823 = vpop.permute.xlu0 %1822
        %1826 = vset.pattern.permute.xlu0 0
        %1827 = vperm.xlu0 %1826, %v1813
        %v1828 = vpop.permute.xlu0 %1827
        %1831 = vset.pattern.permute.xlu0 0
        %1832 = vperm.xlu0 %1831, %v1814
        %v1833 = vpop.permute.xlu0 %1832
        %v1836 = vsel %vm840, %v1807, 0
        %v1839 = vsel %vm840, %v1808, 0
        %v1842 = vsel %vm840, %v1809, 0
        %v1845 = vsel %vm840, %v1810, 0
        %1847 = vmatprep.subr.mxu0 %v1794
        %1848 = vmatpush1.msra.mxu0 %v1793
        %1849 = vmatprep.subr.mxu0 %v1797
        %1850 = vmatpush1.msra.mxu0 %v1796
        %1851 = vmatprep.subr.mxu0 %v1800
        %1852 = vmatpush1.msra.mxu0 %v1799
        %1853 = vmatprep.subr.mxu0 %v1803
        %1854 = vmatpush1.msra.mxu0 %v1802
        %1855 = vmatprep.subr.mxu0 0.0
        %1856 = vmatpush1.msra.mxu0 0.0
        %1857 = vmatprep.subr.mxu0 0.0
        %1858 = vmatpush1.msra.mxu0 0.0
        %1859 = vmatprep.subr.mxu0 0.0
        %1860 = vmatpush1.msra.mxu0 0.0
        %1861 = vmatprep.subr.mxu0 0.0
        %1862 = vmatpush1.msra.mxu0 0.0
        %1863 = vmatprep.subr.mxu0 0.0
        %1864 = vmatpush1.msra.mxu0 0.0
        %1865 = vmatprep.subr.mxu0 0.0
        %1866 = vmatpush1.msra.mxu0 0.0
        %1867 = vmatprep.subr.mxu0 0.0
        %1868 = vmatpush1.msra.mxu0 0.0
        %1869 = vmatprep.subr.mxu0 0.0
        %1870 = vmatpush1.msra.mxu0 0.0
        %1871 = vmatprep.subr.mxu0 0.0
        %1872 = vmatpush1.msra.mxu0 0.0
        %1873 = vmatprep.subr.mxu0 0.0
        %1874 = vmatpush1.msra.mxu0 0.0
        %1875 = vmatprep.subr.mxu0 0.0
        %1876 = vmatpush1.msra.mxu0 0.0
        %1877 = vmatprep.subr.mxu0 0.0
        %1878 = vmatpush1.msra.mxu0 0.0
        %1879 = vmatprep.subr.mxu0 0.0
        %1880 = vmatpush1.msra.mxu0 0.0
        %1881 = vmatprep.subr.mxu0 0.0
        %1882 = vmatpush1.msra.mxu0 0.0
        %1883 = vmatprep.subr.mxu0 0.0
        %1884 = vmatpush1.msra.mxu0 0.0
        %1885 = vmatprep.subr.mxu0 0.0
        %1886 = vmatpush1.msra.mxu0 0.0
        %1887 = vmatprep.subr.mxu0 0.0
        %1888 = vmatpush1.msra.mxu0 0.0
        %1889 = vmatprep.subr.mxu0 0.0
        %1890 = vmatpush1.msra.mxu0 0.0
        %1891 = vmatprep.subr.mxu0 0.0
        %1892 = vmatpush1.msra.mxu0 0.0
        %1893 = vmatprep.subr.mxu0 0.0
        %1894 = vmatpush1.msra.mxu0 0.0
        %1895 = vmatprep.subr.mxu0 0.0
        %1896 = vmatpush1.msra.mxu0 0.0
        %1897 = vmatprep.subr.mxu0 0.0
        %1898 = vmatpush1.msra.mxu0 0.0
        %1899 = vmatprep.subr.mxu0 0.0
        %1900 = vmatpush1.msra.mxu0 0.0
        %1901 = vmatprep.subr.mxu0 0.0
        %1902 = vmatpush1.msra.mxu0 0.0
        %1903 = vmatprep.subr.mxu0 0.0
        %1904 = vmatpush1.msra.mxu0 0.0
        %1905 = vmatprep.subr.mxu0 0.0
        %1906 = vmatpush1.msra.mxu0 0.0
        %1907 = vmatprep.subr.mxu0 0.0
        %1908 = vmatpush1.msra.mxu0 0.0
        %1909 = vmatprep.subr.mxu0 0.0
        %1910 = vmatpush1.msra.mxu0 0.0
        %1911 = vmatprep.mubr.f32.mxu0 0.0
        %1912 = vmatmul.mubr.f32.gmra.mrb[0].mxu0 %v1836
        %v1913 = vpop.f32.mrb[0].mxu0
        %v1914 = vadd.f32 %v1818, %v1913
        %v1915 = vpop.f32.mrb[0].mxu0
        %v1916 = vadd.f32 %v1818, %v1915
        %1917 = vmatprep.mubr.f32.mxu0 0.0
        %1918 = vmatmul.mubr.f32.gmra.mrb[0].mxu0 %v1839
        %v1919 = vpop.f32.mrb[0].mxu0
        %v1920 = vadd.f32 %v1823, %v1919
        %v1921 = vpop.f32.mrb[0].mxu0
        %v1922 = vadd.f32 %v1823, %v1921
        %1923 = vmatprep.mubr.f32.mxu0 0.0
        %1924 = vmatmul.mubr.f32.gmra.mrb[0].mxu0 %v1842
        %v1925 = vpop.f32.mrb[0].mxu0
        %v1926 = vadd.f32 %v1828, %v1925
        %v1927 = vpop.f32.mrb[0].mxu0
        %v1928 = vadd.f32 %v1828, %v1927
        %1929 = vmatprep.mubr.f32.mxu0 0.0
        %1930 = vmatmul.mubr.f32.gmra.mrb[0].mxu0 %v1845
        %v1931 = vpop.f32.mrb[0].mxu0
        %v1932 = vadd.f32 %v1833, %v1931
        %v1933 = vpop.f32.mrb[0].mxu0
        %v1934 = vadd.f32 %v1833, %v1933
        %1935 = vdwg.mxu0
        %1936 = vmatprep.subr.mxu0 0.0
        %1937 = vmatpush1.msra.mxu0 %v1795
        %1938 = vmatprep.subr.mxu0 0.0
        %1939 = vmatpush1.msra.mxu0 %v1798
        %1940 = vmatprep.subr.mxu0 0.0
        %1941 = vmatpush1.msra.mxu0 %v1801
        %1942 = vmatprep.subr.mxu0 0.0
        %1943 = vmatpush1.msra.mxu0 %v1804
        %1944 = vmatprep.subr.mxu0 0.0
        %1945 = vmatpush1.msra.mxu0 0.0
        %1946 = vmatprep.subr.mxu0 0.0
        %1947 = vmatpush1.msra.mxu0 0.0
        %1948 = vmatprep.subr.mxu0 0.0
        %1949 = vmatpush1.msra.mxu0 0.0
        %1950 = vmatprep.subr.mxu0 0.0
        %1951 = vmatpush1.msra.mxu0 0.0
        %1952 = vmatprep.subr.mxu0 0.0
        %1953 = vmatpush1.msra.mxu0 0.0
        %1954 = vmatprep.subr.mxu0 0.0
        %1955 = vmatpush1.msra.mxu0 0.0
        %1956 = vmatprep.subr.mxu0 0.0
        %1957 = vmatpush1.msra.mxu0 0.0
        %1958 = vmatprep.subr.mxu0 0.0
        %1959 = vmatpush1.msra.mxu0 0.0
        %1960 = vmatprep.subr.mxu0 0.0
        %1961 = vmatpush1.msra.mxu0 0.0
        %1962 = vmatprep.subr.mxu0 0.0
        %1963 = vmatpush1.msra.mxu0 0.0
        %1964 = vmatprep.subr.mxu0 0.0
        %1965 = vmatpush1.msra.mxu0 0.0
        %1966 = vmatprep.subr.mxu0 0.0
        %1967 = vmatpush1.msra.mxu0 0.0
        %1968 = vmatprep.subr.mxu0 0.0
        %1969 = vmatpush1.msra.mxu0 0.0
        %1970 = vmatprep.subr.mxu0 0.0
        %1971 = vmatpush1.msra.mxu0 0.0
        %1972 = vmatprep.subr.mxu0 0.0
        %1973 = vmatpush1.msra.mxu0 0.0
        %1974 = vmatprep.subr.mxu0 0.0
        %1975 = vmatpush1.msra.mxu0 0.0
        %1976 = vmatprep.subr.mxu0 0.0
        %1977 = vmatpush1.msra.mxu0 0.0
        %1978 = vmatprep.subr.mxu0 0.0
        %1979 = vmatpush1.msra.mxu0 0.0
        %1980 = vmatprep.subr.mxu0 0.0
        %1981 = vmatpush1.msra.mxu0 0.0
        %1982 = vmatprep.subr.mxu0 0.0
        %1983 = vmatpush1.msra.mxu0 0.0
        %1984 = vmatprep.subr.mxu0 0.0
        %1985 = vmatpush1.msra.mxu0 0.0
        %1986 = vmatprep.subr.mxu0 0.0
        %1987 = vmatpush1.msra.mxu0 0.0
        %1988 = vmatprep.subr.mxu0 0.0
        %1989 = vmatpush1.msra.mxu0 0.0
        %1990 = vmatprep.subr.mxu0 0.0
        %1991 = vmatpush1.msra.mxu0 0.0
        %1992 = vmatprep.subr.mxu0 0.0
        %1993 = vmatpush1.msra.mxu0 0.0
        %1994 = vmatprep.subr.mxu0 0.0
        %1995 = vmatpush1.msra.mxu0 0.0
        %1996 = vmatprep.subr.mxu0 0.0
        %1997 = vmatpush1.msra.mxu0 0.0
        %1998 = vmatprep.subr.mxu0 0.0
        %1999 = vmatpush1.msra.mxu0 0.0
        %2000 = vmatprep.mubr.f32.mxu0 0.0
        %2001 = vmatmul.mubr.f32.gmra.mrb[0].mxu0 %v1836
        %v2002 = vpop.f32.mrb[0].mxu0
        %v2003 = vadd.f32 %v1818, %v2002
        %v2004 = vpop.f32.mrb[0].mxu0
        %2005 = vmatprep.mubr.f32.mxu0 0.0
        %2006 = vmatmul.mubr.f32.gmra.mrb[0].mxu0 %v1839
        %v2007 = vpop.f32.mrb[0].mxu0
        %v2008 = vadd.f32 %v1823, %v2007
        %v2009 = vpop.f32.mrb[0].mxu0
        %2010 = vmatprep.mubr.f32.mxu0 0.0
        %2011 = vmatmul.mubr.f32.gmra.mrb[0].mxu0 %v1842
        %v2012 = vpop.f32.mrb[0].mxu0
        %v2013 = vadd.f32 %v1828, %v2012
        %v2014 = vpop.f32.mrb[0].mxu0
        %2015 = vmatprep.mubr.f32.mxu0 0.0
        %2016 = vmatmul.mubr.f32.gmra.mrb[0].mxu0 %v1845
        %v2017 = vpop.f32.mrb[0].mxu0
        %v2018 = vadd.f32 %v1833, %v2017
        %v2019 = vpop.f32.mrb[0].mxu0
        %2020 = vdwg.mxu0
        %v2021 = vadd.f32 %v774, %v1914
        %v2022 = vadd.f32 %v775, %v1916
        %v2023 = vadd.f32 %v776, %v2003
        %v2024 = vadd.f32 %v777, %v1920
        %v2025 = vadd.f32 %v778, %v1922
        %v2026 = vadd.f32 %v779, %v2008
        %v2027 = vadd.f32 %v780, %v1926
        %v2028 = vadd.f32 %v781, %v1928
        %v2029 = vadd.f32 %v782, %v2013
        %v2030 = vadd.f32 %v783, %v1932
        %v2031 = vadd.f32 %v784, %v1934
        %v2032 = vadd.f32 %v785, %v2018
        %v2033 = vmul.f32 %v2021, %v532
        %v2034 = vmul.f32 %v2022, %v533
        %v2035 = vmul.f32 %v2023, %v534
        %v2036 = vmul.f32 %v2024, %v532
        %v2037 = vmul.f32 %v2025, %v533
        %v2038 = vmul.f32 %v2026, %v534
        %v2039 = vmul.f32 %v2027, %v532
        %v2040 = vmul.f32 %v2028, %v533
        %v2041 = vmul.f32 %v2029, %v534
        %v2042 = vmul.f32 %v2030, %v532
        %v2043 = vmul.f32 %v2031, %v533
        %v2044 = vmul.f32 %v2032, %v534
        %2045 = vrot.lane.b32.xlu0 %v2033, 1
        %v2046 = vpop.permute.xlu0 %2045
        %2047 = vrot.lane.b32.xlu0 %v2036, 1
        %v2048 = vpop.permute.xlu0 %2047
        %2049 = vrot.lane.b32.xlu0 %v2039, 1
        %v2050 = vpop.permute.xlu0 %2049
        %2051 = vrot.lane.b32.xlu0 %v2042, 1
        %v2052 = vpop.permute.xlu0 %2051
        %2053 = vrot.lane.b32.xlu0 %v2034, 1
        %v2054 = vpop.permute.xlu0 %2053
        %2055 = vrot.lane.b32.xlu0 %v2037, 1
        %v2056 = vpop.permute.xlu0 %2055
        %2057 = vrot.lane.b32.xlu0 %v2040, 1
        %v2058 = vpop.permute.xlu0 %2057
        %2059 = vrot.lane.b32.xlu0 %v2043, 1
        %v2060 = vpop.permute.xlu0 %2059
        %2061 = vrot.lane.b32.xlu0 %v2035, 1
        %v2062 = vpop.permute.xlu0 %2061
        %2063 = vrot.lane.b32.xlu0 %v2038, 1
        %v2064 = vpop.permute.xlu0 %2063
        %2065 = vrot.lane.b32.xlu0 %v2041, 1
        %v2066 = vpop.permute.xlu0 %2065
        %2067 = vrot.lane.b32.xlu0 %v2044, 1
        %v2068 = vpop.permute.xlu0 %2067
        %v2069 = vsel %vm810, %v2046, %v2054
        %v2070 = vsel %vm810, %v2048, %v2056
        %v2071 = vsel %vm810, %v2050, %v2058
        %v2072 = vsel %vm810, %v2052, %v2060
        %v2073 = vsel %vm810, %v2062, %v2046
        %v2074 = vsel %vm810, %v2064, %v2048
        %v2075 = vsel %vm810, %v2066, %v2050
        %v2076 = vsel %vm810, %v2068, %v2052
        %s2077 = scalar_lea.vmem %s4, 192
        %v2078 = vld [vmem:[%s2077] sm:$0xff]
        %v2079 = vld [vmem:[%s2077 + $0x8] sm:$0xff]
        %v2080 = vld [vmem:[%s2077 + $0x10] sm:$0xff]
        %v2081 = vld [vmem:[%s2077 + $0x18] sm:$0xff]
        %v2082 = vld [vmem:[%s2077 + $0x20] sm:$0xff]
        %v2083 = vld [vmem:[%s2077 + $0x28] sm:$0xff]
        %v2084 = vld [vmem:[%s2077 + $0x30] sm:$0xff]
        %v2085 = vld [vmem:[%s2077 + $0x38] sm:$0xff]
        %s2086 = scalar_lea.vmem %s4, 256
        %v2087 = vld [vmem:[%s2086] sm:$0xff]
        %v2088 = vld [vmem:[%s2086 + $0x8] sm:$0xff]
        %v2089 = vld [vmem:[%s2086 + $0x10] sm:$0xff]
        %v2090 = vld [vmem:[%s2086 + $0x18] sm:$0xff]
        %v2091 = vld [vmem:[%s2086 + $0x20] sm:$0xff]
        %v2092 = vld [vmem:[%s2086 + $0x28] sm:$0xff]
        %v2093 = vld [vmem:[%s2086 + $0x30] sm:$0xff]
        %v2094 = vld [vmem:[%s2086 + $0x38] sm:$0xff]
        %v2096 = vsel %vm840, %v2087, 0
        %v2099 = vsel %vm840, %v2088, 0
        %v2102 = vsel %vm840, %v2089, 0
        %v2105 = vsel %vm840, %v2090, 0
        %v2108 = vsel %vm840, %v2091, 0
        %v2111 = vsel %vm840, %v2092, 0
        %v2114 = vsel %vm840, %v2093, 0
        %v2117 = vsel %vm840, %v2094, 0
        %2119 = vmatprep.subr.mxu0 %v2034
        %2120 = vmatpush1.msra.mxu0 %v2033
        %2121 = vmatprep.subr.mxu0 %v2037
        %2122 = vmatpush1.msra.mxu0 %v2036
        %2123 = vmatprep.subr.mxu0 %v2040
        %2124 = vmatpush1.msra.mxu0 %v2039
        %2125 = vmatprep.subr.mxu0 %v2043
        %2126 = vmatpush1.msra.mxu0 %v2042
        %2127 = vmatprep.subr.mxu0 0.0
        %2128 = vmatpush1.msra.mxu0 0.0
        %2129 = vmatprep.subr.mxu0 0.0
        %2130 = vmatpush1.msra.mxu0 0.0
        %2131 = vmatprep.subr.mxu0 0.0
        %2132 = vmatpush1.msra.mxu0 0.0
        %2133 = vmatprep.subr.mxu0 0.0
        %2134 = vmatpush1.msra.mxu0 0.0
        %2135 = vmatprep.subr.mxu0 0.0
        %2136 = vmatpush1.msra.mxu0 0.0
        %2137 = vmatprep.subr.mxu0 0.0
        %2138 = vmatpush1.msra.mxu0 0.0
        %2139 = vmatprep.subr.mxu0 0.0
        %2140 = vmatpush1.msra.mxu0 0.0
        %2141 = vmatprep.subr.mxu0 0.0
        %2142 = vmatpush1.msra.mxu0 0.0
        %2143 = vmatprep.subr.mxu0 0.0
        %2144 = vmatpush1.msra.mxu0 0.0
        %2145 = vmatprep.subr.mxu0 0.0
        %2146 = vmatpush1.msra.mxu0 0.0
        %2147 = vmatprep.subr.mxu0 0.0
        %2148 = vmatpush1.msra.mxu0 0.0
        %2149 = vmatprep.subr.mxu0 0.0
        %2150 = vmatpush1.msra.mxu0 0.0
        %2151 = vmatprep.subr.mxu0 0.0
        %2152 = vmatpush1.msra.mxu0 0.0
        %2153 = vmatprep.subr.mxu0 0.0
        %2154 = vmatpush1.msra.mxu0 0.0
        %2155 = vmatprep.subr.mxu0 0.0
        %2156 = vmatpush1.msra.mxu0 0.0
        %2157 = vmatprep.subr.mxu0 0.0
        %2158 = vmatpush1.msra.mxu0 0.0
        %2159 = vmatprep.subr.mxu0 0.0
        %2160 = vmatpush1.msra.mxu0 0.0
        %2161 = vmatprep.subr.mxu0 0.0
        %2162 = vmatpush1.msra.mxu0 0.0
        %2163 = vmatprep.subr.mxu0 0.0
        %2164 = vmatpush1.msra.mxu0 0.0
        %2165 = vmatprep.subr.mxu0 0.0
        %2166 = vmatpush1.msra.mxu0 0.0
        %2167 = vmatprep.subr.mxu0 0.0
        %2168 = vmatpush1.msra.mxu0 0.0
        %2169 = vmatprep.subr.mxu0 0.0
        %2170 = vmatpush1.msra.mxu0 0.0
        %2171 = vmatprep.subr.mxu0 0.0
        %2172 = vmatpush1.msra.mxu0 0.0
        %2173 = vmatprep.subr.mxu0 0.0
        %2174 = vmatpush1.msra.mxu0 0.0
        %2175 = vmatprep.subr.mxu0 0.0
        %2176 = vmatpush1.msra.mxu0 0.0
        %2177 = vmatprep.subr.mxu0 0.0
        %2178 = vmatpush1.msra.mxu0 0.0
        %2179 = vmatprep.subr.mxu0 0.0
        %2180 = vmatpush1.msra.mxu0 0.0
        %2181 = vmatprep.subr.mxu0 0.0
        %2182 = vmatpush1.msra.mxu0 0.0
        %2183 = vmatprep.mubr.f32.mxu0 0.0
        %2184 = vmatmul.mubr.f32.gmra.mrb[0].mxu0 %v2096
        %v2185 = vpop.f32.mrb[0].mxu0
        %v2186 = vadd.f32 0.0, %v2185
        %v2187 = vpop.f32.mrb[0].mxu0
        %v2188 = vadd.f32 0.0, %v2187
        %2189 = vmatprep.mubr.f32.mxu0 0.0
        %2190 = vmatmul.mubr.f32.gmra.mrb[0].mxu0 %v2099
        %v2191 = vpop.f32.mrb[0].mxu0
        %v2192 = vadd.f32 0.0, %v2191
        %v2193 = vpop.f32.mrb[0].mxu0
        %v2194 = vadd.f32 0.0, %v2193
        %2195 = vmatprep.mubr.f32.mxu0 0.0
        %2196 = vmatmul.mubr.f32.gmra.mrb[0].mxu0 %v2102
        %v2197 = vpop.f32.mrb[0].mxu0
        %v2198 = vadd.f32 0.0, %v2197
        %v2199 = vpop.f32.mrb[0].mxu0
        %v2200 = vadd.f32 0.0, %v2199
        %2201 = vmatprep.mubr.f32.mxu0 0.0
        %2202 = vmatmul.mubr.f32.gmra.mrb[0].mxu0 %v2105
        %v2203 = vpop.f32.mrb[0].mxu0
        %v2204 = vadd.f32 0.0, %v2203
        %v2205 = vpop.f32.mrb[0].mxu0
        %v2206 = vadd.f32 0.0, %v2205
        %2207 = vmatprep.mubr.f32.mxu0 0.0
        %2208 = vmatmul.mubr.f32.gmra.mrb[0].mxu0 %v2108
        %v2209 = vpop.f32.mrb[0].mxu0
        %v2210 = vadd.f32 0.0, %v2209
        %v2211 = vpop.f32.mrb[0].mxu0
        %v2212 = vadd.f32 0.0, %v2211
        %2213 = vmatprep.mubr.f32.mxu0 0.0
        %2214 = vmatmul.mubr.f32.gmra.mrb[0].mxu0 %v2111
        %v2215 = vpop.f32.mrb[0].mxu0
        %v2216 = vadd.f32 0.0, %v2215
        %v2217 = vpop.f32.mrb[0].mxu0
        %v2218 = vadd.f32 0.0, %v2217
        %2219 = vmatprep.mubr.f32.mxu0 0.0
        %2220 = vmatmul.mubr.f32.gmra.mrb[0].mxu0 %v2114
        %v2221 = vpop.f32.mrb[0].mxu0
        %v2222 = vadd.f32 0.0, %v2221
        %v2223 = vpop.f32.mrb[0].mxu0
        %v2224 = vadd.f32 0.0, %v2223
        %2225 = vmatprep.mubr.f32.mxu0 0.0
        %2226 = vmatmul.mubr.f32.gmra.mrb[0].mxu0 %v2117
        %v2227 = vpop.f32.mrb[0].mxu0
        %v2228 = vadd.f32 0.0, %v2227
        %v2229 = vpop.f32.mrb[0].mxu0
        %v2230 = vadd.f32 0.0, %v2229
        %2231 = vdwg.mxu0
        %v2233 = vsel %vm840, %v2078, 0
        %v2236 = vsel %vm840, %v2079, 0
        %v2239 = vsel %vm840, %v2080, 0
        %v2242 = vsel %vm840, %v2081, 0
        %v2245 = vsel %vm840, %v2082, 0
        %v2248 = vsel %vm840, %v2083, 0
        %v2251 = vsel %vm840, %v2084, 0
        %v2254 = vsel %vm840, %v2085, 0
        %2256 = vmatprep.subr.mxu0 %v2069
        %2257 = vmatpush1.msra.mxu0 %v2073
        %2258 = vmatprep.subr.mxu0 %v2070
        %2259 = vmatpush1.msra.mxu0 %v2074
        %2260 = vmatprep.subr.mxu0 %v2071
        %2261 = vmatpush1.msra.mxu0 %v2075
        %2262 = vmatprep.subr.mxu0 %v2072
        %2263 = vmatpush1.msra.mxu0 %v2076
        %2264 = vmatprep.subr.mxu0 0.0
        %2265 = vmatpush1.msra.mxu0 0.0
        %2266 = vmatprep.subr.mxu0 0.0
        %2267 = vmatpush1.msra.mxu0 0.0
        %2268 = vmatprep.subr.mxu0 0.0
        %2269 = vmatpush1.msra.mxu0 0.0
        %2270 = vmatprep.subr.mxu0 0.0
        %2271 = vmatpush1.msra.mxu0 0.0
        %2272 = vmatprep.subr.mxu0 0.0
        %2273 = vmatpush1.msra.mxu0 0.0
        %2274 = vmatprep.subr.mxu0 0.0
        %2275 = vmatpush1.msra.mxu0 0.0
        %2276 = vmatprep.subr.mxu0 0.0
        %2277 = vmatpush1.msra.mxu0 0.0
        %2278 = vmatprep.subr.mxu0 0.0
        %2279 = vmatpush1.msra.mxu0 0.0
        %2280 = vmatprep.subr.mxu0 0.0
        %2281 = vmatpush1.msra.mxu0 0.0
        %2282 = vmatprep.subr.mxu0 0.0
        %2283 = vmatpush1.msra.mxu0 0.0
        %2284 = vmatprep.subr.mxu0 0.0
        %2285 = vmatpush1.msra.mxu0 0.0
        %2286 = vmatprep.subr.mxu0 0.0
        %2287 = vmatpush1.msra.mxu0 0.0
        %2288 = vmatprep.subr.mxu0 0.0
        %2289 = vmatpush1.msra.mxu0 0.0
        %2290 = vmatprep.subr.mxu0 0.0
        %2291 = vmatpush1.msra.mxu0 0.0
        %2292 = vmatprep.subr.mxu0 0.0
        %2293 = vmatpush1.msra.mxu0 0.0
        %2294 = vmatprep.subr.mxu0 0.0
        %2295 = vmatpush1.msra.mxu0 0.0
        %2296 = vmatprep.subr.mxu0 0.0
        %2297 = vmatpush1.msra.mxu0 0.0
        %2298 = vmatprep.subr.mxu0 0.0
        %2299 = vmatpush1.msra.mxu0 0.0
        %2300 = vmatprep.subr.mxu0 0.0
        %2301 = vmatpush1.msra.mxu0 0.0
        %2302 = vmatprep.subr.mxu0 0.0
        %2303 = vmatpush1.msra.mxu0 0.0
        %2304 = vmatprep.subr.mxu0 0.0
        %2305 = vmatpush1.msra.mxu0 0.0
        %2306 = vmatprep.subr.mxu0 0.0
        %2307 = vmatpush1.msra.mxu0 0.0
        %2308 = vmatprep.subr.mxu0 0.0
        %2309 = vmatpush1.msra.mxu0 0.0
        %2310 = vmatprep.subr.mxu0 0.0
        %2311 = vmatpush1.msra.mxu0 0.0
        %2312 = vmatprep.subr.mxu0 0.0
        %2313 = vmatpush1.msra.mxu0 0.0
        %2314 = vmatprep.subr.mxu0 0.0
        %2315 = vmatpush1.msra.mxu0 0.0
        %2316 = vmatprep.subr.mxu0 0.0
        %2317 = vmatpush1.msra.mxu0 0.0
        %2318 = vmatprep.subr.mxu0 0.0
        %2319 = vmatpush1.msra.mxu0 0.0
        %2320 = vmatprep.mubr.f32.mxu0 0.0
        %2321 = vmatmul.mubr.f32.gmra.mrb[0].mxu0 %v2233
        %v2322 = vpop.f32.mrb[0].mxu0
        %v2323 = vadd.f32 %v2186, %v2322
        %v2324 = vpop.f32.mrb[0].mxu0
        %v2325 = vadd.f32 %v2188, %v2324
        %2326 = vmatprep.mubr.f32.mxu0 0.0
        %2327 = vmatmul.mubr.f32.gmra.mrb[0].mxu0 %v2236
        %v2328 = vpop.f32.mrb[0].mxu0
        %v2329 = vadd.f32 %v2192, %v2328
        %v2330 = vpop.f32.mrb[0].mxu0
        %v2331 = vadd.f32 %v2194, %v2330
        %2332 = vmatprep.mubr.f32.mxu0 0.0
        %2333 = vmatmul.mubr.f32.gmra.mrb[0].mxu0 %v2239
        %v2334 = vpop.f32.mrb[0].mxu0
        %v2335 = vadd.f32 %v2198, %v2334
        %v2336 = vpop.f32.mrb[0].mxu0
        %v2337 = vadd.f32 %v2200, %v2336
        %2338 = vmatprep.mubr.f32.mxu0 0.0
        %2339 = vmatmul.mubr.f32.gmra.mrb[0].mxu0 %v2242
        %v2340 = vpop.f32.mrb[0].mxu0
        %v2341 = vadd.f32 %v2204, %v2340
        %v2342 = vpop.f32.mrb[0].mxu0
        %v2343 = vadd.f32 %v2206, %v2342
        %2344 = vmatprep.mubr.f32.mxu0 0.0
        %2345 = vmatmul.mubr.f32.gmra.mrb[0].mxu0 %v2245
        %v2346 = vpop.f32.mrb[0].mxu0
        %v2347 = vadd.f32 %v2210, %v2346
        %v2348 = vpop.f32.mrb[0].mxu0
        %v2349 = vadd.f32 %v2212, %v2348
        %2350 = vmatprep.mubr.f32.mxu0 0.0
        %2351 = vmatmul.mubr.f32.gmra.mrb[0].mxu0 %v2248
        %v2352 = vpop.f32.mrb[0].mxu0
        %v2353 = vadd.f32 %v2216, %v2352
        %v2354 = vpop.f32.mrb[0].mxu0
        %v2355 = vadd.f32 %v2218, %v2354
        %2356 = vmatprep.mubr.f32.mxu0 0.0
        %2357 = vmatmul.mubr.f32.gmra.mrb[0].mxu0 %v2251
        %v2358 = vpop.f32.mrb[0].mxu0
        %v2359 = vadd.f32 %v2222, %v2358
        %v2360 = vpop.f32.mrb[0].mxu0
        %v2361 = vadd.f32 %v2224, %v2360
        %2362 = vmatprep.mubr.f32.mxu0 0.0
        %2363 = vmatmul.mubr.f32.gmra.mrb[0].mxu0 %v2254
        %v2364 = vpop.f32.mrb[0].mxu0
        %v2365 = vadd.f32 %v2228, %v2364
        %v2366 = vpop.f32.mrb[0].mxu0
        %v2367 = vadd.f32 %v2230, %v2366
        %2368 = vdwg.mxu0
        %2369 = vrot.lane.b32.xlu0 %v2033, 127
        %v2370 = vpop.permute.xlu0 %2369
        %2371 = vrot.lane.b32.xlu0 %v2036, 127
        %v2372 = vpop.permute.xlu0 %2371
        %2373 = vrot.lane.b32.xlu0 %v2039, 127
        %v2374 = vpop.permute.xlu0 %2373
        %2375 = vrot.lane.b32.xlu0 %v2042, 127
        %v2376 = vpop.permute.xlu0 %2375
        %2377 = vrot.lane.b32.xlu0 %v2034, 127
        %v2378 = vpop.permute.xlu0 %2377
        %2379 = vrot.lane.b32.xlu0 %v2037, 127
        %v2380 = vpop.permute.xlu0 %2379
        %2381 = vrot.lane.b32.xlu0 %v2040, 127
        %v2382 = vpop.permute.xlu0 %2381
        %2383 = vrot.lane.b32.xlu0 %v2043, 127
        %v2384 = vpop.permute.xlu0 %2383
        %2385 = vrot.lane.b32.xlu0 %v2035, 127
        %v2386 = vpop.permute.xlu0 %2385
        %2387 = vrot.lane.b32.xlu0 %v2038, 127
        %v2388 = vpop.permute.xlu0 %2387
        %2389 = vrot.lane.b32.xlu0 %v2041, 127
        %v2390 = vpop.permute.xlu0 %2389
        %2391 = vrot.lane.b32.xlu0 %v2044, 127
        %v2392 = vpop.permute.xlu0 %2391
        %v2393 = vsel %vm1349, %v2378, %v2386
        %v2394 = vsel %vm1349, %v2380, %v2388
        %v2395 = vsel %vm1349, %v2382, %v2390
        %v2396 = vsel %vm1349, %v2384, %v2392
        %v2397 = vsel %vm1349, %v2370, %v2378
        %v2398 = vsel %vm1349, %v2372, %v2380
        %v2399 = vsel %vm1349, %v2374, %v2382
        %v2400 = vsel %vm1349, %v2376, %v2384
        %s2401 = scalar_lea.vmem %s4, 320
        %v2402 = vld [vmem:[%s2401] sm:$0xff]
        %v2403 = vld [vmem:[%s2401 + $0x8] sm:$0xff]
        %v2404 = vld [vmem:[%s2401 + $0x10] sm:$0xff]
        %v2405 = vld [vmem:[%s2401 + $0x18] sm:$0xff]
        %v2406 = vld [vmem:[%s2401 + $0x20] sm:$0xff]
        %v2407 = vld [vmem:[%s2401 + $0x28] sm:$0xff]
        %v2408 = vld [vmem:[%s2401 + $0x30] sm:$0xff]
        %v2409 = vld [vmem:[%s2401 + $0x38] sm:$0xff]
        %v2411 = vsel %vm840, %v2402, 0
        %v2414 = vsel %vm840, %v2403, 0
        %v2417 = vsel %vm840, %v2404, 0
        %v2420 = vsel %vm840, %v2405, 0
        %v2423 = vsel %vm840, %v2406, 0
        %v2426 = vsel %vm840, %v2407, 0
        %v2429 = vsel %vm840, %v2408, 0
        %v2432 = vsel %vm840, %v2409, 0
        %2434 = vmatprep.subr.mxu0 %v2393
        %2435 = vmatpush1.msra.mxu0 %v2397
        %2436 = vmatprep.subr.mxu0 %v2394
        %2437 = vmatpush1.msra.mxu0 %v2398
        %2438 = vmatprep.subr.mxu0 %v2395
        %2439 = vmatpush1.msra.mxu0 %v2399
        %2440 = vmatprep.subr.mxu0 %v2396
        %2441 = vmatpush1.msra.mxu0 %v2400
        %2442 = vmatprep.subr.mxu0 0.0
        %2443 = vmatpush1.msra.mxu0 0.0
        %2444 = vmatprep.subr.mxu0 0.0
        %2445 = vmatpush1.msra.mxu0 0.0
        %2446 = vmatprep.subr.mxu0 0.0
        %2447 = vmatpush1.msra.mxu0 0.0
        %2448 = vmatprep.subr.mxu0 0.0
        %2449 = vmatpush1.msra.mxu0 0.0
        %2450 = vmatprep.subr.mxu0 0.0
        %2451 = vmatpush1.msra.mxu0 0.0
        %2452 = vmatprep.subr.mxu0 0.0
        %2453 = vmatpush1.msra.mxu0 0.0
        %2454 = vmatprep.subr.mxu0 0.0
        %2455 = vmatpush1.msra.mxu0 0.0
        %2456 = vmatprep.subr.mxu0 0.0
        %2457 = vmatpush1.msra.mxu0 0.0
        %2458 = vmatprep.subr.mxu0 0.0
        %2459 = vmatpush1.msra.mxu0 0.0
        %2460 = vmatprep.subr.mxu0 0.0
        %2461 = vmatpush1.msra.mxu0 0.0
        %2462 = vmatprep.subr.mxu0 0.0
        %2463 = vmatpush1.msra.mxu0 0.0
        %2464 = vmatprep.subr.mxu0 0.0
        %2465 = vmatpush1.msra.mxu0 0.0
        %2466 = vmatprep.subr.mxu0 0.0
        %2467 = vmatpush1.msra.mxu0 0.0
        %2468 = vmatprep.subr.mxu0 0.0
        %2469 = vmatpush1.msra.mxu0 0.0
        %2470 = vmatprep.subr.mxu0 0.0
        %2471 = vmatpush1.msra.mxu0 0.0
        %2472 = vmatprep.subr.mxu0 0.0
        %2473 = vmatpush1.msra.mxu0 0.0
        %2474 = vmatprep.subr.mxu0 0.0
        %2475 = vmatpush1.msra.mxu0 0.0
        %2476 = vmatprep.subr.mxu0 0.0
        %2477 = vmatpush1.msra.mxu0 0.0
        %2478 = vmatprep.subr.mxu0 0.0
        %2479 = vmatpush1.msra.mxu0 0.0
        %2480 = vmatprep.subr.mxu0 0.0
        %2481 = vmatpush1.msra.mxu0 0.0
        %2482 = vmatprep.subr.mxu0 0.0
        %2483 = vmatpush1.msra.mxu0 0.0
        %2484 = vmatprep.subr.mxu0 0.0
        %2485 = vmatpush1.msra.mxu0 0.0
        %2486 = vmatprep.subr.mxu0 0.0
        %2487 = vmatpush1.msra.mxu0 0.0
        %2488 = vmatprep.subr.mxu0 0.0
        %2489 = vmatpush1.msra.mxu0 0.0
        %2490 = vmatprep.subr.mxu0 0.0
        %2491 = vmatpush1.msra.mxu0 0.0
        %2492 = vmatprep.subr.mxu0 0.0
        %2493 = vmatpush1.msra.mxu0 0.0
        %2494 = vmatprep.subr.mxu0 0.0
        %2495 = vmatpush1.msra.mxu0 0.0
        %2496 = vmatprep.subr.mxu0 0.0
        %2497 = vmatpush1.msra.mxu0 0.0
        %2498 = vmatprep.mubr.f32.mxu0 0.0
        %2499 = vmatmul.mubr.f32.gmra.mrb[0].mxu0 %v2411
        %v2500 = vpop.f32.mrb[0].mxu0
        %v2501 = vadd.f32 0.0, %v2500
        %v2502 = vpop.f32.mrb[0].mxu0
        %v2503 = vadd.f32 0.0, %v2502
        %2504 = vmatprep.mubr.f32.mxu0 0.0
        %2505 = vmatmul.mubr.f32.gmra.mrb[0].mxu0 %v2414
        %v2506 = vpop.f32.mrb[0].mxu0
        %v2507 = vadd.f32 0.0, %v2506
        %v2508 = vpop.f32.mrb[0].mxu0
        %v2509 = vadd.f32 0.0, %v2508
        %2510 = vmatprep.mubr.f32.mxu0 0.0
        %2511 = vmatmul.mubr.f32.gmra.mrb[0].mxu0 %v2417
        %v2512 = vpop.f32.mrb[0].mxu0
        %v2513 = vadd.f32 0.0, %v2512
        %v2514 = vpop.f32.mrb[0].mxu0
        %v2515 = vadd.f32 0.0, %v2514
        %2516 = vmatprep.mubr.f32.mxu0 0.0
        %2517 = vmatmul.mubr.f32.gmra.mrb[0].mxu0 %v2420
        %v2518 = vpop.f32.mrb[0].mxu0
        %v2519 = vadd.f32 0.0, %v2518
        %v2520 = vpop.f32.mrb[0].mxu0
        %v2521 = vadd.f32 0.0, %v2520
        %2522 = vmatprep.mubr.f32.mxu0 0.0
        %2523 = vmatmul.mubr.f32.gmra.mrb[0].mxu0 %v2423
        %v2524 = vpop.f32.mrb[0].mxu0
        %v2525 = vadd.f32 0.0, %v2524
        %v2526 = vpop.f32.mrb[0].mxu0
        %v2527 = vadd.f32 0.0, %v2526
        %2528 = vmatprep.mubr.f32.mxu0 0.0
        %2529 = vmatmul.mubr.f32.gmra.mrb[0].mxu0 %v2426
        %v2530 = vpop.f32.mrb[0].mxu0
        %v2531 = vadd.f32 0.0, %v2530
        %v2532 = vpop.f32.mrb[0].mxu0
        %v2533 = vadd.f32 0.0, %v2532
        %2534 = vmatprep.mubr.f32.mxu0 0.0
        %2535 = vmatmul.mubr.f32.gmra.mrb[0].mxu0 %v2429
        %v2536 = vpop.f32.mrb[0].mxu0
        %v2537 = vadd.f32 0.0, %v2536
        %v2538 = vpop.f32.mrb[0].mxu0
        %v2539 = vadd.f32 0.0, %v2538
        %2540 = vmatprep.mubr.f32.mxu0 0.0
        %2541 = vmatmul.mubr.f32.gmra.mrb[0].mxu0 %v2432
        %v2542 = vpop.f32.mrb[0].mxu0
        %v2543 = vadd.f32 0.0, %v2542
        %v2544 = vpop.f32.mrb[0].mxu0
        %v2545 = vadd.f32 0.0, %v2544
        %2546 = vdwg.mxu0
        %v2547 = vadd.f32 %v2323, %v2501
        %v2548 = vadd.f32 %v2325, %v2503
        %v2549 = vadd.f32 %v2329, %v2507
        %v2550 = vadd.f32 %v2331, %v2509
        %v2551 = vadd.f32 %v2335, %v2513
        %v2552 = vadd.f32 %v2337, %v2515
        %v2553 = vadd.f32 %v2341, %v2519
        %v2554 = vadd.f32 %v2343, %v2521
        %v2555 = vadd.f32 %v2347, %v2525
        %v2556 = vadd.f32 %v2349, %v2527
        %v2557 = vadd.f32 %v2353, %v2531
        %v2558 = vadd.f32 %v2355, %v2533
        %v2559 = vadd.f32 %v2359, %v2537
        %v2560 = vadd.f32 %v2361, %v2539
        %v2561 = vadd.f32 %v2365, %v2543
        %v2562 = vadd.f32 %v2367, %v2545
        %s2563 = scalar_lea.vmem %s5, 64
        %v2564 = vld [vmem:[%s2563] sm:$0xff]
        %v2565 = vld [vmem:[%s2563 + $0x8] sm:$0xff]
        %v2566 = vld [vmem:[%s2563 + $0x10] sm:$0xff]
        %v2567 = vld [vmem:[%s2563 + $0x18] sm:$0xff]
        %v2568 = vld [vmem:[%s2563 + $0x20] sm:$0xff]
        %v2569 = vld [vmem:[%s2563 + $0x28] sm:$0xff]
        %v2570 = vld [vmem:[%s2563 + $0x30] sm:$0xff]
        %v2571 = vld [vmem:[%s2563 + $0x38] sm:$0xff]
        %2573 = vset.pattern.permute.xlu0 0
        %2574 = vperm.xlu0 %2573, %v2564
        %v2575 = vpop.permute.xlu0 %2574
        %2578 = vset.pattern.permute.xlu0 0
        %2579 = vperm.xlu0 %2578, %v2565
        %v2580 = vpop.permute.xlu0 %2579
        %2583 = vset.pattern.permute.xlu0 0
        %2584 = vperm.xlu0 %2583, %v2566
        %v2585 = vpop.permute.xlu0 %2584
        %2588 = vset.pattern.permute.xlu0 0
        %2589 = vperm.xlu0 %2588, %v2567
        %v2590 = vpop.permute.xlu0 %2589
        %2593 = vset.pattern.permute.xlu0 0
        %2594 = vperm.xlu0 %2593, %v2568
        %v2595 = vpop.permute.xlu0 %2594
        %2598 = vset.pattern.permute.xlu0 0
        %2599 = vperm.xlu0 %2598, %v2569
        %v2600 = vpop.permute.xlu0 %2599
        %2603 = vset.pattern.permute.xlu0 0
        %2604 = vperm.xlu0 %2603, %v2570
        %v2605 = vpop.permute.xlu0 %2604
        %2608 = vset.pattern.permute.xlu0 0
        %2609 = vperm.xlu0 %2608, %v2571
        %v2610 = vpop.permute.xlu0 %2609
        %v2612 = vadd.f32 %v2547, %v2575
        %v2613 = vadd.f32 %v2548, %v2575
        %v2614 = vadd.f32 %v2549, %v2580
        %v2615 = vadd.f32 %v2550, %v2580
        %v2616 = vadd.f32 %v2551, %v2585
        %v2617 = vadd.f32 %v2552, %v2585
        %v2618 = vadd.f32 %v2553, %v2590
        %v2619 = vadd.f32 %v2554, %v2590
        %v2620 = vadd.f32 %v2555, %v2595
        %v2621 = vadd.f32 %v2556, %v2595
        %v2622 = vadd.f32 %v2557, %v2600
        %v2623 = vadd.f32 %v2558, %v2600
        %v2624 = vadd.f32 %v2559, %v2605
        %v2625 = vadd.f32 %v2560, %v2605
        %v2626 = vadd.f32 %v2561, %v2610
        %v2627 = vadd.f32 %v2562, %v2610
        %v2628 = vtanh.pop %v2612
        %v2629 = vtanh.pop %v2613
        %v2630 = vtanh.pop %v2614
        %v2631 = vtanh.pop %v2615
        %v2632 = vtanh.pop %v2616
        %v2633 = vtanh.pop %v2617
        %v2634 = vtanh.pop %v2618
        %v2635 = vtanh.pop %v2619
        %v2636 = vxor.u32 %v2620, 2147483648
        %v2637 = vxor.u32 %v2621, 2147483648
        %v2638 = vxor.u32 %v2622, 2147483648
        %v2639 = vxor.u32 %v2623, 2147483648
        %v2640 = vxor.u32 %v2624, 2147483648
        %v2641 = vxor.u32 %v2625, 2147483648
        %v2642 = vxor.u32 %v2626, 2147483648
        %v2643 = vxor.u32 %v2627, 2147483648
        %v2644 = vmul.f32 %v2636, 1.442695
        %v2645 = vpow.pop %v2644
        %v2646 = vmul.f32 %v2637, 1.442695
        %v2647 = vpow.pop %v2646
        %v2648 = vmul.f32 %v2638, 1.442695
        %v2649 = vpow.pop %v2648
        %v2650 = vmul.f32 %v2639, 1.442695
        %v2651 = vpow.pop %v2650
        %v2652 = vmul.f32 %v2640, 1.442695
        %v2653 = vpow.pop %v2652
        %v2654 = vmul.f32 %v2641, 1.442695
        %v2655 = vpow.pop %v2654
        %v2656 = vmul.f32 %v2642, 1.442695
        %v2657 = vpow.pop %v2656
        %v2658 = vmul.f32 %v2643, 1.442695
        %v2659 = vpow.pop %v2658
        %v2660 = vadd.f32 %v2645, 1.0
        %v2661 = vadd.f32 %v2647, 1.0
        %v2662 = vadd.f32 %v2649, 1.0
        %v2663 = vadd.f32 %v2651, 1.0
        %v2664 = vadd.f32 %v2653, 1.0
        %v2665 = vadd.f32 %v2655, 1.0
        %v2666 = vadd.f32 %v2657, 1.0
        %v2667 = vadd.f32 %v2659, 1.0
        %v2668 = vrcp.pop %v2660
        %v2669 = vmul.f32 1.0, %v2668
        %v2670 = vrcp.pop %v2661
        %v2671 = vmul.f32 1.0, %v2670
        %v2672 = vrcp.pop %v2662
        %v2673 = vmul.f32 1.0, %v2672
        %v2674 = vrcp.pop %v2663
        %v2675 = vmul.f32 1.0, %v2674
        %v2676 = vrcp.pop %v2664
        %v2677 = vmul.f32 1.0, %v2676
        %v2678 = vrcp.pop %v2665
        %v2679 = vmul.f32 1.0, %v2678
        %v2680 = vrcp.pop %v2666
        %v2681 = vmul.f32 1.0, %v2680
        %v2682 = vrcp.pop %v2667
        %v2683 = vmul.f32 1.0, %v2682
        %v2684 = vmul.f32 %v2628, %v2669
        %v2685 = vmul.f32 %v2629, %v2671
        %v2686 = vmul.f32 %v2630, %v2673
        %v2687 = vmul.f32 %v2631, %v2675
        %v2688 = vmul.f32 %v2632, %v2677
        %v2689 = vmul.f32 %v2633, %v2679
        %v2690 = vmul.f32 %v2634, %v2681
        %v2691 = vmul.f32 %v2635, %v2683
        %s2692 = scalar_lea.vmem %s8, 2
        %v2693 = vld [vmem:[%s2692] sm:$0x3]
        %v2695 = vsel %vm840, %v2693, 0
        %2697 = vmatprep.subr.mxu0 %v2685
        %2698 = vmatpush1.msra.mxu0 %v2684
        %2699 = vmatprep.subr.mxu0 %v2687
        %2700 = vmatpush1.msra.mxu0 %v2686
        %2701 = vmatprep.subr.mxu0 %v2689
        %2702 = vmatpush1.msra.mxu0 %v2688
        %2703 = vmatprep.subr.mxu0 %v2691
        %2704 = vmatpush1.msra.mxu0 %v2690
        %2705 = vmatprep.subr.mxu0 0.0
        %2706 = vmatpush1.msra.mxu0 0.0
        %2707 = vmatprep.subr.mxu0 0.0
        %2708 = vmatpush1.msra.mxu0 0.0
        %2709 = vmatprep.subr.mxu0 0.0
        %2710 = vmatpush1.msra.mxu0 0.0
        %2711 = vmatprep.subr.mxu0 0.0
        %2712 = vmatpush1.msra.mxu0 0.0
        %2713 = vmatprep.subr.mxu0 0.0
        %2714 = vmatpush1.msra.mxu0 0.0
        %2715 = vmatprep.subr.mxu0 0.0
        %2716 = vmatpush1.msra.mxu0 0.0
        %2717 = vmatprep.subr.mxu0 0.0
        %2718 = vmatpush1.msra.mxu0 0.0
        %2719 = vmatprep.subr.mxu0 0.0
        %2720 = vmatpush1.msra.mxu0 0.0
        %2721 = vmatprep.subr.mxu0 0.0
        %2722 = vmatpush1.msra.mxu0 0.0
        %2723 = vmatprep.subr.mxu0 0.0
        %2724 = vmatpush1.msra.mxu0 0.0
        %2725 = vmatprep.subr.mxu0 0.0
        %2726 = vmatpush1.msra.mxu0 0.0
        %2727 = vmatprep.subr.mxu0 0.0
        %2728 = vmatpush1.msra.mxu0 0.0
        %2729 = vmatprep.subr.mxu0 0.0
        %2730 = vmatpush1.msra.mxu0 0.0
        %2731 = vmatprep.subr.mxu0 0.0
        %2732 = vmatpush1.msra.mxu0 0.0
        %2733 = vmatprep.subr.mxu0 0.0
        %2734 = vmatpush1.msra.mxu0 0.0
        %2735 = vmatprep.subr.mxu0 0.0
        %2736 = vmatpush1.msra.mxu0 0.0
        %2737 = vmatprep.subr.mxu0 0.0
        %2738 = vmatpush1.msra.mxu0 0.0
        %2739 = vmatprep.subr.mxu0 0.0
        %2740 = vmatpush1.msra.mxu0 0.0
        %2741 = vmatprep.subr.mxu0 0.0
        %2742 = vmatpush1.msra.mxu0 0.0
        %2743 = vmatprep.subr.mxu0 0.0
        %2744 = vmatpush1.msra.mxu0 0.0
        %2745 = vmatprep.subr.mxu0 0.0
        %2746 = vmatpush1.msra.mxu0 0.0
        %2747 = vmatprep.subr.mxu0 0.0
        %2748 = vmatpush1.msra.mxu0 0.0
        %2749 = vmatprep.subr.mxu0 0.0
        %2750 = vmatpush1.msra.mxu0 0.0
        %2751 = vmatprep.subr.mxu0 0.0
        %2752 = vmatpush1.msra.mxu0 0.0
        %2753 = vmatprep.subr.mxu0 0.0
        %2754 = vmatpush1.msra.mxu0 0.0
        %2755 = vmatprep.subr.mxu0 0.0
        %2756 = vmatpush1.msra.mxu0 0.0
        %2757 = vmatprep.subr.mxu0 0.0
        %2758 = vmatpush1.msra.mxu0 0.0
        %2759 = vmatprep.subr.mxu0 0.0
        %2760 = vmatpush1.msra.mxu0 0.0
        %2761 = vmatprep.mubr.f32.mxu0 0.0
        %2762 = vmatmul.mubr.f32.gmra.mrb[0].mxu0 %v2695
        %v2763 = vpop.f32.mrb[0].mxu0
        %v2764 = vpop.f32.mrb[0].mxu0
        %v2765 = vadd.f32 0.0, %v2764
        %2766 = vdwg.mxu0
        %v2768 = vsel %vm840, %v1805, 0
        %2770 = vmatprep.subr.mxu0 %v1794
        %2771 = vmatpush1.msra.mxu0 %v1793
        %2772 = vmatprep.subr.mxu0 %v1797
        %2773 = vmatpush1.msra.mxu0 %v1796
        %2774 = vmatprep.subr.mxu0 %v1800
        %2775 = vmatpush1.msra.mxu0 %v1799
        %2776 = vmatprep.subr.mxu0 %v1803
        %2777 = vmatpush1.msra.mxu0 %v1802
        %2778 = vmatprep.subr.mxu0 0.0
        %2779 = vmatpush1.msra.mxu0 0.0
        %2780 = vmatprep.subr.mxu0 0.0
        %2781 = vmatpush1.msra.mxu0 0.0
        %2782 = vmatprep.subr.mxu0 0.0
        %2783 = vmatpush1.msra.mxu0 0.0
        %2784 = vmatprep.subr.mxu0 0.0
        %2785 = vmatpush1.msra.mxu0 0.0
        %2786 = vmatprep.subr.mxu0 0.0
        %2787 = vmatpush1.msra.mxu0 0.0
        %2788 = vmatprep.subr.mxu0 0.0
        %2789 = vmatpush1.msra.mxu0 0.0
        %2790 = vmatprep.subr.mxu0 0.0
        %2791 = vmatpush1.msra.mxu0 0.0
        %2792 = vmatprep.subr.mxu0 0.0
        %2793 = vmatpush1.msra.mxu0 0.0
        %2794 = vmatprep.subr.mxu0 0.0
        %2795 = vmatpush1.msra.mxu0 0.0
        %2796 = vmatprep.subr.mxu0 0.0
        %2797 = vmatpush1.msra.mxu0 0.0
        %2798 = vmatprep.subr.mxu0 0.0
        %2799 = vmatpush1.msra.mxu0 0.0
        %2800 = vmatprep.subr.mxu0 0.0
        %2801 = vmatpush1.msra.mxu0 0.0
        %2802 = vmatprep.subr.mxu0 0.0
        %2803 = vmatpush1.msra.mxu0 0.0
        %2804 = vmatprep.subr.mxu0 0.0
        %2805 = vmatpush1.msra.mxu0 0.0
        %2806 = vmatprep.subr.mxu0 0.0
        %2807 = vmatpush1.msra.mxu0 0.0
        %2808 = vmatprep.subr.mxu0 0.0
        %2809 = vmatpush1.msra.mxu0 0.0
        %2810 = vmatprep.subr.mxu0 0.0
        %2811 = vmatpush1.msra.mxu0 0.0
        %2812 = vmatprep.subr.mxu0 0.0
        %2813 = vmatpush1.msra.mxu0 0.0
        %2814 = vmatprep.subr.mxu0 0.0
        %2815 = vmatpush1.msra.mxu0 0.0
        %2816 = vmatprep.subr.mxu0 0.0
        %2817 = vmatpush1.msra.mxu0 0.0
        %2818 = vmatprep.subr.mxu0 0.0
        %2819 = vmatpush1.msra.mxu0 0.0
        %2820 = vmatprep.subr.mxu0 0.0
        %2821 = vmatpush1.msra.mxu0 0.0
        %2822 = vmatprep.subr.mxu0 0.0
        %2823 = vmatpush1.msra.mxu0 0.0
        %2824 = vmatprep.subr.mxu0 0.0
        %2825 = vmatpush1.msra.mxu0 0.0
        %2826 = vmatprep.subr.mxu0 0.0
        %2827 = vmatpush1.msra.mxu0 0.0
        %2828 = vmatprep.subr.mxu0 0.0
        %2829 = vmatpush1.msra.mxu0 0.0
        %2830 = vmatprep.subr.mxu0 0.0
        %2831 = vmatpush1.msra.mxu0 0.0
        %2832 = vmatprep.subr.mxu0 0.0
        %2833 = vmatpush1.msra.mxu0 0.0
        %2834 = vmatprep.mubr.f32.mxu0 0.0
        %2835 = vmatmul.mubr.f32.gmra.mrb[0].mxu0 %v2768
        %v2836 = vpop.f32.mrb[0].mxu0
        %v2837 = vpop.f32.mrb[0].mxu0
        %v2838 = vadd.f32 %v2765, %v2837
        %2839 = vdwg.mxu0
        %s2840 = scalar_lea.vmem %s9, 2
        %v2841 = vld [vmem:[%s2840] sm:$0x3]
        %v2843 = vsel %vm840, %v2841, 0
        %2845 = vmatprep.subr.mxu0 %v2685
        %2846 = vmatpush1.msra.mxu0 %v2684
        %2847 = vmatprep.subr.mxu0 %v2687
        %2848 = vmatpush1.msra.mxu0 %v2686
        %2849 = vmatprep.subr.mxu0 %v2689
        %2850 = vmatpush1.msra.mxu0 %v2688
        %2851 = vmatprep.subr.mxu0 %v2691
        %2852 = vmatpush1.msra.mxu0 %v2690
        %2853 = vmatprep.subr.mxu0 0.0
        %2854 = vmatpush1.msra.mxu0 0.0
        %2855 = vmatprep.subr.mxu0 0.0
        %2856 = vmatpush1.msra.mxu0 0.0
        %2857 = vmatprep.subr.mxu0 0.0
        %2858 = vmatpush1.msra.mxu0 0.0
        %2859 = vmatprep.subr.mxu0 0.0
        %2860 = vmatpush1.msra.mxu0 0.0
        %2861 = vmatprep.subr.mxu0 0.0
        %2862 = vmatpush1.msra.mxu0 0.0
        %2863 = vmatprep.subr.mxu0 0.0
        %2864 = vmatpush1.msra.mxu0 0.0
        %2865 = vmatprep.subr.mxu0 0.0
        %2866 = vmatpush1.msra.mxu0 0.0
        %2867 = vmatprep.subr.mxu0 0.0
        %2868 = vmatpush1.msra.mxu0 0.0
        %2869 = vmatprep.subr.mxu0 0.0
        %2870 = vmatpush1.msra.mxu0 0.0
        %2871 = vmatprep.subr.mxu0 0.0
        %2872 = vmatpush1.msra.mxu0 0.0
        %2873 = vmatprep.subr.mxu0 0.0
        %2874 = vmatpush1.msra.mxu0 0.0
        %2875 = vmatprep.subr.mxu0 0.0
        %2876 = vmatpush1.msra.mxu0 0.0
        %2877 = vmatprep.subr.mxu0 0.0
        %2878 = vmatpush1.msra.mxu0 0.0
        %2879 = vmatprep.subr.mxu0 0.0
        %2880 = vmatpush1.msra.mxu0 0.0
        %2881 = vmatprep.subr.mxu0 0.0
        %2882 = vmatpush1.msra.mxu0 0.0
        %2883 = vmatprep.subr.mxu0 0.0
        %2884 = vmatpush1.msra.mxu0 0.0
        %2885 = vmatprep.subr.mxu0 0.0
        %2886 = vmatpush1.msra.mxu0 0.0
        %2887 = vmatprep.subr.mxu0 0.0
        %2888 = vmatpush1.msra.mxu0 0.0
        %2889 = vmatprep.subr.mxu0 0.0
        %2890 = vmatpush1.msra.mxu0 0.0
        %2891 = vmatprep.subr.mxu0 0.0
        %2892 = vmatpush1.msra.mxu0 0.0
        %2893 = vmatprep.subr.mxu0 0.0
        %2894 = vmatpush1.msra.mxu0 0.0
        %2895 = vmatprep.subr.mxu0 0.0
        %2896 = vmatpush1.msra.mxu0 0.0
        %2897 = vmatprep.subr.mxu0 0.0
        %2898 = vmatpush1.msra.mxu0 0.0
        %2899 = vmatprep.subr.mxu0 0.0
        %2900 = vmatpush1.msra.mxu0 0.0
        %2901 = vmatprep.subr.mxu0 0.0
        %2902 = vmatpush1.msra.mxu0 0.0
        %2903 = vmatprep.subr.mxu0 0.0
        %2904 = vmatpush1.msra.mxu0 0.0
        %2905 = vmatprep.subr.mxu0 0.0
        %2906 = vmatpush1.msra.mxu0 0.0
        %2907 = vmatprep.subr.mxu0 0.0
        %2908 = vmatpush1.msra.mxu0 0.0
        %2909 = vmatprep.mubr.f32.mxu0 0.0
        %2910 = vmatmul.mubr.f32.gmra.mrb[0].mxu0 %v2843
        %v2911 = vpop.f32.mrb[0].mxu0
        %v2912 = vpop.f32.mrb[0].mxu0
        %v2913 = vadd.f32 0.0, %v2912
        %2914 = vdwg.mxu0
        %v2916 = vsel %vm840, %v1806, 0
        %2918 = vmatprep.subr.mxu0 %v1794
        %2919 = vmatpush1.msra.mxu0 %v1793
        %2920 = vmatprep.subr.mxu0 %v1797
        %2921 = vmatpush1.msra.mxu0 %v1796
        %2922 = vmatprep.subr.mxu0 %v1800
        %2923 = vmatpush1.msra.mxu0 %v1799
        %2924 = vmatprep.subr.mxu0 %v1803
        %2925 = vmatpush1.msra.mxu0 %v1802
        %2926 = vmatprep.subr.mxu0 0.0
        %2927 = vmatpush1.msra.mxu0 0.0
        %2928 = vmatprep.subr.mxu0 0.0
        %2929 = vmatpush1.msra.mxu0 0.0
        %2930 = vmatprep.subr.mxu0 0.0
        %2931 = vmatpush1.msra.mxu0 0.0
        %2932 = vmatprep.subr.mxu0 0.0
        %2933 = vmatpush1.msra.mxu0 0.0
        %2934 = vmatprep.subr.mxu0 0.0
        %2935 = vmatpush1.msra.mxu0 0.0
        %2936 = vmatprep.subr.mxu0 0.0
        %2937 = vmatpush1.msra.mxu0 0.0
        %2938 = vmatprep.subr.mxu0 0.0
        %2939 = vmatpush1.msra.mxu0 0.0
        %2940 = vmatprep.subr.mxu0 0.0
        %2941 = vmatpush1.msra.mxu0 0.0
        %2942 = vmatprep.subr.mxu0 0.0
        %2943 = vmatpush1.msra.mxu0 0.0
        %2944 = vmatprep.subr.mxu0 0.0
        %2945 = vmatpush1.msra.mxu0 0.0
        %2946 = vmatprep.subr.mxu0 0.0
        %2947 = vmatpush1.msra.mxu0 0.0
        %2948 = vmatprep.subr.mxu0 0.0
        %2949 = vmatpush1.msra.mxu0 0.0
        %2950 = vmatprep.subr.mxu0 0.0
        %2951 = vmatpush1.msra.mxu0 0.0
        %2952 = vmatprep.subr.mxu0 0.0
        %2953 = vmatpush1.msra.mxu0 0.0
        %2954 = vmatprep.subr.mxu0 0.0
        %2955 = vmatpush1.msra.mxu0 0.0
        %2956 = vmatprep.subr.mxu0 0.0
        %2957 = vmatpush1.msra.mxu0 0.0
        %2958 = vmatprep.subr.mxu0 0.0
        %2959 = vmatpush1.msra.mxu0 0.0
        %2960 = vmatprep.subr.mxu0 0.0
        %2961 = vmatpush1.msra.mxu0 0.0
        %2962 = vmatprep.subr.mxu0 0.0
        %2963 = vmatpush1.msra.mxu0 0.0
        %2964 = vmatprep.subr.mxu0 0.0
        %2965 = vmatpush1.msra.mxu0 0.0
        %2966 = vmatprep.subr.mxu0 0.0
        %2967 = vmatpush1.msra.mxu0 0.0
        %2968 = vmatprep.subr.mxu0 0.0
        %2969 = vmatpush1.msra.mxu0 0.0
        %2970 = vmatprep.subr.mxu0 0.0
        %2971 = vmatpush1.msra.mxu0 0.0
        %2972 = vmatprep.subr.mxu0 0.0
        %2973 = vmatpush1.msra.mxu0 0.0
        %2974 = vmatprep.subr.mxu0 0.0
        %2975 = vmatpush1.msra.mxu0 0.0
        %2976 = vmatprep.subr.mxu0 0.0
        %2977 = vmatpush1.msra.mxu0 0.0
        %2978 = vmatprep.subr.mxu0 0.0
        %2979 = vmatpush1.msra.mxu0 0.0
        %2980 = vmatprep.subr.mxu0 0.0
        %2981 = vmatpush1.msra.mxu0 0.0
        %2982 = vmatprep.mubr.f32.mxu0 0.0
        %2983 = vmatmul.mubr.f32.gmra.mrb[0].mxu0 %v2916
        %v2984 = vpop.f32.mrb[0].mxu0
        %v2985 = vpop.f32.mrb[0].mxu0
        %v2986 = vadd.f32 %v2913, %v2985
        %2987 = vdwg.mxu0
        %v2988 = vld [vmem:[%s10] sm:$0x3]
        %2990 = vset.pattern.permute.xlu0 0
        %2991 = vperm.xlu0 %2990, %v2988
        %v2992 = vpop.permute.xlu0 %2991
        %v2994 = vadd.f32 %v2838, %v2992
        %v2995 = vmul.f32 %v2994, %v533
        %v2996 = vld [vmem:[%s11] sm:$0x3]
        %2998 = vset.pattern.permute.xlu0 0
        %2999 = vperm.xlu0 %2998, %v2996
        %v3000 = vpop.permute.xlu0 %2999
        %v3002 = vadd.f32 %v2986, %v3000
        %v3003 = vmul.f32 %v3002, %v533
        %v3004 = vmul.f32 %v3003, 1.442695
        %v3005 = vpow.pop %v3004
        %v3006 = vmul.f32 %v509, %v3005
        %v3007 = vadd.f32 %v3006, %v2995
        %v3008 = vsel %vm593, %v3003, 0.0
        %3009 = vadd.xlane.f32.xlu0 %v3008
        %v3010 = vpop.xlane.xlu0 %3009
        %v3011 = vrot.slane %v3010, 4
        %v3012 = vadd.f32 %v3010, %v3011
        %v3013 = vrot.slane %v3012, 2
        %v3014 = vadd.f32 %v3012, %v3013
        %v3015 = vrot.slane %v3014, 1
        %v3016 = vadd.f32 %v3014, %v3015
        %s3017 = vtos %v3016
        %v3018 = vstv %s3017
        %3019 = vst [vmem:[%s491] sm:$0xff] %v3018
        %v3022 = vrot.slane %v3007, 6
        %v3024 = vsel %vm593, %v579, %v3022
        %3025 = vst [vmem:[%s484] sm:$0xf] %v3024
        %s3026 = sand.u32 %s319, 1
        %s3027 = scalar_lea.sflag [#allocation3], %s3026
        %s3028 = sand.u32 %s319, 1
        %s3029 = smul.addr %s3028, 4
        %s3030 = scalar_lea.vmem [#allocation2], %s3029
        %s3031 = sand.u32 %s347, 1
        %s3032 = scalar_lea.sflag [#allocation5], %s3031
        %s3033 = sand.u32 %s347, 1
        %s3034 = smul.addr %s3033, 8
        %s3035 = scalar_lea.vmem [#allocation4], %s3034
        // Predicated region
        $region69: #{tpu_custom_call.1} parent=67 // pred_check
          %p3036 = pneg %p329
        $region70: #{tpu_custom_call.1} parent=67 // pred_check_branch
          %3038 = sbr.rel (%p3036) target = $region72
        $region71: #{tpu_custom_call.1} parent=67 // pred_region
          %s3040 = ssub.s32 64, 64
          %3041 = vsyncadd %s3027, %s3040
          %s3042 = sadd.s32 %s36, %s35
          %s3043 = smul.addr %s3042, 64
          %s3044 = scalar_lea.hbm %s12, %s3043
          %s3046 = sshll.u32 %s3030, 4
          %s3047 = int_to_ptr.vmem [resolvable:$true] %s3046
          %3049 = dma.vmem_to_hbm [thread:$0]  %s3047, 64, %s3044, %s3027
        $region72: #{tpu_custom_call.1} parent=67 // pred_fallthru
          _
        // Predicated region
        $region73: #{tpu_custom_call.1} parent=67 // pred_check
          %p3050 = pneg %p357
        $region74: #{tpu_custom_call.1} parent=67 // pred_check_branch
          %3052 = sbr.rel (%p3050) target = $region76
        $region75: #{tpu_custom_call.1} parent=67 // pred_region
          %s3054 = ssub.s32 128, 128
          %3055 = vsyncadd %s3032, %s3054
          %s3056 = sadd.s32 %s36, %s35
          %s3057 = smul.addr %s3056, 128
          %s3058 = scalar_lea.hbm %s13, %s3057
          %s3060 = sshll.u32 %s3035, 4
          %s3061 = int_to_ptr.vmem [resolvable:$true] %s3060
          %3063 = dma.vmem_to_hbm [thread:$0]  %s3061, 128, %s3058, %s3032
        $region76: #{tpu_custom_call.1} parent=67 // pred_fallthru
          _
      $region68: #{tpu_custom_call.1} parent=5 // pred_fallthru
        _
      %p3064 = scmp.le.s32.totalorder 2, %s26
      // Predicated region
      $region77: #{tpu_custom_call.1} parent=5 // pred_check
        %p3065 = pneg %p3064
      $region78: #{tpu_custom_call.1} parent=5 // pred_check_branch
        %3067 = sbr.rel (%p3065) target = $region80
      $region79: #{tpu_custom_call.1} parent=5 // pred_region
        %s3068 = ssub.s32 %s26, 2
        // Predicated region
        $region81: #{tpu_custom_call.1} parent=79 // pred_check
          %p3069 = pneg %p335
        $region82: #{tpu_custom_call.1} parent=79 // pred_check_branch
          %3071 = sbr.rel (%p3069) target = $region84
        $region83: #{tpu_custom_call.1} parent=79 // pred_region
          %s3072 = sand.u32 %s320, 1
          %s3073 = scalar_lea.sflag [#allocation3], %s3072
          %s3074 = sand.u32 %s320, 1
          %s3075 = smul.addr %s3074, 4
          %s3076 = scalar_lea.vmem [#allocation2], %s3075
          %3077 = dma.done %s3073, 64
        $region84: #{tpu_custom_call.1} parent=79 // pred_fallthru
          _
        // Predicated region
        $region85: #{tpu_custom_call.1} parent=79 // pred_check
          %p3078 = pneg %p363
        $region86: #{tpu_custom_call.1} parent=79 // pred_check_branch
          %3080 = sbr.rel (%p3078) target = $region88
        $region87: #{tpu_custom_call.1} parent=79 // pred_region
          %s3081 = sand.u32 %s348, 1
          %s3082 = scalar_lea.sflag [#allocation5], %s3081
          %s3083 = sand.u32 %s348, 1
          %s3084 = smul.addr %s3083, 8
          %s3085 = scalar_lea.vmem [#allocation4], %s3084
          %3086 = dma.done %s3082, 128
        $region88: #{tpu_custom_call.1} parent=79 // pred_fallthru
          _
      $region80: #{tpu_custom_call.1} parent=5 // pred_fallthru
        _
    $region6: #{tpu_custom_call.1} parent=1 // loop_footer
      %s30 = sadd.s32 1, %s26
    $region7: #{tpu_custom_call.1} parent=1 // loop_footer_branch
      %25 = sbr.rel target = $region3
    $region8: #{tpu_custom_call.1} parent=1 // loop_exit
      _
    %3087 = vsyncpa [#allocation3], 1
    %s3088 = scalar_lea.sflag [#allocation3], 1
    %3089 = vsyncpa %s3088, 1
    %3090 = vsyncpa [#allocation5], 1
    %s3091 = scalar_lea.sflag [#allocation5], 1
    %3092 = vsyncpa %s3091, 1

</llo_original>
